<compile_context>
chip_gen: v6e
topology: v6e:2x2x1
jax: 0.10.0
libtpu: 0.0.40
codegen_flags: <defaults>
</compile_context>

<pallas_src>
import jax
import jax.numpy as jnp
from jax import lax
from jax.experimental import pallas as pl
from jax.experimental.pallas import tpu as pltpu

FILTER_SIZE = 256                  # hardcoded in the PyTorch module
KERNEL_SIZES = (3, 4, 5, 6)
NUM_CLASSES = 2
OUT_PAD = 128                      # logits padded to a lane-dense width, sliced in wrapper


# ----------------------------- fused forward kernel --------------------------------------

def _wordcnn_fused_kernel(ids_ref, emb_ref, wc_ref, bc_ref, mask_ref,
                          w1_ref, b1_ref, w2_ref, b2_ref, w3_ref, b3_ref,
                          w4_ref, b4_ref, out_ref, emb_scr, col_scr):
    # ids_ref  : (B*L, 1) int32           emb_ref : (Vpad, E) bf16
    # wc_ref   : (KMAX*E, 4F) bf16        bc_ref  : (1, 4F) f32
    # mask_ref : (L, 4F) f32   (1.0 for valid conv positions per filter lane, else 0.0)
    # w1..w4   : bf16 MLP weights (w4/b4 padded to OUT_PAD lanes); biases f32 (1, n)
    # out_ref  : (B, OUT_PAD) f32
    # emb_scr  : (B*L + pad, E) f32       col_scr : (B*L, KMAX*E) f32
    BL = ids_ref.shape[0]
    Vp, E = emb_ref.shape
    KE, NF = wc_ref.shape
    KMAX = KE // E
    B = out_ref.shape[0]
    L = BL // B
    pad_rows = emb_scr.shape[0] - BL

    # ---- embedding gather as a lane-full one-hot matmul (vocab padded to Vp) ------------
    # TODO(synk): for realistic vocab sizes (>~1-2K) replace with a scalar-prefetch /
    #             per-row DMA gather; the one-hot path is O(BL*V).
    ids = ids_ref[...]                                              # (BL, 1) int32
    vocab = lax.broadcasted_iota(jnp.int32, (BL, Vp), 1)
    onehot = (ids == vocab).astype(jnp.bfloat16)                    # (BL, Vp)
    emb = jnp.dot(onehot, emb_ref[...],
                  preferred_element_type=jnp.float32)               # (BL, E) f32

    # ---- stage embeddings + zero tail rows in VMEM scratch -------------------------------
    # Tail / cross-batch rows reached by shifted windows only ever feed positions that are
    # masked out below, so zeros are fine.
    emb_scr[0:BL, :] = emb
    emb_scr[BL:BL + pad_rows, :] = jnp.zeros((pad_rows, E), jnp.float32)

    # ---- im2col slab: band i holds rows shifted by i --------------------------------------
    # col[b*L + p, i*E:(i+1)*E] = emb[b, p+i, :]
    col_scr[:, 0:E] = emb
    for i in range(1, KMAX):                                        # static unroll
        col_scr[:, i * E:(i + 1) * E] = emb_scr[i:i + BL, :]

    # ---- single K=KMAX*E conv matmul covering all four kernel sizes, then ReLU ------------
    # (rows of wc beyond k_g*E are zero for group g, so one dot gives every group's score)
    s = jnp.maximum(
        jnp.dot(col_scr[...].astype(jnp.bfloat16), wc_ref[...],
                preferred_element_type=jnp.float32) + bc_ref[...], 0.0)   # (BL, NF) f32

    # ---- mask invalid positions per kernel-size group, maxpool over positions -------------
    # Post-ReLU everything is >= 0 and every group has >= 1 valid position (L >= KMAX),
    # so zeroing invalid positions cannot change the max.
    s3 = s.reshape(B, L, NF)
    pooled = jnp.max(s3 * mask_ref[...].reshape(1, L, NF), axis=1)        # (B, NF) f32

    # ---- fused 4-layer MLP: bf16 matmul operands, f32 accumulation & elementwise ----------
    # TODO(synk): training-mode dropout (p=0.2) not implemented (identity at inference).
    h = jnp.maximum(jnp.dot(pooled.astype(jnp.bfloat16), w1_ref[...],
                            preferred_element_type=jnp.float32) + b1_ref[...], 0.0)
    h = jnp.maximum(jnp.dot(h.astype(jnp.bfloat16), w2_ref[...],
                            preferred_element_type=jnp.float32) + b2_ref[...], 0.0)
    h = jnp.maximum(jnp.dot(h.astype(jnp.bfloat16), w3_ref[...],
                            preferred_element_type=jnp.float32) + b3_ref[...], 0.0)
    out_ref[...] = jnp.dot(h.astype(jnp.bfloat16), w4_ref[...],
                           preferred_element_type=jnp.float32) + b4_ref[...]


# ----------------------------- wrapper ----------------------------------------------------

def word_cnn_forward(inp_word, prepared):
    B, L = inp_word.shape
    E = prepared["emb"].shape[1]
    kmax = prepared["wc"].shape[0] // E
    assert L >= kmax                          # required for the mask-after-ReLU argument
    assert prepared["mask"].shape[0] == L

    ids2d = inp_word.reshape(B * L, 1).astype(jnp.int32)
    (w1, b1), (w2, b2), (w3, b3), (w4p, b4p) = prepared["fc"]
    vmem = pl.BlockSpec(memory_space=pltpu.MemorySpace.VMEM)
    pad_rows = 8                              # >= kmax - 1, keeps scratch row count 8-aligned

    logits_padded = pl.pallas_call(
        _wordcnn_fused_kernel,
        out_shape=jax.ShapeDtypeStruct((B, OUT_PAD), jnp.float32),
        in_specs=[vmem] * 13,
        out_specs=vmem,
        scratch_shapes=[pltpu.VMEM((B * L + pad_rows, E), jnp.float32),
                        pltpu.VMEM((B * L, kmax * E), jnp.float32)],
        # TODO(synk): for large batch on v7x, add a batch-tile grid axis with
        # dimension_semantics=("parallel",) and constant index_maps for the weights,
        # sized against v7x's 64 MiB VMEM; at B=2 a single invocation is best.
    )(ids2d, prepared["emb"], prepared["wc"], prepared["bc"], prepared["mask"],
      w1, b1, w2, b2, w3, b3, w4p, b4p)

    return logits_padded[:, :NUM_CLASSES]


# ----------------------------- parameter construction -------------------------------------

def init_params(key, vocab_size, emb_size):
    keys = jax.random.split(key, 17)
    params = {"emb": jax.random.normal(
        keys[0], (vocab_size, emb_size), jnp.float32) * 0.1}
    conv = {}
    for idx, k in enumerate(KERNEL_SIZES):
        wk = jax.random.normal(
            keys[1 + idx], (k * emb_size, FILTER_SIZE), jnp.float32) * 0.05
        bk = jax.random.normal(keys[5 + idx], (FILTER_SIZE,), jnp.float32) * 0.01
        conv[k] = (wk, bk)
    params["conv"] = conv
    dims = [FILTER_SIZE * len(KERNEL_SIZES), 512, 256, 128, NUM_CLASSES]
    fc = []
    for i in range(4):
        w = jax.random.normal(
            keys[9 + i], (dims[i], dims[i + 1]), jnp.float32) * (dims[i] ** -0.5)
        b = jax.random.normal(keys[13 + i], (dims[i + 1],), jnp.float32) * 0.01
        fc.append((w, b))
    params["fc"] = tuple(fc)
    return params


def prepare_params(params, word_seq_len):
    """One-time prep: stack the per-kernel-size conv weights into one (kmax*E, 4F) matrix,
    pad the vocab to a lane-full multiple of 128, precompute the (L, 4F) valid-position
    mask, pad the final projection to OUT_PAD lanes, reshape biases to (1, n), and cast all
    matmul weight operands to bfloat16 (biases / mask stay f32)."""
    E = params["emb"].shape[1]
    V = params["emb"].shape[0]
    kmax = max(KERNEL_SIZES)
    NF = FILTER_SIZE * len(KERNEL_SIZES)

    Vp = ((V + 127) // 128) * 128
    emb_p = jnp.zeros((Vp, E), jnp.float32).at[:V].set(
        params["emb"].astype(jnp.float32)).astype(jnp.bfloat16)

    wc = jnp.zeros((kmax * E, NF), jnp.float32)
    bc = jnp.zeros((1, NF), jnp.float32)
    for g, k in enumerate(KERNEL_SIZES):
        wk, bk = params["conv"][k]
        wc = wc.at[:k * E, g * FILTER_SIZE:(g + 1) * FILTER_SIZE].set(wk)
        bc = bc.at[0, g * FILTER_SIZE:(g + 1) * FILTER_SIZE].set(bk)

    pos = jnp.arange(word_seq_len, dtype=jnp.int32)[:, None]              # (L, 1)
    mask = jnp.concatenate(
        [jnp.broadcast_to((pos < (word_seq_len - k + 1)).astype(jnp.float32),
                          (word_seq_len, FILTER_SIZE))
         for k in KERNEL_SIZES], axis=1)                                   # (L, 4F)

    (w1, b1), (w2, b2), (w3, b3), (w4, b4) = params["fc"]
    w4p = jnp.zeros((w4.shape[0], OUT_PAD), jnp.float32).at[:, :NUM_CLASSES].set(w4)
    b4p = jnp.zeros((1, OUT_PAD), jnp.float32).at[0, :NUM_CLASSES].set(b4)

    return {
        "emb": emb_p,
        "wc": wc.astype(jnp.bfloat16),
        "bc": bc,
        "mask": mask,
        "fc": ((w1.astype(jnp.bfloat16), b1.reshape(1, -1)),
               (w2.astype(jnp.bfloat16), b2.reshape(1, -1)),
               (w3.astype(jnp.bfloat16), b3.reshape(1, -1)),
               (w4p.astype(jnp.bfloat16), b4p)),
    }


# ----------------------------- pure-JAX reference (for a sanity check) --------------------

def word_cnn_reference(inp_word, params):
    emb = jnp.take(params["emb"], inp_word, axis=0)              # (B, L, E)
    B, L, E = emb.shape
    pooled = []
    for k in KERNEL_SIZES:
        P = L - k + 1
        patches = jnp.concatenate([emb[:, i:i + P, :] for i in range(k)], axis=-1)
        w, b = params["conv"][k]
        s = jax.nn.relu(jnp.einsum("bpc,cf->bpf", patches, w,
                                   precision=lax.Precision.HIGHEST) + b)
        pooled.append(jnp.max(s, axis=1))
    h = jnp.concatenate(pooled, axis=-1)
    for i, (w, b) in enumerate(params["fc"]):
        h = jnp.dot(h, w, precision=lax.Precision.HIGHEST) + b
        if i < 3:
            h = jax.nn.relu(h)
    return h


# ----------------------------- main --------------------------------------------------------

if __name__ == "__main__":
    key = jax.random.PRNGKey(0)
    pkey, dkey = jax.random.split(key)

    vocab_size, word_seq_len, emb_size, batch = 100, 16, 32, 2
    params = init_params(pkey, vocab_size, emb_size)
    prepared = prepare_params(params, word_seq_len)
    inp_word = jax.random.randint(
        dkey, (batch, word_seq_len), 0, vocab_size, dtype=jnp.int32)

    fwd = jax.jit(word_cnn_forward)
    logits = fwd(inp_word, prepared)
    jax.block_until_ready(logits)
    assert logits.shape == (batch, NUM_CLASSES), logits.shape

    ref = word_cnn_reference(inp_word, params)
    assert bool(jnp.allclose(logits, ref, atol=2e-2, rtol=2e-2)), (logits, ref)

    print("KERNEL_OK")
</pallas_src>

<mosaic_0001>
module attributes {stable_mosaic.version = 11 : i64} {
  func.func @_wordcnn_fused_kernel(%arg0: memref<32x1xi32, #tpu.memory_space<vmem>>, %arg1: memref<128x32xbf16, #tpu.memory_space<vmem>>, %arg2: memref<192x1024xbf16, #tpu.memory_space<vmem>>, %arg3: memref<1x1024xf32, #tpu.memory_space<vmem>>, %arg4: memref<16x1024xf32, #tpu.memory_space<vmem>>, %arg5: memref<1024x512xbf16, #tpu.memory_space<vmem>>, %arg6: memref<1x512xf32, #tpu.memory_space<vmem>>, %arg7: memref<512x256xbf16, #tpu.memory_space<vmem>>, %arg8: memref<1x256xf32, #tpu.memory_space<vmem>>, %arg9: memref<256x128xbf16, #tpu.memory_space<vmem>>, %arg10: memref<1x128xf32, #tpu.memory_space<vmem>>, %arg11: memref<128x128xbf16, #tpu.memory_space<vmem>>, %arg12: memref<1x128xf32, #tpu.memory_space<vmem>>, %arg13: memref<2x128xf32, #tpu.memory_space<vmem>>, %arg14: memref<40x32xf32, #tpu.memory_space<vmem>>, %arg15: memref<32x192xf32, #tpu.memory_space<vmem>>) attributes {dimension_semantics = [], scalar_prefetch = 0 : i64, scratch_operands = 2 : i64, tpu.core_type = #tpu.core_type<tc>} {
    %c0 = arith.constant 0 : index
    %c0_0 = arith.constant 0 : index
    %0 = vector.load %arg0[%c0, %c0_0] : memref<32x1xi32, #tpu.memory_space<vmem>>, vector<32x1xi32>
    %1 = tpu.iota {dimensions = array<i32: 1>} : vector<32x128xi32>
    %2 = vector.broadcast %0 : vector<32x1xi32> to vector<32x128xi32>
    %3 = arith.cmpi eq, %2, %1 : vector<32x128xi32>
    %4 = arith.extui %3 : vector<32x128xi1> to vector<32x128xi32>
    %5 = arith.sitofp %4 : vector<32x128xi32> to vector<32x128xf32>
    %6 = arith.truncf %5 : vector<32x128xf32> to vector<32x128xbf16>
    %c0_1 = arith.constant 0 : index
    %c0_2 = arith.constant 0 : index
    %7 = vector.load %arg1[%c0_1, %c0_2] : memref<128x32xbf16, #tpu.memory_space<vmem>>, vector<128x32xbf16>
    %cst = arith.constant dense<0.000000e+00> : vector<32x32xf32>
    %8 = tpu.matmul %6, %7, %cst {dimension_numbers = #tpu.dot_dimension_numbers<[1], [0], [0], [1], [0, 0, 1, 1], [], []>} : vector<32x128xbf16>, vector<128x32xbf16>, vector<32x32xf32> -> vector<32x32xf32>
    %c0_3 = arith.constant 0 : index
    %c0_4 = arith.constant 0 : index
    %9 = vector.load %arg14[%c0_3, %c0_4] : memref<40x32xf32, #tpu.memory_space<vmem>>, vector<32x32xf32>
    tpu.vector_store %arg14[%c0_3, %c0_4], %8 {strides = array<i32>} : memref<40x32xf32, #tpu.memory_space<vmem>>, vector<32x32xf32>,
    %cst_5 = arith.constant 0.000000e+00 : f32
    %10 = vector.broadcast %cst_5 : f32 to vector<8x32xf32>
    %c32 = arith.constant 32 : index
    %c0_6 = arith.constant 0 : index
    %11 = vector.load %arg14[%c32, %c0_6] : memref<40x32xf32, #tpu.memory_space<vmem>>, vector<8x32xf32>
    tpu.vector_store %arg14[%c32, %c0_6], %10 {strides = array<i32>} : memref<40x32xf32, #tpu.memory_space<vmem>>, vector<8x32xf32>,
    %c0_7 = arith.constant 0 : index
    %c0_8 = arith.constant 0 : index
    %12 = vector.load %arg15[%c0_7, %c0_8] : memref<32x192xf32, #tpu.memory_space<vmem>>, vector<32x32xf32>
    tpu.vector_store %arg15[%c0_7, %c0_8], %8 {strides = array<i32>} : memref<32x192xf32, #tpu.memory_space<vmem>>, vector<32x32xf32>,
    %c1 = arith.constant 1 : index
    %c0_9 = arith.constant 0 : index
    %13 = vector.load %arg14[%c1, %c0_9] : memref<40x32xf32, #tpu.memory_space<vmem>>, vector<32x32xf32>
    %c0_10 = arith.constant 0 : index
    %c32_11 = arith.constant 32 : index
    %14 = vector.load %arg15[%c0_10, %c32_11] : memref<32x192xf32, #tpu.memory_space<vmem>>, vector<32x32xf32>
    tpu.vector_store %arg15[%c0_10, %c32_11], %13 {strides = array<i32>} : memref<32x192xf32, #tpu.memory_space<vmem>>, vector<32x32xf32>,
    %c2 = arith.constant 2 : index
    %c0_12 = arith.constant 0 : index
    %15 = vector.load %arg14[%c2, %c0_12] : memref<40x32xf32, #tpu.memory_space<vmem>>, vector<32x32xf32>
    %c0_13 = arith.constant 0 : index
    %c64 = arith.constant 64 : index
    %16 = vector.load %arg15[%c0_13, %c64] : memref<32x192xf32, #tpu.memory_space<vmem>>, vector<32x32xf32>
    tpu.vector_store %arg15[%c0_13, %c64], %15 {strides = array<i32>} : memref<32x192xf32, #tpu.memory_space<vmem>>, vector<32x32xf32>,
    %c3 = arith.constant 3 : index
    %c0_14 = arith.constant 0 : index
    %17 = vector.load %arg14[%c3, %c0_14] : memref<40x32xf32, #tpu.memory_space<vmem>>, vector<32x32xf32>
    %c0_15 = arith.constant 0 : index
    %c96 = arith.constant 96 : index
    %18 = vector.load %arg15[%c0_15, %c96] : memref<32x192xf32, #tpu.memory_space<vmem>>, vector<32x32xf32>
    tpu.vector_store %arg15[%c0_15, %c96], %17 {strides = array<i32>} : memref<32x192xf32, #tpu.memory_space<vmem>>, vector<32x32xf32>,
    %c4 = arith.constant 4 : index
    %c0_16 = arith.constant 0 : index
    %19 = vector.load %arg14[%c4, %c0_16] : memref<40x32xf32, #tpu.memory_space<vmem>>, vector<32x32xf32>
    %c0_17 = arith.constant 0 : index
    %c128 = arith.constant 128 : index
    %20 = vector.load %arg15[%c0_17, %c128] : memref<32x192xf32, #tpu.memory_space<vmem>>, vector<32x32xf32>
    tpu.vector_store %arg15[%c0_17, %c128], %19 {strides = array<i32>} : memref<32x192xf32, #tpu.memory_space<vmem>>, vector<32x32xf32>,
    %c5 = arith.constant 5 : index
    %c0_18 = arith.constant 0 : index
    %21 = vector.load %arg14[%c5, %c0_18] : memref<40x32xf32, #tpu.memory_space<vmem>>, vector<32x32xf32>
    %c0_19 = arith.constant 0 : index
    %c160 = arith.constant 160 : index
    %22 = vector.load %arg15[%c0_19, %c160] : memref<32x192xf32, #tpu.memory_space<vmem>>, vector<32x32xf32>
    tpu.vector_store %arg15[%c0_19, %c160], %21 {strides = array<i32>} : memref<32x192xf32, #tpu.memory_space<vmem>>, vector<32x32xf32>,
    %c0_20 = arith.constant 0 : index
    %c0_21 = arith.constant 0 : index
    %23 = vector.load %arg15[%c0_20, %c0_21] : memref<32x192xf32, #tpu.memory_space<vmem>>, vector<32x192xf32>
    %24 = arith.truncf %23 : vector<32x192xf32> to vector<32x192xbf16>
    %c0_22 = arith.constant 0 : index
    %c0_23 = arith.constant 0 : index
    %25 = vector.load %arg2[%c0_22, %c0_23] : memref<192x1024xbf16, #tpu.memory_space<vmem>>, vector<192x1024xbf16>
    %cst_24 = arith.constant dense<0.000000e+00> : vector<32x1024xf32>
    %26 = tpu.matmul %24, %25, %cst_24 {dimension_numbers = #tpu.dot_dimension_numbers<[1], [0], [0], [1], [0, 0, 1, 1], [], []>} : vector<32x192xbf16>, vector<192x1024xbf16>, vector<32x1024xf32> -> vector<32x1024xf32>
    %c0_25 = arith.constant 0 : index
    %c0_26 = arith.constant 0 : index
    %27 = vector.load %arg3[%c0_25, %c0_26] : memref<1x1024xf32, #tpu.memory_space<vmem>>, vector<1x1024xf32>
    %28 = vector.broadcast %27 : vector<1x1024xf32> to vector<32x1024xf32>
    %29 = arith.addf %26, %28 : vector<32x1024xf32>
    %cst_27 = arith.constant 0.000000e+00 : f32
    %30 = vector.broadcast %cst_27 : f32 to vector<32x1024xf32>
    %31 = arith.maximumf %29, %30 : vector<32x1024xf32>
    %32 = vector.shape_cast %31 : vector<32x1024xf32> to vector<2x16x1024xf32>
    %c0_28 = arith.constant 0 : index
    %c0_29 = arith.constant 0 : index
    %33 = vector.load %arg4[%c0_28, %c0_29] : memref<16x1024xf32, #tpu.memory_space<vmem>>, vector<16x1024xf32>
    %34 = vector.shape_cast %33 : vector<16x1024xf32> to vector<1x16x1024xf32>
    %35 = vector.broadcast %34 : vector<1x16x1024xf32> to vector<2x16x1024xf32>
    %36 = arith.mulf %32, %35 : vector<2x16x1024xf32>
    %cst_30 = arith.constant dense<0xFF800000> : vector<2x1024xf32>
    %37 = vector.multi_reduction <maximumf>, %36, %cst_30 [1] : vector<2x16x1024xf32> to vector<2x1024xf32>
    %38 = arith.truncf %37 : vector<2x1024xf32> to vector<2x1024xbf16>
    %c0_31 = arith.constant 0 : index
    %c0_32 = arith.constant 0 : index
    %39 = vector.load %arg5[%c0_31, %c0_32] : memref<1024x512xbf16, #tpu.memory_space<vmem>>, vector<1024x512xbf16>
    %cst_33 = arith.constant dense<0.000000e+00> : vector<2x512xf32>
    %40 = tpu.matmul %38, %39, %cst_33 {dimension_numbers = #tpu.dot_dimension_numbers<[1], [0], [0], [1], [0, 0, 1, 1], [], []>} : vector<2x1024xbf16>, vector<1024x512xbf16>, vector<2x512xf32> -> vector<2x512xf32>
    %c0_34 = arith.constant 0 : index
    %c0_35 = arith.constant 0 : index
    %41 = vector.load %arg6[%c0_34, %c0_35] : memref<1x512xf32, #tpu.memory_space<vmem>>, vector<1x512xf32>
    %42 = vector.broadcast %41 : vector<1x512xf32> to vector<2x512xf32>
    %43 = arith.addf %40, %42 : vector<2x512xf32>
    %cst_36 = arith.constant 0.000000e+00 : f32
    %44 = vector.broadcast %cst_36 : f32 to vector<2x512xf32>
    %45 = arith.maximumf %43, %44 : vector<2x512xf32>
    %46 = arith.truncf %45 : vector<2x512xf32> to vector<2x512xbf16>
    %c0_37 = arith.constant 0 : index
    %c0_38 = arith.constant 0 : index
    %47 = vector.load %arg7[%c0_37, %c0_38] : memref<512x256xbf16, #tpu.memory_space<vmem>>, vector<512x256xbf16>
    %cst_39 = arith.constant dense<0.000000e+00> : vector<2x256xf32>
    %48 = tpu.matmul %46, %47, %cst_39 {dimension_numbers = #tpu.dot_dimension_numbers<[1], [0], [0], [1], [0, 0, 1, 1], [], []>} : vector<2x512xbf16>, vector<512x256xbf16>, vector<2x256xf32> -> vector<2x256xf32>
    %c0_40 = arith.constant 0 : index
    %c0_41 = arith.constant 0 : index
    %49 = vector.load %arg8[%c0_40, %c0_41] : memref<1x256xf32, #tpu.memory_space<vmem>>, vector<1x256xf32>
    %50 = vector.broadcast %49 : vector<1x256xf32> to vector<2x256xf32>
    %51 = arith.addf %48, %50 : vector<2x256xf32>
    %cst_42 = arith.constant 0.000000e+00 : f32
    %52 = vector.broadcast %cst_42 : f32 to vector<2x256xf32>
    %53 = arith.maximumf %51, %52 : vector<2x256xf32>
    %54 = arith.truncf %53 : vector<2x256xf32> to vector<2x256xbf16>
    %c0_43 = arith.constant 0 : index
    %c0_44 = arith.constant 0 : index
    %55 = vector.load %arg9[%c0_43, %c0_44] : memref<256x128xbf16, #tpu.memory_space<vmem>>, vector<256x128xbf16>
    %cst_45 = arith.constant dense<0.000000e+00> : vector<2x128xf32>
    %56 = tpu.matmul %54, %55, %cst_45 {dimension_numbers = #tpu.dot_dimension_numbers<[1], [0], [0], [1], [0, 0, 1, 1], [], []>} : vector<2x256xbf16>, vector<256x128xbf16>, vector<2x128xf32> -> vector<2x128xf32>
    %c0_46 = arith.constant 0 : index
    %c0_47 = arith.constant 0 : index
    %57 = vector.load %arg10[%c0_46, %c0_47] : memref<1x128xf32, #tpu.memory_space<vmem>>, vector<1x128xf32>
    %58 = vector.broadcast %57 : vector<1x128xf32> to vector<2x128xf32>
    %59 = arith.addf %56, %58 : vector<2x128xf32>
    %cst_48 = arith.constant 0.000000e+00 : f32
    %60 = vector.broadcast %cst_48 : f32 to vector<2x128xf32>
    %61 = arith.maximumf %59, %60 : vector<2x128xf32>
    %62 = arith.truncf %61 : vector<2x128xf32> to vector<2x128xbf16>
    %c0_49 = arith.constant 0 : index
    %c0_50 = arith.constant 0 : index
    %63 = vector.load %arg11[%c0_49, %c0_50] : memref<128x128xbf16, #tpu.memory_space<vmem>>, vector<128x128xbf16>
    %cst_51 = arith.constant dense<0.000000e+00> : vector<2x128xf32>
    %64 = tpu.matmul %62, %63, %cst_51 {dimension_numbers = #tpu.dot_dimension_numbers<[1], [0], [0], [1], [0, 0, 1, 1], [], []>} : vector<2x128xbf16>, vector<128x128xbf16>, vector<2x128xf32> -> vector<2x128xf32>
    %c0_52 = arith.constant 0 : index
    %c0_53 = arith.constant 0 : index
    %65 = vector.load %arg12[%c0_52, %c0_53] : memref<1x128xf32, #tpu.memory_space<vmem>>, vector<1x128xf32>
    %66 = vector.broadcast %65 : vector<1x128xf32> to vector<2x128xf32>
    %67 = arith.addf %64, %66 : vector<2x128xf32>
    %c0_54 = arith.constant 0 : index
    %c0_55 = arith.constant 0 : index
    %68 = vector.load %arg13[%c0_54, %c0_55] : memref<2x128xf32, #tpu.memory_space<vmem>>, vector<2x128xf32>
    tpu.vector_store %arg13[%c0_54, %c0_55], %67 {strides = array<i32>} : memref<2x128xf32, #tpu.memory_space<vmem>>, vector<2x128xf32>,
    return
  }
}

</mosaic_0001>

<llo_original>
// kernel: word_cnn_forward.1
$region0: #{word_cnn_forward.1}
  #allocation0 [shape = 'u32[]', space=smem, size = 0x4, offset = 0x4, fixed_abs, tag = 'smem constant byte address 0x4 - core index']
  #allocation1 [shape = 'u32[144,128]{1,0:T(1,128)}', space=vmem, size = 0x12000, scoped, tag = 'internal scratch']
  #allocation2 [shape = 'f32[40,32]{1,0:T(8,128)}', space=vmem, size = 0x5000, scoped, tag = 'scratch operand']
  #allocation3 [shape = 'f32[32,192]{1,0:T(8,128)}', space=vmem, size = 0x8000, scoped, tag = 'scratch operand']
  %s0 = inlined_call_operand.vmem [shape: s32[32,1], index: 0, kind: input, shape index: {}]
  %s1 = inlined_call_operand.vmem [shape: bf16[128,32], index: 1, kind: input, shape index: {}]
  %s2 = inlined_call_operand.hbm [shape: bf16[192,1024], index: 2, kind: input, shape index: {}]
  %s3 = inlined_call_operand.hbm [shape: f32[1,1024], index: 3, kind: input, shape index: {}]
  %s4 = inlined_call_operand.vmem [shape: f32[16,1024], index: 4, kind: input, shape index: {}]
  %s5 = inlined_call_operand.hbm [shape: bf16[1024,512], index: 5, kind: input, shape index: {}]
  %s6 = inlined_call_operand.vmem [shape: f32[1,512], index: 6, kind: input, shape index: {}]
  %s7 = inlined_call_operand.hbm [shape: bf16[512,256], index: 7, kind: input, shape index: {}]
  %s8 = inlined_call_operand.vmem [shape: f32[1,256], index: 8, kind: input, shape index: {}]
  %s9 = inlined_call_operand.hbm [shape: bf16[256,128], index: 9, kind: input, shape index: {}]
  %s10 = inlined_call_operand.hbm [shape: f32[1,128], index: 10, kind: input, shape index: {}]
  %s11 = inlined_call_operand.hbm [shape: bf16[128,128], index: 11, kind: input, shape index: {}]
  %s12 = inlined_call_operand.hbm [shape: f32[1,128], index: 12, kind: input, shape index: {}]
  %s13 = inlined_call_operand.hbm [shape: f32[2,128], index: 13, kind: output, shape index: {}]
  %s14 = sld [smem:[#allocation0]]
  $region94: #{word_cnn_forward.1} parent=0
    _
  %s16 = ssub.s32 1, %s14
  %s17 = scalar_select 0, %s16, %s14
  $region1: #{word_cnn_forward.1} parent=0
    #allocation4 [shape = 'u8[393216]{0}', space=vmem, size = 0x60000, scoped, tag = 'input window, operand 2, single buffered']
    #allocation5 [shape = 's32[1]{0}', space=sflag, size = 0x4, scoped, tag = 'scoped memory for word_cnn_forward.1']
    #allocation6 [shape = 's32[1]{0}', space=sflag, size = 0x4, scoped, tag = 'scoped memory for word_cnn_forward.1']
    #allocation7 [shape = 'u8[4096]{0}', space=vmem, size = 0x1000, scoped, tag = 'input window, operand 3, single buffered']
    #allocation8 [shape = 's32[1]{0}', space=sflag, size = 0x4, scoped, tag = 'scoped memory for word_cnn_forward.1']
    #allocation9 [shape = 'u8[1048576]{0}', space=vmem, size = 0x100000, scoped, tag = 'input window, operand 5, single buffered']
    #allocation10 [shape = 'u8[262144]{0}', space=vmem, size = 0x40000, scoped, tag = 'input window, operand 7, single buffered']
    #allocation11 [shape = 's32[1]{0}', space=sflag, size = 0x4, scoped, tag = 'scoped memory for word_cnn_forward.1']
    #allocation12 [shape = 'u8[65536]{0}', space=vmem, size = 0x10000, scoped, tag = 'input window, operand 9, single buffered']
    #allocation13 [shape = 'u8[512]{0}', space=vmem, size = 0x400, scoped, tag = 'input window, operand 10, single buffered']
    #allocation14 [shape = 's32[1]{0}', space=sflag, size = 0x4, scoped, tag = 'scoped memory for word_cnn_forward.1']
    #allocation15 [shape = 'u8[32768]{0}', space=vmem, size = 0x8000, scoped, tag = 'input window, operand 11, single buffered']
    #allocation16 [shape = 'u8[512]{0}', space=vmem, size = 0x400, scoped, tag = 'input window, operand 12, single buffered']
    #allocation17 [shape = 's32[1]{0}', space=sflag, size = 0x4, scoped, tag = 'scoped memory for word_cnn_forward.1']
    #allocation18 [shape = 'u8[1024]{0}', space=vmem, size = 0x400, scoped, tag = 'output window, operand 0, single buffered']
    %18 = vsyncpa [#allocation5], 0
    %19 = vsyncpa [#allocation8], 0
    %20 = vsyncpa [#allocation11], 0
    %21 = vsyncpa [#allocation14], 0
    %22 = vsyncpa [#allocation17], 0
    %23 = vsyncpa [#allocation6], 0
    // Predicated region
    $region2: #{word_cnn_forward.1} parent=1 // pred_check
      _
    $region3: #{word_cnn_forward.1} parent=1 // pred_check_branch
      %25 = sbr.rel (0) target = $region5
    $region4: #{word_cnn_forward.1} parent=1 // pred_region
      _
    $region5: #{word_cnn_forward.1} parent=1 // pred_fallthru
      _
    // Predicated region
    $region6: #{word_cnn_forward.1} parent=1 // pred_check
      _
    $region7: #{word_cnn_forward.1} parent=1 // pred_check_branch
      %27 = sbr.rel (0) target = $region9
    $region8: #{word_cnn_forward.1} parent=1 // pred_region
      _
    $region9: #{word_cnn_forward.1} parent=1 // pred_fallthru
      _
    // Predicated region
    $region10: #{word_cnn_forward.1} parent=1 // pred_check
      _
    $region11: #{word_cnn_forward.1} parent=1 // pred_check_branch
      %29 = sbr.rel (0) target = $region13
    $region12: #{word_cnn_forward.1} parent=1 // pred_region
      %s31 = ssub.s32 12288, 12288
      %32 = vsyncadd [#allocation5], %s31
      %s33 = sshll.u32 [#allocation4], 4
      %s34 = int_to_ptr.vmem [resolvable:$true] %s33
      %39 = dma.hbm_to_vmem [thread:$0]  %s2, 12288, %s34, [#allocation5], 512, 512, 32
    $region13: #{word_cnn_forward.1} parent=1 // pred_fallthru
      _
    // Predicated region
    $region14: #{word_cnn_forward.1} parent=1 // pred_check
      _
    $region15: #{word_cnn_forward.1} parent=1 // pred_check_branch
      %41 = sbr.rel (0) target = $region17
    $region16: #{word_cnn_forward.1} parent=1 // pred_region
      %s43 = ssub.s32 128, 128
      %44 = vsyncadd [#allocation8], %s43
      %s46 = sshll.u32 [#allocation7], 4
      %s47 = int_to_ptr.vmem [resolvable:$true] %s46
      %49 = dma.hbm_to_vmem [thread:$0]  %s3, 128, %s47, [#allocation8]
    $region17: #{word_cnn_forward.1} parent=1 // pred_fallthru
      _
    // Predicated region
    $region18: #{word_cnn_forward.1} parent=1 // pred_check
      _
    $region19: #{word_cnn_forward.1} parent=1 // pred_check_branch
      %51 = sbr.rel (0) target = $region21
    $region20: #{word_cnn_forward.1} parent=1 // pred_region
      _
    $region21: #{word_cnn_forward.1} parent=1 // pred_fallthru
      _
    // Predicated region
    $region22: #{word_cnn_forward.1} parent=1 // pred_check
      _
    $region23: #{word_cnn_forward.1} parent=1 // pred_check_branch
      %53 = sbr.rel (0) target = $region25
    $region24: #{word_cnn_forward.1} parent=1 // pred_region
      %s55 = ssub.s32 32768, 32768
      %56 = vsyncadd [#allocation8], %s55
      %s57 = sshll.u32 [#allocation9], 4
      %s58 = int_to_ptr.vmem [resolvable:$true] %s57
      %63 = dma.hbm_to_vmem [thread:$0]  %s5, 32768, %s58, [#allocation8], 256, 256, 16
    $region25: #{word_cnn_forward.1} parent=1 // pred_fallthru
      _
    // Predicated region
    $region26: #{word_cnn_forward.1} parent=1 // pred_check
      _
    $region27: #{word_cnn_forward.1} parent=1 // pred_check_branch
      %65 = sbr.rel (0) target = $region29
    $region28: #{word_cnn_forward.1} parent=1 // pred_region
      _
    $region29: #{word_cnn_forward.1} parent=1 // pred_fallthru
      _
    // Predicated region
    $region30: #{word_cnn_forward.1} parent=1 // pred_check
      _
    $region31: #{word_cnn_forward.1} parent=1 // pred_check_branch
      %67 = sbr.rel (0) target = $region33
    $region32: #{word_cnn_forward.1} parent=1 // pred_region
      %s69 = ssub.s32 8192, 8192
      %70 = vsyncadd [#allocation11], %s69
      %s71 = sshll.u32 [#allocation10], 4
      %s72 = int_to_ptr.vmem [resolvable:$true] %s71
      %77 = dma.hbm_to_vmem [thread:$0]  %s7, 8192, %s72, [#allocation11], 128, 128, 8
    $region33: #{word_cnn_forward.1} parent=1 // pred_fallthru
      _
    // Predicated region
    $region34: #{word_cnn_forward.1} parent=1 // pred_check
      _
    $region35: #{word_cnn_forward.1} parent=1 // pred_check_branch
      %79 = sbr.rel (0) target = $region37
    $region36: #{word_cnn_forward.1} parent=1 // pred_region
      _
    $region37: #{word_cnn_forward.1} parent=1 // pred_fallthru
      _
    // Predicated region
    $region38: #{word_cnn_forward.1} parent=1 // pred_check
      _
    $region39: #{word_cnn_forward.1} parent=1 // pred_check_branch
      %81 = sbr.rel (0) target = $region41
    $region40: #{word_cnn_forward.1} parent=1 // pred_region
      %s83 = ssub.s32 2048, 2048
      %84 = vsyncadd [#allocation11], %s83
      %s85 = sshll.u32 [#allocation12], 4
      %s86 = int_to_ptr.vmem [resolvable:$true] %s85
      %91 = dma.hbm_to_vmem [thread:$0]  %s9, 2048, %s86, [#allocation11], 64, 64, 4
    $region41: #{word_cnn_forward.1} parent=1 // pred_fallthru
      _
    // Predicated region
    $region42: #{word_cnn_forward.1} parent=1 // pred_check
      _
    $region43: #{word_cnn_forward.1} parent=1 // pred_check_branch
      %93 = sbr.rel (0) target = $region45
    $region44: #{word_cnn_forward.1} parent=1 // pred_region
      %s95 = ssub.s32 16, 16
      %96 = vsyncadd [#allocation14], %s95
      %s98 = sshll.u32 [#allocation13], 4
      %s99 = int_to_ptr.vmem [resolvable:$true] %s98
      %101 = dma.hbm_to_vmem [thread:$0]  %s10, 16, %s99, [#allocation14]
    $region45: #{word_cnn_forward.1} parent=1 // pred_fallthru
      _
    // Predicated region
    $region46: #{word_cnn_forward.1} parent=1 // pred_check
      _
    $region47: #{word_cnn_forward.1} parent=1 // pred_check_branch
      %103 = sbr.rel (0) target = $region49
    $region48: #{word_cnn_forward.1} parent=1 // pred_region
      %s105 = ssub.s32 1024, 1024
      %106 = vsyncadd [#allocation14], %s105
      %s107 = sshll.u32 [#allocation15], 4
      %s108 = int_to_ptr.vmem [resolvable:$true] %s107
      %113 = dma.hbm_to_vmem [thread:$0]  %s11, 1024, %s108, [#allocation14], 64, 64, 4
    $region49: #{word_cnn_forward.1} parent=1 // pred_fallthru
      _
    // Predicated region
    $region50: #{word_cnn_forward.1} parent=1 // pred_check
      _
    $region51: #{word_cnn_forward.1} parent=1 // pred_check_branch
      %115 = sbr.rel (0) target = $region53
    $region52: #{word_cnn_forward.1} parent=1 // pred_region
      %s117 = ssub.s32 16, 16
      %118 = vsyncadd [#allocation17], %s117
      %s120 = sshll.u32 [#allocation16], 4
      %s121 = int_to_ptr.vmem [resolvable:$true] %s120
      %123 = dma.hbm_to_vmem [thread:$0]  %s12, 16, %s121, [#allocation17]
    $region53: #{word_cnn_forward.1} parent=1 // pred_fallthru
      _
    // Predicated region
    $region54: #{word_cnn_forward.1} parent=1 // pred_check
      _
    $region55: #{word_cnn_forward.1} parent=1 // pred_check_branch
      %125 = sbr.rel (0) target = $region57
    $region56: #{word_cnn_forward.1} parent=1 // pred_region
      %126 = dma.done [#allocation5], 12288
    $region57: #{word_cnn_forward.1} parent=1 // pred_fallthru
      _
    // Predicated region
    $region58: #{word_cnn_forward.1} parent=1 // pred_check
      _
    $region59: #{word_cnn_forward.1} parent=1 // pred_check_branch
      %128 = sbr.rel (0) target = $region61
    $region60: #{word_cnn_forward.1} parent=1 // pred_region
      %129 = dma.done [#allocation8], 128
    $region61: #{word_cnn_forward.1} parent=1 // pred_fallthru
      _
    // Predicated region
    $region62: #{word_cnn_forward.1} parent=1 // pred_check
      _
    $region63: #{word_cnn_forward.1} parent=1 // pred_check_branch
      %131 = sbr.rel (0) target = $region65
    $region64: #{word_cnn_forward.1} parent=1 // pred_region
      %132 = dma.done [#allocation8], 32768
    $region65: #{word_cnn_forward.1} parent=1 // pred_fallthru
      _
    // Predicated region
    $region66: #{word_cnn_forward.1} parent=1 // pred_check
      _
    $region67: #{word_cnn_forward.1} parent=1 // pred_check_branch
      %134 = sbr.rel (0) target = $region69
    $region68: #{word_cnn_forward.1} parent=1 // pred_region
      %135 = dma.done [#allocation11], 8192
    $region69: #{word_cnn_forward.1} parent=1 // pred_fallthru
      _
    // Predicated region
    $region70: #{word_cnn_forward.1} parent=1 // pred_check
      _
    $region71: #{word_cnn_forward.1} parent=1 // pred_check_branch
      %137 = sbr.rel (0) target = $region73
    $region72: #{word_cnn_forward.1} parent=1 // pred_region
      %138 = dma.done [#allocation11], 2048
    $region73: #{word_cnn_forward.1} parent=1 // pred_fallthru
      _
    // Predicated region
    $region74: #{word_cnn_forward.1} parent=1 // pred_check
      _
    $region75: #{word_cnn_forward.1} parent=1 // pred_check_branch
      %140 = sbr.rel (0) target = $region77
    $region76: #{word_cnn_forward.1} parent=1 // pred_region
      %141 = dma.done [#allocation14], 16
    $region77: #{word_cnn_forward.1} parent=1 // pred_fallthru
      _
    // Predicated region
    $region78: #{word_cnn_forward.1} parent=1 // pred_check
      _
    $region79: #{word_cnn_forward.1} parent=1 // pred_check_branch
      %143 = sbr.rel (0) target = $region81
    $region80: #{word_cnn_forward.1} parent=1 // pred_region
      %144 = dma.done [#allocation14], 1024
    $region81: #{word_cnn_forward.1} parent=1 // pred_fallthru
      _
    // Predicated region
    $region82: #{word_cnn_forward.1} parent=1 // pred_check
      _
    $region83: #{word_cnn_forward.1} parent=1 // pred_check_branch
      %146 = sbr.rel (0) target = $region85
    $region84: #{word_cnn_forward.1} parent=1 // pred_region
      %147 = dma.done [#allocation17], 16
    $region85: #{word_cnn_forward.1} parent=1 // pred_fallthru
      _
    %v149 = vld [vmem:[%s0] sm:$0xff]
    %v150 = vld [vmem:[%s0 + $0x8] sm:$0xff]
    %v151 = vld [vmem:[%s0 + $0x10] sm:$0xff]
    %v152 = vld [vmem:[%s0 + $0x18] sm:$0xff]
    %v153 = vlaneseq
    %v154 = vand.u32 %v153, 127
    %155 = vset.pattern.permute.xlu0 0
    %156 = vperm.xlu0 %155, %v149
    %v157 = vpop.permute.xlu0 %156
    %158 = vset.pattern.permute.xlu0 0
    %159 = vperm.xlu0 %158, %v150
    %v160 = vpop.permute.xlu0 %159
    %161 = vset.pattern.permute.xlu0 0
    %162 = vperm.xlu0 %161, %v151
    %v163 = vpop.permute.xlu0 %162
    %164 = vset.pattern.permute.xlu0 0
    %165 = vperm.xlu0 %164, %v152
    %v166 = vpop.permute.xlu0 %165
    %vm167 = vcmp.eq.s32.totalorder %v157, %v154
    %vm168 = vcmp.eq.s32.totalorder %v160, %v154
    %vm169 = vcmp.eq.s32.totalorder %v163, %v154
    %vm170 = vcmp.eq.s32.totalorder %v166, %v154
    %v171 = vsel %vm167, 1, 0
    %v172 = vsel %vm168, 1, 0
    %v173 = vsel %vm169, 1, 0
    %v174 = vsel %vm170, 1, 0
    %v175 = vcvt.s32.f32 %v171
    %v176 = vcvt.s32.f32 %v172
    %v177 = vcvt.s32.f32 %v173
    %v178 = vcvt.s32.f32 %v174
    %v179 = vpack.c.bf16 %v176, %v175
    %v180 = vpack.c.bf16 %v178, %v177
    %v181 = vld [vmem:[%s1] sm:$0xf]
    %v182 = vld [vmem:[%s1 + $0x4] sm:$0xf]
    %v183 = vld [vmem:[%s1 + $0x8] sm:$0xf]
    %v184 = vld [vmem:[%s1 + $0xc] sm:$0xf]
    %v185 = vld [vmem:[%s1 + $0x10] sm:$0xf]
    %v186 = vld [vmem:[%s1 + $0x14] sm:$0xf]
    %v187 = vld [vmem:[%s1 + $0x18] sm:$0xf]
    %v188 = vld [vmem:[%s1 + $0x1c] sm:$0xf]
    %v189 = vld [vmem:[%s1 + $0x20] sm:$0xf]
    %v190 = vld [vmem:[%s1 + $0x24] sm:$0xf]
    %v191 = vld [vmem:[%s1 + $0x28] sm:$0xf]
    %v192 = vld [vmem:[%s1 + $0x2c] sm:$0xf]
    %v193 = vld [vmem:[%s1 + $0x30] sm:$0xf]
    %v194 = vld [vmem:[%s1 + $0x34] sm:$0xf]
    %v195 = vld [vmem:[%s1 + $0x38] sm:$0xf]
    %v196 = vld [vmem:[%s1 + $0x3c] sm:$0xf]
    %v213 = vunpack.c.l.b16 %v181
    %v214 = vunpack.c.l.b16 %v182
    %v215 = vunpack.c.l.b16 %v183
    %v216 = vunpack.c.l.b16 %v184
    %v217 = vunpack.c.l.b16 %v185
    %v218 = vunpack.c.l.b16 %v186
    %v219 = vunpack.c.l.b16 %v187
    %v220 = vunpack.c.l.b16 %v188
    %v221 = vunpack.c.l.b16 %v189
    %v222 = vunpack.c.l.b16 %v190
    %v223 = vunpack.c.l.b16 %v191
    %v224 = vunpack.c.l.b16 %v192
    %v225 = vunpack.c.l.b16 %v193
    %v226 = vunpack.c.l.b16 %v194
    %v227 = vunpack.c.l.b16 %v195
    %v228 = vunpack.c.l.b16 %v196
    %v229 = vpack.c.b16 %v214, %v213
    %v230 = vpack.c.b16 %v216, %v215
    %v231 = vpack.c.b16 %v218, %v217
    %v232 = vpack.c.b16 %v220, %v219
    %v233 = vpack.c.b16 %v222, %v221
    %v234 = vpack.c.b16 %v224, %v223
    %v235 = vpack.c.b16 %v226, %v225
    %v236 = vpack.c.b16 %v228, %v227
    %245 = vmatprep.subr.bf16.mxu0 0
    %246 = vmatpush1.bf16.msra.mxu0 %v236
    %247 = vmatprep.subr.bf16.mxu0 0
    %248 = vmatpush1.bf16.msra.mxu0 %v235
    %249 = vmatprep.subr.bf16.mxu0 0
    %250 = vmatpush1.bf16.msra.mxu0 %v234
    %251 = vmatprep.subr.bf16.mxu0 0
    %252 = vmatpush1.bf16.msra.mxu0 %v233
    %253 = vmatprep.subr.bf16.mxu0 0
    %254 = vmatpush1.bf16.msra.mxu0 %v232
    %255 = vmatprep.subr.bf16.mxu0 0
    %256 = vmatpush1.bf16.msra.mxu0 %v231
    %257 = vmatprep.subr.bf16.mxu0 0
    %258 = vmatpush1.bf16.msra.mxu0 %v230
    %259 = vmatprep.subr.bf16.mxu0 0
    %260 = vmatpush1.bf16.msra.mxu0 %v229
    %261 = vmatprep.subr.bf16.mxu0 0
    %262 = vmatpush2.bf16.msra.mxu0 0
    %263 = vmatprep.subr.bf16.mxu0 0
    %264 = vmatpush2.bf16.msra.mxu0 0
    %265 = vmatprep.subr.bf16.mxu0 0
    %266 = vmatpush2.bf16.msra.mxu0 0
    %267 = vmatprep.subr.bf16.mxu0 0
    %268 = vmatpush2.bf16.msra.mxu0 0
    %269 = vmatprep.subr.bf16.mxu0 0
    %270 = vmatpush2.bf16.msra.mxu0 0
    %271 = vmatprep.subr.bf16.mxu0 0
    %272 = vmatpush2.bf16.msra.mxu0 0
    %273 = vmatprep.subr.bf16.mxu0 0
    %274 = vmatpush2.bf16.msra.mxu0 0
    %275 = vmatprep.subr.bf16.mxu0 0
    %276 = vmatpush2.bf16.msra.mxu0 0
    %277 = vmatprep.mubr.bf16.mxu0 0
    %278 = vmatmul.mubr.bf16.gmra.mxu0 %v179
    %v279 = vpop.f32.mrf.mxu0
    %v280 = vadd.f32 0.0, %v279
    %v281 = vpop.f32.mrf.mxu0
    %v282 = vpop.f32.mrf.mxu0
    %v283 = vadd.f32 0.0, %v282
    %v284 = vpop.f32.mrf.mxu0
    %285 = vmatprep.mubr.bf16.mxu0 0
    %286 = vmatmul.mubr.bf16.gmra.mxu0 %v180
    %v287 = vpop.f32.mrf.mxu0
    %v288 = vadd.f32 0.0, %v287
    %v289 = vpop.f32.mrf.mxu0
    %v290 = vpop.f32.mrf.mxu0
    %v291 = vadd.f32 0.0, %v290
    %v292 = vpop.f32.mrf.mxu0
    %293 = vdwg.mxu0
    %vm294 = vcmask 261120
    %295 = vst.msk [vmem:[#allocation2] sm:$0xff] %vm294, %v280
    %296 = vst.msk [vmem:[#allocation2 + $0x8] sm:$0xff] %vm294, %v283
    %297 = vst.msk [vmem:[#allocation2 + $0x10] sm:$0xff] %vm294, %v288
    %298 = vst.msk [vmem:[#allocation2 + $0x18] sm:$0xff] %vm294, %v291
    %299 = vst.msk [vmem:[#allocation2 + $0x20] sm:$0xff] %vm294, 0.0
    %300 = vst.msk [vmem:[#allocation3] sm:$0xff] %vm294, %v280
    %301 = vst.msk [vmem:[#allocation3 + $0x10] sm:$0xff] %vm294, %v283
    %302 = vst.msk [vmem:[#allocation3 + $0x20] sm:$0xff] %vm294, %v288
    %303 = vst.msk [vmem:[#allocation3 + $0x30] sm:$0xff] %vm294, %v291
    %v304 = vld [vmem:[#allocation2 + $0x1] sm:$0xff]
    %v305 = vld [vmem:[#allocation2 + $0x9] sm:$0xff]
    %v306 = vld [vmem:[#allocation2 + $0x11] sm:$0xff]
    %v307 = vld [vmem:[#allocation2 + $0x19] sm:$0xff]
    %312 = vrot.lane.b32.xlu0 %v304, 32
    %v313 = vpop.permute.xlu0 %312
    %314 = vrot.lane.b32.xlu0 %v305, 32
    %v315 = vpop.permute.xlu0 %314
    %316 = vrot.lane.b32.xlu0 %v306, 32
    %v317 = vpop.permute.xlu0 %316
    %318 = vrot.lane.b32.xlu0 %v307, 32
    %v319 = vpop.permute.xlu0 %318
    %vm324 = vcmask 523520
    %325 = vst.msk [vmem:[#allocation3] sm:$0xff] %vm324, %v313
    %326 = vst.msk [vmem:[#allocation3 + $0x10] sm:$0xff] %vm324, %v315
    %327 = vst.msk [vmem:[#allocation3 + $0x20] sm:$0xff] %vm324, %v317
    %328 = vst.msk [vmem:[#allocation3 + $0x30] sm:$0xff] %vm324, %v319
    %v329 = vld [vmem:[#allocation2 + $0x2] sm:$0xff]
    %v330 = vld [vmem:[#allocation2 + $0xa] sm:$0xff]
    %v331 = vld [vmem:[#allocation2 + $0x12] sm:$0xff]
    %v332 = vld [vmem:[#allocation2 + $0x1a] sm:$0xff]
    %337 = vrot.lane.b32.xlu0 %v329, 64
    %v338 = vpop.permute.xlu0 %337
    %339 = vrot.lane.b32.xlu0 %v330, 64
    %v340 = vpop.permute.xlu0 %339
    %341 = vrot.lane.b32.xlu0 %v331, 64
    %v342 = vpop.permute.xlu0 %341
    %343 = vrot.lane.b32.xlu0 %v332, 64
    %v344 = vpop.permute.xlu0 %343
    %vm349 = vcmask 785920
    %350 = vst.msk [vmem:[#allocation3] sm:$0xff] %vm349, %v338
    %351 = vst.msk [vmem:[#allocation3 + $0x10] sm:$0xff] %vm349, %v340
    %352 = vst.msk [vmem:[#allocation3 + $0x20] sm:$0xff] %vm349, %v342
    %353 = vst.msk [vmem:[#allocation3 + $0x30] sm:$0xff] %vm349, %v344
    %v354 = vld [vmem:[#allocation2 + $0x3] sm:$0xff]
    %v355 = vld [vmem:[#allocation2 + $0xb] sm:$0xff]
    %v356 = vld [vmem:[#allocation2 + $0x13] sm:$0xff]
    %v357 = vld [vmem:[#allocation2 + $0x1b] sm:$0xff]
    %362 = vrot.lane.b32.xlu0 %v354, 96
    %v363 = vpop.permute.xlu0 %362
    %364 = vrot.lane.b32.xlu0 %v355, 96
    %v365 = vpop.permute.xlu0 %364
    %366 = vrot.lane.b32.xlu0 %v356, 96
    %v367 = vpop.permute.xlu0 %366
    %368 = vrot.lane.b32.xlu0 %v357, 96
    %v369 = vpop.permute.xlu0 %368
    %vm374 = vcmask 1048320
    %375 = vst.msk [vmem:[#allocation3] sm:$0xff] %vm374, %v363
    %376 = vst.msk [vmem:[#allocation3 + $0x10] sm:$0xff] %vm374, %v365
    %377 = vst.msk [vmem:[#allocation3 + $0x20] sm:$0xff] %vm374, %v367
    %378 = vst.msk [vmem:[#allocation3 + $0x30] sm:$0xff] %vm374, %v369
    %v379 = vld [vmem:[#allocation2 + $0x4] sm:$0xff]
    %v380 = vld [vmem:[#allocation2 + $0xc] sm:$0xff]
    %v381 = vld [vmem:[#allocation2 + $0x14] sm:$0xff]
    %v382 = vld [vmem:[#allocation2 + $0x1c] sm:$0xff]
    %383 = vst.msk [vmem:[#allocation3 + $0x8] sm:$0xff] %vm294, %v379
    %384 = vst.msk [vmem:[#allocation3 + $0x18] sm:$0xff] %vm294, %v380
    %385 = vst.msk [vmem:[#allocation3 + $0x28] sm:$0xff] %vm294, %v381
    %386 = vst.msk [vmem:[#allocation3 + $0x38] sm:$0xff] %vm294, %v382
    %v387 = vld [vmem:[#allocation2 + $0x5] sm:$0xff]
    %v388 = vld [vmem:[#allocation2 + $0xd] sm:$0xff]
    %v389 = vld [vmem:[#allocation2 + $0x15] sm:$0xff]
    %v390 = vld [vmem:[#allocation2 + $0x1d] sm:$0xff]
    %395 = vrot.lane.b32.xlu0 %v387, 32
    %v396 = vpop.permute.xlu0 %395
    %397 = vrot.lane.b32.xlu0 %v388, 32
    %v398 = vpop.permute.xlu0 %397
    %399 = vrot.lane.b32.xlu0 %v389, 32
    %v400 = vpop.permute.xlu0 %399
    %401 = vrot.lane.b32.xlu0 %v390, 32
    %v402 = vpop.permute.xlu0 %401
    %407 = vst.msk [vmem:[#allocation3 + $0x8] sm:$0xff] %vm324, %v396
    %408 = vst.msk [vmem:[#allocation3 + $0x18] sm:$0xff] %vm324, %v398
    %409 = vst.msk [vmem:[#allocation3 + $0x28] sm:$0xff] %vm324, %v400
    %410 = vst.msk [vmem:[#allocation3 + $0x38] sm:$0xff] %vm324, %v402
    %v411 = vld [vmem:[#allocation3] sm:$0xff]
    %v412 = vld [vmem:[#allocation3 + $0x8] sm:$0xff]
    %v413 = vld [vmem:[#allocation3 + $0x10] sm:$0xff]
    %v414 = vld [vmem:[#allocation3 + $0x18] sm:$0xff]
    %v415 = vld [vmem:[#allocation3 + $0x20] sm:$0xff]
    %v416 = vld [vmem:[#allocation3 + $0x28] sm:$0xff]
    %v417 = vld [vmem:[#allocation3 + $0x30] sm:$0xff]
    %v418 = vld [vmem:[#allocation3 + $0x38] sm:$0xff]
    %v419 = vpack.c.bf16 %v413, %v411
    %v420 = vpack.c.bf16 %v414, %v412
    %v421 = vpack.c.bf16 %v417, %v415
    %v422 = vpack.c.bf16 %v418, %v416
    %v423 = vld [vmem:[#allocation4] sm:$0xff]
    %v424 = vld [vmem:[#allocation4 + $0x8] sm:$0xff]
    %v425 = vld [vmem:[#allocation4 + $0x10] sm:$0xff]
    %v426 = vld [vmem:[#allocation4 + $0x18] sm:$0xff]
    %v427 = vld [vmem:[#allocation4 + $0x20] sm:$0xff]
    %v428 = vld [vmem:[#allocation4 + $0x28] sm:$0xff]
    %v429 = vld [vmem:[#allocation4 + $0x30] sm:$0xff]
    %v430 = vld [vmem:[#allocation4 + $0x38] sm:$0xff]
    %v431 = vld [vmem:[#allocation4 + $0x40] sm:$0xff]
    %v432 = vld [vmem:[#allocation4 + $0x48] sm:$0xff]
    %v433 = vld [vmem:[#allocation4 + $0x50] sm:$0xff]
    %v434 = vld [vmem:[#allocation4 + $0x58] sm:$0xff]
    %v435 = vld [vmem:[#allocation4 + $0x60] sm:$0xff]
    %v436 = vld [vmem:[#allocation4 + $0x68] sm:$0xff]
    %v437 = vld [vmem:[#allocation4 + $0x70] sm:$0xff]
    %v438 = vld [vmem:[#allocation4 + $0x78] sm:$0xff]
    %v439 = vld [vmem:[#allocation4 + $0x80] sm:$0xff]
    %v440 = vld [vmem:[#allocation4 + $0x88] sm:$0xff]
    %v441 = vld [vmem:[#allocation4 + $0x90] sm:$0xff]
    %v442 = vld [vmem:[#allocation4 + $0x98] sm:$0xff]
    %v443 = vld [vmem:[#allocation4 + $0xa0] sm:$0xff]
    %v444 = vld [vmem:[#allocation4 + $0xa8] sm:$0xff]
    %v445 = vld [vmem:[#allocation4 + $0xb0] sm:$0xff]
    %v446 = vld [vmem:[#allocation4 + $0xb8] sm:$0xff]
    %v447 = vld [vmem:[#allocation4 + $0xc0] sm:$0xff]
    %v448 = vld [vmem:[#allocation4 + $0xc8] sm:$0xff]
    %v449 = vld [vmem:[#allocation4 + $0xd0] sm:$0xff]
    %v450 = vld [vmem:[#allocation4 + $0xd8] sm:$0xff]
    %v451 = vld [vmem:[#allocation4 + $0xe0] sm:$0xff]
    %v452 = vld [vmem:[#allocation4 + $0xe8] sm:$0xff]
    %v453 = vld [vmem:[#allocation4 + $0xf0] sm:$0xff]
    %v454 = vld [vmem:[#allocation4 + $0xf8] sm:$0xff]
    %v455 = vld [vmem:[#allocation4 + $0x100] sm:$0xff]
    %v456 = vld [vmem:[#allocation4 + $0x108] sm:$0xff]
    %v457 = vld [vmem:[#allocation4 + $0x110] sm:$0xff]
    %v458 = vld [vmem:[#allocation4 + $0x118] sm:$0xff]
    %v459 = vld [vmem:[#allocation4 + $0x120] sm:$0xff]
    %v460 = vld [vmem:[#allocation4 + $0x128] sm:$0xff]
    %v461 = vld [vmem:[#allocation4 + $0x130] sm:$0xff]
    %v462 = vld [vmem:[#allocation4 + $0x138] sm:$0xff]
    %v463 = vld [vmem:[#allocation4 + $0x140] sm:$0xff]
    %v464 = vld [vmem:[#allocation4 + $0x148] sm:$0xff]
    %v465 = vld [vmem:[#allocation4 + $0x150] sm:$0xff]
    %v466 = vld [vmem:[#allocation4 + $0x158] sm:$0xff]
    %v467 = vld [vmem:[#allocation4 + $0x160] sm:$0xff]
    %v468 = vld [vmem:[#allocation4 + $0x168] sm:$0xff]
    %v469 = vld [vmem:[#allocation4 + $0x170] sm:$0xff]
    %v470 = vld [vmem:[#allocation4 + $0x178] sm:$0xff]
    %v471 = vld [vmem:[#allocation4 + $0x180] sm:$0xff]
    %v472 = vld [vmem:[#allocation4 + $0x188] sm:$0xff]
    %v473 = vld [vmem:[#allocation4 + $0x190] sm:$0xff]
    %v474 = vld [vmem:[#allocation4 + $0x198] sm:$0xff]
    %v475 = vld [vmem:[#allocation4 + $0x1a0] sm:$0xff]
    %v476 = vld [vmem:[#allocation4 + $0x1a8] sm:$0xff]
    %v477 = vld [vmem:[#allocation4 + $0x1b0] sm:$0xff]
    %v478 = vld [vmem:[#allocation4 + $0x1b8] sm:$0xff]
    %v479 = vld [vmem:[#allocation4 + $0x1c0] sm:$0xff]
    %v480 = vld [vmem:[#allocation4 + $0x1c8] sm:$0xff]
    %v481 = vld [vmem:[#allocation4 + $0x1d0] sm:$0xff]
    %v482 = vld [vmem:[#allocation4 + $0x1d8] sm:$0xff]
    %v483 = vld [vmem:[#allocation4 + $0x1e0] sm:$0xff]
    %v484 = vld [vmem:[#allocation4 + $0x1e8] sm:$0xff]
    %v485 = vld [vmem:[#allocation4 + $0x1f0] sm:$0xff]
    %v486 = vld [vmem:[#allocation4 + $0x1f8] sm:$0xff]
    %v487 = vld [vmem:[#allocation4 + $0x200] sm:$0xff]
    %v488 = vld [vmem:[#allocation4 + $0x208] sm:$0xff]
    %v489 = vld [vmem:[#allocation4 + $0x210] sm:$0xff]
    %v490 = vld [vmem:[#allocation4 + $0x218] sm:$0xff]
    %v491 = vld [vmem:[#allocation4 + $0x220] sm:$0xff]
    %v492 = vld [vmem:[#allocation4 + $0x228] sm:$0xff]
    %v493 = vld [vmem:[#allocation4 + $0x230] sm:$0xff]
    %v494 = vld [vmem:[#allocation4 + $0x238] sm:$0xff]
    %v495 = vld [vmem:[#allocation4 + $0x240] sm:$0xff]
    %v496 = vld [vmem:[#allocation4 + $0x248] sm:$0xff]
    %v497 = vld [vmem:[#allocation4 + $0x250] sm:$0xff]
    %v498 = vld [vmem:[#allocation4 + $0x258] sm:$0xff]
    %v499 = vld [vmem:[#allocation4 + $0x260] sm:$0xff]
    %v500 = vld [vmem:[#allocation4 + $0x268] sm:$0xff]
    %v501 = vld [vmem:[#allocation4 + $0x270] sm:$0xff]
    %v502 = vld [vmem:[#allocation4 + $0x278] sm:$0xff]
    %v503 = vld [vmem:[#allocation4 + $0x280] sm:$0xff]
    %v504 = vld [vmem:[#allocation4 + $0x288] sm:$0xff]
    %v505 = vld [vmem:[#allocation4 + $0x290] sm:$0xff]
    %v506 = vld [vmem:[#allocation4 + $0x298] sm:$0xff]
    %v507 = vld [vmem:[#allocation4 + $0x2a0] sm:$0xff]
    %v508 = vld [vmem:[#allocation4 + $0x2a8] sm:$0xff]
    %v509 = vld [vmem:[#allocation4 + $0x2b0] sm:$0xff]
    %v510 = vld [vmem:[#allocation4 + $0x2b8] sm:$0xff]
    %v511 = vld [vmem:[#allocation4 + $0x2c0] sm:$0xff]
    %v512 = vld [vmem:[#allocation4 + $0x2c8] sm:$0xff]
    %v513 = vld [vmem:[#allocation4 + $0x2d0] sm:$0xff]
    %v514 = vld [vmem:[#allocation4 + $0x2d8] sm:$0xff]
    %v515 = vld [vmem:[#allocation4 + $0x2e0] sm:$0xff]
    %v516 = vld [vmem:[#allocation4 + $0x2e8] sm:$0xff]
    %v517 = vld [vmem:[#allocation4 + $0x2f0] sm:$0xff]
    %v518 = vld [vmem:[#allocation4 + $0x2f8] sm:$0xff]
    %v519 = vld [vmem:[#allocation7] sm:$0xff]
    %v521 = vlaneseq
    %v522 = vshrl.u32 %v521, 7
    %v523 = vsub.s32 0, %v522
    %v524 = vrot.slane %v519, %v523
    %v525 = vlaneseq
    %v526 = vshrl.u32 %v525, 7
    %v527 = vsub.s32 1, %v526
    %v528 = vrot.slane %v519, %v527
    %v529 = vlaneseq
    %v530 = vshrl.u32 %v529, 7
    %v531 = vsub.s32 2, %v530
    %v532 = vrot.slane %v519, %v531
    %v533 = vlaneseq
    %v534 = vshrl.u32 %v533, 7
    %v535 = vsub.s32 3, %v534
    %v536 = vrot.slane %v519, %v535
    %v537 = vlaneseq
    %v538 = vshrl.u32 %v537, 7
    %v539 = vsub.s32 4, %v538
    %v540 = vrot.slane %v519, %v539
    %v541 = vlaneseq
    %v542 = vshrl.u32 %v541, 7
    %v543 = vsub.s32 5, %v542
    %v544 = vrot.slane %v519, %v543
    %v545 = vlaneseq
    %v546 = vshrl.u32 %v545, 7
    %v547 = vsub.s32 6, %v546
    %v548 = vrot.slane %v519, %v547
    %v549 = vlaneseq
    %v550 = vshrl.u32 %v549, 7
    %v551 = vsub.s32 7, %v550
    %v552 = vrot.slane %v519, %v551
    %v657 = vunpack.c.l.b16 %v423
    %v658 = vunpack.c.h.b16 %v423
    %v659 = vunpack.c.l.b16 %v424
    %v660 = vunpack.c.h.b16 %v424
    %v661 = vunpack.c.l.b16 %v425
    %v662 = vunpack.c.h.b16 %v425
    %v663 = vunpack.c.l.b16 %v426
    %v664 = vunpack.c.h.b16 %v426
    %v665 = vunpack.c.l.b16 %v427
    %v666 = vunpack.c.h.b16 %v427
    %v667 = vunpack.c.l.b16 %v428
    %v668 = vunpack.c.h.b16 %v428
    %v669 = vunpack.c.l.b16 %v429
    %v670 = vunpack.c.h.b16 %v429
    %v671 = vunpack.c.l.b16 %v430
    %v672 = vunpack.c.h.b16 %v430
    %v673 = vunpack.c.l.b16 %v431
    %v674 = vunpack.c.h.b16 %v431
    %v675 = vunpack.c.l.b16 %v432
    %v676 = vunpack.c.h.b16 %v432
    %v677 = vunpack.c.l.b16 %v433
    %v678 = vunpack.c.h.b16 %v433
    %v679 = vunpack.c.l.b16 %v434
    %v680 = vunpack.c.h.b16 %v434
    %v681 = vunpack.c.l.b16 %v435
    %v682 = vunpack.c.h.b16 %v435
    %v683 = vunpack.c.l.b16 %v436
    %v684 = vunpack.c.h.b16 %v436
    %v685 = vunpack.c.l.b16 %v437
    %v686 = vunpack.c.h.b16 %v437
    %v687 = vunpack.c.l.b16 %v438
    %v688 = vunpack.c.h.b16 %v438
    %v689 = vunpack.c.l.b16 %v439
    %v690 = vunpack.c.h.b16 %v439
    %v691 = vunpack.c.l.b16 %v440
    %v692 = vunpack.c.h.b16 %v440
    %v693 = vunpack.c.l.b16 %v441
    %v694 = vunpack.c.h.b16 %v441
    %v695 = vunpack.c.l.b16 %v442
    %v696 = vunpack.c.h.b16 %v442
    %v697 = vunpack.c.l.b16 %v443
    %v698 = vunpack.c.h.b16 %v443
    %v699 = vunpack.c.l.b16 %v444
    %v700 = vunpack.c.h.b16 %v444
    %v701 = vunpack.c.l.b16 %v445
    %v702 = vunpack.c.h.b16 %v445
    %v703 = vunpack.c.l.b16 %v446
    %v704 = vunpack.c.h.b16 %v446
    %v705 = vunpack.c.l.b16 %v447
    %v706 = vunpack.c.h.b16 %v447
    %v707 = vunpack.c.l.b16 %v448
    %v708 = vunpack.c.h.b16 %v448
    %v709 = vunpack.c.l.b16 %v449
    %v710 = vunpack.c.h.b16 %v449
    %v711 = vunpack.c.l.b16 %v450
    %v712 = vunpack.c.h.b16 %v450
    %v713 = vunpack.c.l.b16 %v451
    %v714 = vunpack.c.h.b16 %v451
    %v715 = vunpack.c.l.b16 %v452
    %v716 = vunpack.c.h.b16 %v452
    %v717 = vunpack.c.l.b16 %v453
    %v718 = vunpack.c.h.b16 %v453
    %v719 = vunpack.c.l.b16 %v454
    %v720 = vunpack.c.h.b16 %v454
    %v721 = vunpack.c.l.b16 %v455
    %v722 = vunpack.c.h.b16 %v455
    %v723 = vunpack.c.l.b16 %v456
    %v724 = vunpack.c.h.b16 %v456
    %v725 = vunpack.c.l.b16 %v457
    %v726 = vunpack.c.h.b16 %v457
    %v727 = vunpack.c.l.b16 %v458
    %v728 = vunpack.c.h.b16 %v458
    %v729 = vunpack.c.l.b16 %v459
    %v730 = vunpack.c.h.b16 %v459
    %v731 = vunpack.c.l.b16 %v460
    %v732 = vunpack.c.h.b16 %v460
    %v733 = vunpack.c.l.b16 %v461
    %v734 = vunpack.c.h.b16 %v461
    %v735 = vunpack.c.l.b16 %v462
    %v736 = vunpack.c.h.b16 %v462
    %v737 = vunpack.c.l.b16 %v463
    %v738 = vunpack.c.h.b16 %v463
    %v739 = vunpack.c.l.b16 %v464
    %v740 = vunpack.c.h.b16 %v464
    %v741 = vunpack.c.l.b16 %v465
    %v742 = vunpack.c.h.b16 %v465
    %v743 = vunpack.c.l.b16 %v466
    %v744 = vunpack.c.h.b16 %v466
    %v745 = vunpack.c.l.b16 %v467
    %v746 = vunpack.c.h.b16 %v467
    %v747 = vunpack.c.l.b16 %v468
    %v748 = vunpack.c.h.b16 %v468
    %v749 = vunpack.c.l.b16 %v469
    %v750 = vunpack.c.h.b16 %v469
    %v751 = vunpack.c.l.b16 %v470
    %v752 = vunpack.c.h.b16 %v470
    %v753 = vunpack.c.l.b16 %v471
    %v754 = vunpack.c.h.b16 %v471
    %v755 = vunpack.c.l.b16 %v472
    %v756 = vunpack.c.h.b16 %v472
    %v757 = vunpack.c.l.b16 %v473
    %v758 = vunpack.c.h.b16 %v473
    %v759 = vunpack.c.l.b16 %v474
    %v760 = vunpack.c.h.b16 %v474
    %v761 = vunpack.c.l.b16 %v475
    %v762 = vunpack.c.h.b16 %v475
    %v763 = vunpack.c.l.b16 %v476
    %v764 = vunpack.c.h.b16 %v476
    %v765 = vunpack.c.l.b16 %v477
    %v766 = vunpack.c.h.b16 %v477
    %v767 = vunpack.c.l.b16 %v478
    %v768 = vunpack.c.h.b16 %v478
    %v769 = vunpack.c.l.b16 %v479
    %v770 = vunpack.c.h.b16 %v479
    %v771 = vunpack.c.l.b16 %v480
    %v772 = vunpack.c.h.b16 %v480
    %v773 = vunpack.c.l.b16 %v481
    %v774 = vunpack.c.h.b16 %v481
    %v775 = vunpack.c.l.b16 %v482
    %v776 = vunpack.c.h.b16 %v482
    %v777 = vunpack.c.l.b16 %v483
    %v778 = vunpack.c.h.b16 %v483
    %v779 = vunpack.c.l.b16 %v484
    %v780 = vunpack.c.h.b16 %v484
    %v781 = vunpack.c.l.b16 %v485
    %v782 = vunpack.c.h.b16 %v485
    %v783 = vunpack.c.l.b16 %v486
    %v784 = vunpack.c.h.b16 %v486
    %v785 = vunpack.c.l.b16 %v487
    %v786 = vunpack.c.h.b16 %v487
    %v787 = vunpack.c.l.b16 %v488
    %v788 = vunpack.c.h.b16 %v488
    %v789 = vunpack.c.l.b16 %v489
    %v790 = vunpack.c.h.b16 %v489
    %v791 = vunpack.c.l.b16 %v490
    %v792 = vunpack.c.h.b16 %v490
    %v793 = vunpack.c.l.b16 %v491
    %v794 = vunpack.c.h.b16 %v491
    %v795 = vunpack.c.l.b16 %v492
    %v796 = vunpack.c.h.b16 %v492
    %v797 = vunpack.c.l.b16 %v493
    %v798 = vunpack.c.h.b16 %v493
    %v799 = vunpack.c.l.b16 %v494
    %v800 = vunpack.c.h.b16 %v494
    %v801 = vunpack.c.l.b16 %v495
    %v802 = vunpack.c.h.b16 %v495
    %v803 = vunpack.c.l.b16 %v496
    %v804 = vunpack.c.h.b16 %v496
    %v805 = vunpack.c.l.b16 %v497
    %v806 = vunpack.c.h.b16 %v497
    %v807 = vunpack.c.l.b16 %v498
    %v808 = vunpack.c.h.b16 %v498
    %v809 = vunpack.c.l.b16 %v499
    %v810 = vunpack.c.h.b16 %v499
    %v811 = vunpack.c.l.b16 %v500
    %v812 = vunpack.c.h.b16 %v500
    %v813 = vunpack.c.l.b16 %v501
    %v814 = vunpack.c.h.b16 %v501
    %v815 = vunpack.c.l.b16 %v502
    %v816 = vunpack.c.h.b16 %v502
    %v817 = vunpack.c.l.b16 %v503
    %v818 = vunpack.c.h.b16 %v503
    %v819 = vunpack.c.l.b16 %v504
    %v820 = vunpack.c.h.b16 %v504
    %v821 = vunpack.c.l.b16 %v505
    %v822 = vunpack.c.h.b16 %v505
    %v823 = vunpack.c.l.b16 %v506
    %v824 = vunpack.c.h.b16 %v506
    %v825 = vunpack.c.l.b16 %v507
    %v826 = vunpack.c.h.b16 %v507
    %v827 = vunpack.c.l.b16 %v508
    %v828 = vunpack.c.h.b16 %v508
    %v829 = vunpack.c.l.b16 %v509
    %v830 = vunpack.c.h.b16 %v509
    %v831 = vunpack.c.l.b16 %v510
    %v832 = vunpack.c.h.b16 %v510
    %v833 = vunpack.c.l.b16 %v511
    %v834 = vunpack.c.h.b16 %v511
    %v835 = vunpack.c.l.b16 %v512
    %v836 = vunpack.c.h.b16 %v512
    %v837 = vunpack.c.l.b16 %v513
    %v838 = vunpack.c.h.b16 %v513
    %v839 = vunpack.c.l.b16 %v514
    %v840 = vunpack.c.h.b16 %v514
    %v841 = vunpack.c.l.b16 %v515
    %v842 = vunpack.c.h.b16 %v515
    %v843 = vunpack.c.l.b16 %v516
    %v844 = vunpack.c.h.b16 %v516
    %v845 = vunpack.c.l.b16 %v517
    %v846 = vunpack.c.h.b16 %v517
    %v847 = vunpack.c.l.b16 %v518
    %v848 = vunpack.c.h.b16 %v518
    %v849 = vpack.c.b16 %v665, %v657
    %v850 = vpack.c.b16 %v666, %v658
    %v851 = vpack.c.b16 %v667, %v659
    %v852 = vpack.c.b16 %v668, %v660
    %v853 = vpack.c.b16 %v669, %v661
    %v854 = vpack.c.b16 %v670, %v662
    %v855 = vpack.c.b16 %v671, %v663
    %v856 = vpack.c.b16 %v672, %v664
    %v857 = vpack.c.b16 %v681, %v673
    %v858 = vpack.c.b16 %v682, %v674
    %v859 = vpack.c.b16 %v683, %v675
    %v860 = vpack.c.b16 %v684, %v676
    %v861 = vpack.c.b16 %v685, %v677
    %v862 = vpack.c.b16 %v686, %v678
    %v863 = vpack.c.b16 %v687, %v679
    %v864 = vpack.c.b16 %v688, %v680
    %v865 = vpack.c.b16 %v697, %v689
    %v866 = vpack.c.b16 %v698, %v690
    %v867 = vpack.c.b16 %v699, %v691
    %v868 = vpack.c.b16 %v700, %v692
    %v869 = vpack.c.b16 %v701, %v693
    %v870 = vpack.c.b16 %v702, %v694
    %v871 = vpack.c.b16 %v703, %v695
    %v872 = vpack.c.b16 %v704, %v696
    %v873 = vpack.c.b16 %v713, %v705
    %v874 = vpack.c.b16 %v714, %v706
    %v875 = vpack.c.b16 %v715, %v707
    %v876 = vpack.c.b16 %v716, %v708
    %v877 = vpack.c.b16 %v717, %v709
    %v878 = vpack.c.b16 %v718, %v710
    %v879 = vpack.c.b16 %v719, %v711
    %v880 = vpack.c.b16 %v720, %v712
    %v881 = vpack.c.b16 %v729, %v721
    %v882 = vpack.c.b16 %v730, %v722
    %v883 = vpack.c.b16 %v731, %v723
    %v884 = vpack.c.b16 %v732, %v724
    %v885 = vpack.c.b16 %v733, %v725
    %v886 = vpack.c.b16 %v734, %v726
    %v887 = vpack.c.b16 %v735, %v727
    %v888 = vpack.c.b16 %v736, %v728
    %v889 = vpack.c.b16 %v745, %v737
    %v890 = vpack.c.b16 %v746, %v738
    %v891 = vpack.c.b16 %v747, %v739
    %v892 = vpack.c.b16 %v748, %v740
    %v893 = vpack.c.b16 %v749, %v741
    %v894 = vpack.c.b16 %v750, %v742
    %v895 = vpack.c.b16 %v751, %v743
    %v896 = vpack.c.b16 %v752, %v744
    %v897 = vpack.c.b16 %v761, %v753
    %v898 = vpack.c.b16 %v762, %v754
    %v899 = vpack.c.b16 %v763, %v755
    %v900 = vpack.c.b16 %v764, %v756
    %v901 = vpack.c.b16 %v765, %v757
    %v902 = vpack.c.b16 %v766, %v758
    %v903 = vpack.c.b16 %v767, %v759
    %v904 = vpack.c.b16 %v768, %v760
    %v905 = vpack.c.b16 %v777, %v769
    %v906 = vpack.c.b16 %v778, %v770
    %v907 = vpack.c.b16 %v779, %v771
    %v908 = vpack.c.b16 %v780, %v772
    %v909 = vpack.c.b16 %v781, %v773
    %v910 = vpack.c.b16 %v782, %v774
    %v911 = vpack.c.b16 %v783, %v775
    %v912 = vpack.c.b16 %v784, %v776
    %v913 = vpack.c.b16 %v793, %v785
    %v914 = vpack.c.b16 %v794, %v786
    %v915 = vpack.c.b16 %v795, %v787
    %v916 = vpack.c.b16 %v796, %v788
    %v917 = vpack.c.b16 %v797, %v789
    %v918 = vpack.c.b16 %v798, %v790
    %v919 = vpack.c.b16 %v799, %v791
    %v920 = vpack.c.b16 %v800, %v792
    %v921 = vpack.c.b16 %v809, %v801
    %v922 = vpack.c.b16 %v810, %v802
    %v923 = vpack.c.b16 %v811, %v803
    %v924 = vpack.c.b16 %v812, %v804
    %v925 = vpack.c.b16 %v813, %v805
    %v926 = vpack.c.b16 %v814, %v806
    %v927 = vpack.c.b16 %v815, %v807
    %v928 = vpack.c.b16 %v816, %v808
    %v929 = vpack.c.b16 %v825, %v817
    %v930 = vpack.c.b16 %v826, %v818
    %v931 = vpack.c.b16 %v827, %v819
    %v932 = vpack.c.b16 %v828, %v820
    %v933 = vpack.c.b16 %v829, %v821
    %v934 = vpack.c.b16 %v830, %v822
    %v935 = vpack.c.b16 %v831, %v823
    %v936 = vpack.c.b16 %v832, %v824
    %v937 = vpack.c.b16 %v841, %v833
    %v938 = vpack.c.b16 %v842, %v834
    %v939 = vpack.c.b16 %v843, %v835
    %v940 = vpack.c.b16 %v844, %v836
    %v941 = vpack.c.b16 %v845, %v837
    %v942 = vpack.c.b16 %v846, %v838
    %v943 = vpack.c.b16 %v847, %v839
    %v944 = vpack.c.b16 %v848, %v840
    %vm1041 = vcmask 523264
    %v1043 = vsel %vm1041, %v420, 0
    %v1046 = vsel %vm1041, %v422, 0
    %1048 = vmatprep.subr.bf16.mxu0 %v906
    %1049 = vmatpush1.bf16.msra.mxu0 %v905
    %1050 = vmatprep.subr.bf16.mxu0 %v898
    %1051 = vmatpush1.bf16.msra.mxu0 %v897
    %1052 = vmatprep.subr.bf16.mxu0 %v890
    %1053 = vmatpush1.bf16.msra.mxu0 %v889
    %1054 = vmatprep.subr.bf16.mxu0 %v882
    %1055 = vmatpush1.bf16.msra.mxu0 %v881
    %1056 = vmatprep.subr.bf16.mxu0 %v874
    %1057 = vmatpush1.bf16.msra.mxu0 %v873
    %1058 = vmatprep.subr.bf16.mxu0 %v866
    %1059 = vmatpush1.bf16.msra.mxu0 %v865
    %1060 = vmatprep.subr.bf16.mxu0 %v858
    %1061 = vmatpush1.bf16.msra.mxu0 %v857
    %1062 = vmatprep.subr.bf16.mxu0 %v850
    %1063 = vmatpush1.bf16.msra.mxu0 %v849
    %1064 = vmatprep.subr.bf16.mxu0 0
    %1065 = vmatpush2.bf16.msra.mxu0 0
    %1066 = vmatprep.subr.bf16.mxu0 0
    %1067 = vmatpush2.bf16.msra.mxu0 0
    %1068 = vmatprep.subr.bf16.mxu0 0
    %1069 = vmatpush2.bf16.msra.mxu0 0
    %1070 = vmatprep.subr.bf16.mxu0 0
    %1071 = vmatpush2.bf16.msra.mxu0 0
    %1072 = vmatprep.subr.bf16.mxu0 %v938
    %1073 = vmatpush2.bf16.msra.mxu0 %v937
    %1074 = vmatprep.subr.bf16.mxu0 %v930
    %1075 = vmatpush2.bf16.msra.mxu0 %v929
    %1076 = vmatprep.subr.bf16.mxu0 %v922
    %1077 = vmatpush2.bf16.msra.mxu0 %v921
    %1078 = vmatprep.subr.bf16.mxu0 %v914
    %1079 = vmatpush2.bf16.msra.mxu0 %v913
    %1080 = vmatprep.mubr.bf16.mxu0 %v1043
    %1081 = vmatmul.mubr.bf16.gmra.mxu0 %v419
    %v1082 = vpop.f32.mrf.mxu0
    %v1083 = vadd.f32 %v524, %v1082
    %v1084 = vpop.f32.mrf.mxu0
    %v1085 = vadd.f32 %v528, %v1084
    %v1086 = vpop.f32.mrf.mxu0
    %v1087 = vadd.f32 %v524, %v1086
    %v1088 = vpop.f32.mrf.mxu0
    %v1089 = vadd.f32 %v528, %v1088
    %1090 = vmatprep.mubr.bf16.mxu0 %v1046
    %1091 = vmatmul.mubr.bf16.gmra.mxu0 %v421
    %v1092 = vpop.f32.mrf.mxu0
    %v1093 = vadd.f32 %v524, %v1092
    %v1094 = vpop.f32.mrf.mxu0
    %v1095 = vadd.f32 %v528, %v1094
    %v1096 = vpop.f32.mrf.mxu0
    %v1097 = vadd.f32 %v524, %v1096
    %v1098 = vpop.f32.mrf.mxu0
    %v1099 = vadd.f32 %v528, %v1098
    %1100 = vdwg.mxu0
    %1101 = vmatprep.subr.bf16.mxu0 %v908
    %1102 = vmatpush1.bf16.msra.mxu0 %v907
    %1103 = vmatprep.subr.bf16.mxu0 %v900
    %1104 = vmatpush1.bf16.msra.mxu0 %v899
    %1105 = vmatprep.subr.bf16.mxu0 %v892
    %1106 = vmatpush1.bf16.msra.mxu0 %v891
    %1107 = vmatprep.subr.bf16.mxu0 %v884
    %1108 = vmatpush1.bf16.msra.mxu0 %v883
    %1109 = vmatprep.subr.bf16.mxu0 %v876
    %1110 = vmatpush1.bf16.msra.mxu0 %v875
    %1111 = vmatprep.subr.bf16.mxu0 %v868
    %1112 = vmatpush1.bf16.msra.mxu0 %v867
    %1113 = vmatprep.subr.bf16.mxu0 %v860
    %1114 = vmatpush1.bf16.msra.mxu0 %v859
    %1115 = vmatprep.subr.bf16.mxu0 %v852
    %1116 = vmatpush1.bf16.msra.mxu0 %v851
    %1117 = vmatprep.subr.bf16.mxu0 0
    %1118 = vmatpush2.bf16.msra.mxu0 0
    %1119 = vmatprep.subr.bf16.mxu0 0
    %1120 = vmatpush2.bf16.msra.mxu0 0
    %1121 = vmatprep.subr.bf16.mxu0 0
    %1122 = vmatpush2.bf16.msra.mxu0 0
    %1123 = vmatprep.subr.bf16.mxu0 0
    %1124 = vmatpush2.bf16.msra.mxu0 0
    %1125 = vmatprep.subr.bf16.mxu0 %v940
    %1126 = vmatpush2.bf16.msra.mxu0 %v939
    %1127 = vmatprep.subr.bf16.mxu0 %v932
    %1128 = vmatpush2.bf16.msra.mxu0 %v931
    %1129 = vmatprep.subr.bf16.mxu0 %v924
    %1130 = vmatpush2.bf16.msra.mxu0 %v923
    %1131 = vmatprep.subr.bf16.mxu0 %v916
    %1132 = vmatpush2.bf16.msra.mxu0 %v915
    %1133 = vmatprep.mubr.bf16.mxu0 %v1043
    %1134 = vmatmul.mubr.bf16.gmra.mxu0 %v419
    %v1135 = vpop.f32.mrf.mxu0
    %v1136 = vadd.f32 %v532, %v1135
    %v1137 = vpop.f32.mrf.mxu0
    %v1138 = vadd.f32 %v536, %v1137
    %v1139 = vpop.f32.mrf.mxu0
    %v1140 = vadd.f32 %v532, %v1139
    %v1141 = vpop.f32.mrf.mxu0
    %v1142 = vadd.f32 %v536, %v1141
    %1143 = vmatprep.mubr.bf16.mxu0 %v1046
    %1144 = vmatmul.mubr.bf16.gmra.mxu0 %v421
    %v1145 = vpop.f32.mrf.mxu0
    %v1146 = vadd.f32 %v532, %v1145
    %v1147 = vpop.f32.mrf.mxu0
    %v1148 = vadd.f32 %v536, %v1147
    %v1149 = vpop.f32.mrf.mxu0
    %v1150 = vadd.f32 %v532, %v1149
    %v1151 = vpop.f32.mrf.mxu0
    %v1152 = vadd.f32 %v536, %v1151
    %1153 = vdwg.mxu0
    %1154 = vmatprep.subr.bf16.mxu0 %v910
    %1155 = vmatpush1.bf16.msra.mxu0 %v909
    %1156 = vmatprep.subr.bf16.mxu0 %v902
    %1157 = vmatpush1.bf16.msra.mxu0 %v901
    %1158 = vmatprep.subr.bf16.mxu0 %v894
    %1159 = vmatpush1.bf16.msra.mxu0 %v893
    %1160 = vmatprep.subr.bf16.mxu0 %v886
    %1161 = vmatpush1.bf16.msra.mxu0 %v885
    %1162 = vmatprep.subr.bf16.mxu0 %v878
    %1163 = vmatpush1.bf16.msra.mxu0 %v877
    %1164 = vmatprep.subr.bf16.mxu0 %v870
    %1165 = vmatpush1.bf16.msra.mxu0 %v869
    %1166 = vmatprep.subr.bf16.mxu0 %v862
    %1167 = vmatpush1.bf16.msra.mxu0 %v861
    %1168 = vmatprep.subr.bf16.mxu0 %v854
    %1169 = vmatpush1.bf16.msra.mxu0 %v853
    %1170 = vmatprep.subr.bf16.mxu0 0
    %1171 = vmatpush2.bf16.msra.mxu0 0
    %1172 = vmatprep.subr.bf16.mxu0 0
    %1173 = vmatpush2.bf16.msra.mxu0 0
    %1174 = vmatprep.subr.bf16.mxu0 0
    %1175 = vmatpush2.bf16.msra.mxu0 0
    %1176 = vmatprep.subr.bf16.mxu0 0
    %1177 = vmatpush2.bf16.msra.mxu0 0
    %1178 = vmatprep.subr.bf16.mxu0 %v942
    %1179 = vmatpush2.bf16.msra.mxu0 %v941
    %1180 = vmatprep.subr.bf16.mxu0 %v934
    %1181 = vmatpush2.bf16.msra.mxu0 %v933
    %1182 = vmatprep.subr.bf16.mxu0 %v926
    %1183 = vmatpush2.bf16.msra.mxu0 %v925
    %1184 = vmatprep.subr.bf16.mxu0 %v918
    %1185 = vmatpush2.bf16.msra.mxu0 %v917
    %1186 = vmatprep.mubr.bf16.mxu0 %v1043
    %1187 = vmatmul.mubr.bf16.gmra.mxu0 %v419
    %v1188 = vpop.f32.mrf.mxu0
    %v1189 = vadd.f32 %v540, %v1188
    %v1190 = vpop.f32.mrf.mxu0
    %v1191 = vadd.f32 %v544, %v1190
    %v1192 = vpop.f32.mrf.mxu0
    %v1193 = vadd.f32 %v540, %v1192
    %v1194 = vpop.f32.mrf.mxu0
    %v1195 = vadd.f32 %v544, %v1194
    %1196 = vmatprep.mubr.bf16.mxu0 %v1046
    %1197 = vmatmul.mubr.bf16.gmra.mxu0 %v421
    %v1198 = vpop.f32.mrf.mxu0
    %v1199 = vadd.f32 %v540, %v1198
    %v1200 = vpop.f32.mrf.mxu0
    %v1201 = vadd.f32 %v544, %v1200
    %v1202 = vpop.f32.mrf.mxu0
    %v1203 = vadd.f32 %v540, %v1202
    %v1204 = vpop.f32.mrf.mxu0
    %v1205 = vadd.f32 %v544, %v1204
    %1206 = vdwg.mxu0
    %1207 = vmatprep.subr.bf16.mxu0 %v912
    %1208 = vmatpush1.bf16.msra.mxu0 %v911
    %1209 = vmatprep.subr.bf16.mxu0 %v904
    %1210 = vmatpush1.bf16.msra.mxu0 %v903
    %1211 = vmatprep.subr.bf16.mxu0 %v896
    %1212 = vmatpush1.bf16.msra.mxu0 %v895
    %1213 = vmatprep.subr.bf16.mxu0 %v888
    %1214 = vmatpush1.bf16.msra.mxu0 %v887
    %1215 = vmatprep.subr.bf16.mxu0 %v880
    %1216 = vmatpush1.bf16.msra.mxu0 %v879
    %1217 = vmatprep.subr.bf16.mxu0 %v872
    %1218 = vmatpush1.bf16.msra.mxu0 %v871
    %1219 = vmatprep.subr.bf16.mxu0 %v864
    %1220 = vmatpush1.bf16.msra.mxu0 %v863
    %1221 = vmatprep.subr.bf16.mxu0 %v856
    %1222 = vmatpush1.bf16.msra.mxu0 %v855
    %1223 = vmatprep.subr.bf16.mxu0 0
    %1224 = vmatpush2.bf16.msra.mxu0 0
    %1225 = vmatprep.subr.bf16.mxu0 0
    %1226 = vmatpush2.bf16.msra.mxu0 0
    %1227 = vmatprep.subr.bf16.mxu0 0
    %1228 = vmatpush2.bf16.msra.mxu0 0
    %1229 = vmatprep.subr.bf16.mxu0 0
    %1230 = vmatpush2.bf16.msra.mxu0 0
    %1231 = vmatprep.subr.bf16.mxu0 %v944
    %1232 = vmatpush2.bf16.msra.mxu0 %v943
    %1233 = vmatprep.subr.bf16.mxu0 %v936
    %1234 = vmatpush2.bf16.msra.mxu0 %v935
    %1235 = vmatprep.subr.bf16.mxu0 %v928
    %1236 = vmatpush2.bf16.msra.mxu0 %v927
    %1237 = vmatprep.subr.bf16.mxu0 %v920
    %1238 = vmatpush2.bf16.msra.mxu0 %v919
    %1239 = vmatprep.mubr.bf16.mxu0 %v1043
    %1240 = vmatmul.mubr.bf16.gmra.mxu0 %v419
    %v1241 = vpop.f32.mrf.mxu0
    %v1242 = vadd.f32 %v548, %v1241
    %v1243 = vpop.f32.mrf.mxu0
    %v1244 = vadd.f32 %v552, %v1243
    %v1245 = vpop.f32.mrf.mxu0
    %v1246 = vadd.f32 %v548, %v1245
    %v1247 = vpop.f32.mrf.mxu0
    %v1248 = vadd.f32 %v552, %v1247
    %1249 = vmatprep.mubr.bf16.mxu0 %v1046
    %1250 = vmatmul.mubr.bf16.gmra.mxu0 %v421
    %v1251 = vpop.f32.mrf.mxu0
    %v1252 = vadd.f32 %v548, %v1251
    %v1253 = vpop.f32.mrf.mxu0
    %v1254 = vadd.f32 %v552, %v1253
    %v1255 = vpop.f32.mrf.mxu0
    %v1256 = vadd.f32 %v548, %v1255
    %v1257 = vpop.f32.mrf.mxu0
    %v1258 = vadd.f32 %v552, %v1257
    %1259 = vdwg.mxu0
    %v1260 = vmax.f32 %v1083, 0.0
    %v1261 = vmax.f32 %v1085, 0.0
    %v1262 = vmax.f32 %v1136, 0.0
    %v1263 = vmax.f32 %v1138, 0.0
    %v1264 = vmax.f32 %v1189, 0.0
    %v1265 = vmax.f32 %v1191, 0.0
    %v1266 = vmax.f32 %v1242, 0.0
    %v1267 = vmax.f32 %v1244, 0.0
    %v1268 = vmax.f32 %v1087, 0.0
    %v1269 = vmax.f32 %v1089, 0.0
    %v1270 = vmax.f32 %v1140, 0.0
    %v1271 = vmax.f32 %v1142, 0.0
    %v1272 = vmax.f32 %v1193, 0.0
    %v1273 = vmax.f32 %v1195, 0.0
    %v1274 = vmax.f32 %v1246, 0.0
    %v1275 = vmax.f32 %v1248, 0.0
    %v1276 = vmax.f32 %v1093, 0.0
    %v1277 = vmax.f32 %v1095, 0.0
    %v1278 = vmax.f32 %v1146, 0.0
    %v1279 = vmax.f32 %v1148, 0.0
    %v1280 = vmax.f32 %v1199, 0.0
    %v1281 = vmax.f32 %v1201, 0.0
    %v1282 = vmax.f32 %v1252, 0.0
    %v1283 = vmax.f32 %v1254, 0.0
    %v1284 = vmax.f32 %v1097, 0.0
    %v1285 = vmax.f32 %v1099, 0.0
    %v1286 = vmax.f32 %v1150, 0.0
    %v1287 = vmax.f32 %v1152, 0.0
    %v1288 = vmax.f32 %v1203, 0.0
    %v1289 = vmax.f32 %v1205, 0.0
    %v1290 = vmax.f32 %v1256, 0.0
    %v1291 = vmax.f32 %v1258, 0.0
    %v1292 = vld [vmem:[%s4] sm:$0xff]
    %v1293 = vld [vmem:[%s4 + $0x8] sm:$0xff]
    %v1294 = vld [vmem:[%s4 + $0x10] sm:$0xff]
    %v1295 = vld [vmem:[%s4 + $0x18] sm:$0xff]
    %v1296 = vld [vmem:[%s4 + $0x20] sm:$0xff]
    %v1297 = vld [vmem:[%s4 + $0x28] sm:$0xff]
    %v1298 = vld [vmem:[%s4 + $0x30] sm:$0xff]
    %v1299 = vld [vmem:[%s4 + $0x38] sm:$0xff]
    %v1300 = vld [vmem:[%s4 + $0x40] sm:$0xff]
    %v1301 = vld [vmem:[%s4 + $0x48] sm:$0xff]
    %v1302 = vld [vmem:[%s4 + $0x50] sm:$0xff]
    %v1303 = vld [vmem:[%s4 + $0x58] sm:$0xff]
    %v1304 = vld [vmem:[%s4 + $0x60] sm:$0xff]
    %v1305 = vld [vmem:[%s4 + $0x68] sm:$0xff]
    %v1306 = vld [vmem:[%s4 + $0x70] sm:$0xff]
    %v1307 = vld [vmem:[%s4 + $0x78] sm:$0xff]
    %v1308 = vmul.f32 %v1260, %v1292
    %v1309 = vmul.f32 %v1261, %v1293
    %v1310 = vmul.f32 %v1262, %v1294
    %v1311 = vmul.f32 %v1263, %v1295
    %v1312 = vmul.f32 %v1264, %v1296
    %v1313 = vmul.f32 %v1265, %v1297
    %v1314 = vmul.f32 %v1266, %v1298
    %v1315 = vmul.f32 %v1267, %v1299
    %v1316 = vmul.f32 %v1268, %v1300
    %v1317 = vmul.f32 %v1269, %v1301
    %v1318 = vmul.f32 %v1270, %v1302
    %v1319 = vmul.f32 %v1271, %v1303
    %v1320 = vmul.f32 %v1272, %v1304
    %v1321 = vmul.f32 %v1273, %v1305
    %v1322 = vmul.f32 %v1274, %v1306
    %v1323 = vmul.f32 %v1275, %v1307
    %v1324 = vmul.f32 %v1276, %v1292
    %v1325 = vmul.f32 %v1277, %v1293
    %v1326 = vmul.f32 %v1278, %v1294
    %v1327 = vmul.f32 %v1279, %v1295
    %v1328 = vmul.f32 %v1280, %v1296
    %v1329 = vmul.f32 %v1281, %v1297
    %v1330 = vmul.f32 %v1282, %v1298
    %v1331 = vmul.f32 %v1283, %v1299
    %v1332 = vmul.f32 %v1284, %v1300
    %v1333 = vmul.f32 %v1285, %v1301
    %v1334 = vmul.f32 %v1286, %v1302
    %v1335 = vmul.f32 %v1287, %v1303
    %v1336 = vmul.f32 %v1288, %v1304
    %v1337 = vmul.f32 %v1289, %v1305
    %v1338 = vmul.f32 %v1290, %v1306
    %v1339 = vmul.f32 %v1291, %v1307
    %v1340 = vmax.f32 %v1308, %v1316
    %v1341 = vrot.slane %v1340, 4
    %v1342 = vmax.f32 %v1340, %v1341
    %v1343 = vrot.slane %v1342, 2
    %v1344 = vmax.f32 %v1342, %v1343
    %v1345 = vrot.slane %v1344, 1
    %v1346 = vmax.f32 %v1344, %v1345
    %v1347 = vmax.f32 %v1309, %v1317
    %v1348 = vrot.slane %v1347, 4
    %v1349 = vmax.f32 %v1347, %v1348
    %v1350 = vrot.slane %v1349, 2
    %v1351 = vmax.f32 %v1349, %v1350
    %v1352 = vrot.slane %v1351, 1
    %v1353 = vmax.f32 %v1351, %v1352
    %v1354 = vmax.f32 %v1310, %v1318
    %v1355 = vrot.slane %v1354, 4
    %v1356 = vmax.f32 %v1354, %v1355
    %v1357 = vrot.slane %v1356, 2
    %v1358 = vmax.f32 %v1356, %v1357
    %v1359 = vrot.slane %v1358, 1
    %v1360 = vmax.f32 %v1358, %v1359
    %v1361 = vmax.f32 %v1311, %v1319
    %v1362 = vrot.slane %v1361, 4
    %v1363 = vmax.f32 %v1361, %v1362
    %v1364 = vrot.slane %v1363, 2
    %v1365 = vmax.f32 %v1363, %v1364
    %v1366 = vrot.slane %v1365, 1
    %v1367 = vmax.f32 %v1365, %v1366
    %v1368 = vmax.f32 %v1312, %v1320
    %v1369 = vrot.slane %v1368, 4
    %v1370 = vmax.f32 %v1368, %v1369
    %v1371 = vrot.slane %v1370, 2
    %v1372 = vmax.f32 %v1370, %v1371
    %v1373 = vrot.slane %v1372, 1
    %v1374 = vmax.f32 %v1372, %v1373
    %v1375 = vmax.f32 %v1313, %v1321
    %v1376 = vrot.slane %v1375, 4
    %v1377 = vmax.f32 %v1375, %v1376
    %v1378 = vrot.slane %v1377, 2
    %v1379 = vmax.f32 %v1377, %v1378
    %v1380 = vrot.slane %v1379, 1
    %v1381 = vmax.f32 %v1379, %v1380
    %v1382 = vmax.f32 %v1314, %v1322
    %v1383 = vrot.slane %v1382, 4
    %v1384 = vmax.f32 %v1382, %v1383
    %v1385 = vrot.slane %v1384, 2
    %v1386 = vmax.f32 %v1384, %v1385
    %v1387 = vrot.slane %v1386, 1
    %v1388 = vmax.f32 %v1386, %v1387
    %v1389 = vmax.f32 %v1315, %v1323
    %v1390 = vrot.slane %v1389, 4
    %v1391 = vmax.f32 %v1389, %v1390
    %v1392 = vrot.slane %v1391, 2
    %v1393 = vmax.f32 %v1391, %v1392
    %v1394 = vrot.slane %v1393, 1
    %v1395 = vmax.f32 %v1393, %v1394
    %v1396 = vmax.f32 %v1324, %v1332
    %v1397 = vrot.slane %v1396, 4
    %v1398 = vmax.f32 %v1396, %v1397
    %v1399 = vrot.slane %v1398, 2
    %v1400 = vmax.f32 %v1398, %v1399
    %v1401 = vrot.slane %v1400, 1
    %v1402 = vmax.f32 %v1400, %v1401
    %v1403 = vmax.f32 %v1325, %v1333
    %v1404 = vrot.slane %v1403, 4
    %v1405 = vmax.f32 %v1403, %v1404
    %v1406 = vrot.slane %v1405, 2
    %v1407 = vmax.f32 %v1405, %v1406
    %v1408 = vrot.slane %v1407, 1
    %v1409 = vmax.f32 %v1407, %v1408
    %v1410 = vmax.f32 %v1326, %v1334
    %v1411 = vrot.slane %v1410, 4
    %v1412 = vmax.f32 %v1410, %v1411
    %v1413 = vrot.slane %v1412, 2
    %v1414 = vmax.f32 %v1412, %v1413
    %v1415 = vrot.slane %v1414, 1
    %v1416 = vmax.f32 %v1414, %v1415
    %v1417 = vmax.f32 %v1327, %v1335
    %v1418 = vrot.slane %v1417, 4
    %v1419 = vmax.f32 %v1417, %v1418
    %v1420 = vrot.slane %v1419, 2
    %v1421 = vmax.f32 %v1419, %v1420
    %v1422 = vrot.slane %v1421, 1
    %v1423 = vmax.f32 %v1421, %v1422
    %v1424 = vmax.f32 %v1328, %v1336
    %v1425 = vrot.slane %v1424, 4
    %v1426 = vmax.f32 %v1424, %v1425
    %v1427 = vrot.slane %v1426, 2
    %v1428 = vmax.f32 %v1426, %v1427
    %v1429 = vrot.slane %v1428, 1
    %v1430 = vmax.f32 %v1428, %v1429
    %v1431 = vmax.f32 %v1329, %v1337
    %v1432 = vrot.slane %v1431, 4
    %v1433 = vmax.f32 %v1431, %v1432
    %v1434 = vrot.slane %v1433, 2
    %v1435 = vmax.f32 %v1433, %v1434
    %v1436 = vrot.slane %v1435, 1
    %v1437 = vmax.f32 %v1435, %v1436
    %v1438 = vmax.f32 %v1330, %v1338
    %v1439 = vrot.slane %v1438, 4
    %v1440 = vmax.f32 %v1438, %v1439
    %v1441 = vrot.slane %v1440, 2
    %v1442 = vmax.f32 %v1440, %v1441
    %v1443 = vrot.slane %v1442, 1
    %v1444 = vmax.f32 %v1442, %v1443
    %v1445 = vmax.f32 %v1331, %v1339
    %v1446 = vrot.slane %v1445, 4
    %v1447 = vmax.f32 %v1445, %v1446
    %v1448 = vrot.slane %v1447, 2
    %v1449 = vmax.f32 %v1447, %v1448
    %v1450 = vrot.slane %v1449, 1
    %v1451 = vmax.f32 %v1449, %v1450
    %v1452 = vpack.c.bf16 %v1346, %v1346
    %v1453 = vpack.c.bf16 %v1353, %v1353
    %v1454 = vpack.c.bf16 %v1360, %v1360
    %v1455 = vpack.c.bf16 %v1367, %v1367
    %v1456 = vpack.c.bf16 %v1374, %v1374
    %v1457 = vpack.c.bf16 %v1381, %v1381
    %v1458 = vpack.c.bf16 %v1388, %v1388
    %v1459 = vpack.c.bf16 %v1395, %v1395
    %v1460 = vpack.c.bf16 %v1402, %v1402
    %v1461 = vpack.c.bf16 %v1409, %v1409
    %v1462 = vpack.c.bf16 %v1416, %v1416
    %v1463 = vpack.c.bf16 %v1423, %v1423
    %v1464 = vpack.c.bf16 %v1430, %v1430
    %v1465 = vpack.c.bf16 %v1437, %v1437
    %v1466 = vpack.c.bf16 %v1444, %v1444
    %v1467 = vpack.c.bf16 %v1451, %v1451
    %v1468 = vld [vmem:[#allocation9] sm:$0xff]
    %v1469 = vld [vmem:[#allocation9 + $0x8] sm:$0xff]
    %v1470 = vld [vmem:[#allocation9 + $0x10] sm:$0xff]
    %v1471 = vld [vmem:[#allocation9 + $0x18] sm:$0xff]
    %v1472 = vld [vmem:[#allocation9 + $0x20] sm:$0xff]
    %v1473 = vld [vmem:[#allocation9 + $0x28] sm:$0xff]
    %v1474 = vld [vmem:[#allocation9 + $0x30] sm:$0xff]
    %v1475 = vld [vmem:[#allocation9 + $0x38] sm:$0xff]
    %v1476 = vld [vmem:[#allocation9 + $0x40] sm:$0xff]
    %v1477 = vld [vmem:[#allocation9 + $0x48] sm:$0xff]
    %v1478 = vld [vmem:[#allocation9 + $0x50] sm:$0xff]
    %v1479 = vld [vmem:[#allocation9 + $0x58] sm:$0xff]
    %v1480 = vld [vmem:[#allocation9 + $0x60] sm:$0xff]
    %v1481 = vld [vmem:[#allocation9 + $0x68] sm:$0xff]
    %v1482 = vld [vmem:[#allocation9 + $0x70] sm:$0xff]
    %v1483 = vld [vmem:[#allocation9 + $0x78] sm:$0xff]
    %v1484 = vld [vmem:[#allocation9 + $0x80] sm:$0xff]
    %v1485 = vld [vmem:[#allocation9 + $0x88] sm:$0xff]
    %v1486 = vld [vmem:[#allocation9 + $0x90] sm:$0xff]
    %v1487 = vld [vmem:[#allocation9 + $0x98] sm:$0xff]
    %v1488 = vld [vmem:[#allocation9 + $0xa0] sm:$0xff]
    %v1489 = vld [vmem:[#allocation9 + $0xa8] sm:$0xff]
    %v1490 = vld [vmem:[#allocation9 + $0xb0] sm:$0xff]
    %v1491 = vld [vmem:[#allocation9 + $0xb8] sm:$0xff]
    %v1492 = vld [vmem:[#allocation9 + $0xc0] sm:$0xff]
    %v1493 = vld [vmem:[#allocation9 + $0xc8] sm:$0xff]
    %v1494 = vld [vmem:[#allocation9 + $0xd0] sm:$0xff]
    %v1495 = vld [vmem:[#allocation9 + $0xd8] sm:$0xff]
    %v1496 = vld [vmem:[#allocation9 + $0xe0] sm:$0xff]
    %v1497 = vld [vmem:[#allocation9 + $0xe8] sm:$0xff]
    %v1498 = vld [vmem:[#allocation9 + $0xf0] sm:$0xff]
    %v1499 = vld [vmem:[#allocation9 + $0xf8] sm:$0xff]
    %v1500 = vld [vmem:[#allocation9 + $0x100] sm:$0xff]
    %v1501 = vld [vmem:[#allocation9 + $0x108] sm:$0xff]
    %v1502 = vld [vmem:[#allocation9 + $0x110] sm:$0xff]
    %v1503 = vld [vmem:[#allocation9 + $0x118] sm:$0xff]
    %v1504 = vld [vmem:[#allocation9 + $0x120] sm:$0xff]
    %v1505 = vld [vmem:[#allocation9 + $0x128] sm:$0xff]
    %v1506 = vld [vmem:[#allocation9 + $0x130] sm:$0xff]
    %v1507 = vld [vmem:[#allocation9 + $0x138] sm:$0xff]
    %v1508 = vld [vmem:[#allocation9 + $0x140] sm:$0xff]
    %v1509 = vld [vmem:[#allocation9 + $0x148] sm:$0xff]
    %v1510 = vld [vmem:[#allocation9 + $0x150] sm:$0xff]
    %v1511 = vld [vmem:[#allocation9 + $0x158] sm:$0xff]
    %v1512 = vld [vmem:[#allocation9 + $0x160] sm:$0xff]
    %v1513 = vld [vmem:[#allocation9 + $0x168] sm:$0xff]
    %v1514 = vld [vmem:[#allocation9 + $0x170] sm:$0xff]
    %v1515 = vld [vmem:[#allocation9 + $0x178] sm:$0xff]
    %v1516 = vld [vmem:[#allocation9 + $0x180] sm:$0xff]
    %v1517 = vld [vmem:[#allocation9 + $0x188] sm:$0xff]
    %v1518 = vld [vmem:[#allocation9 + $0x190] sm:$0xff]
    %v1519 = vld [vmem:[#allocation9 + $0x198] sm:$0xff]
    %v1520 = vld [vmem:[#allocation9 + $0x1a0] sm:$0xff]
    %v1521 = vld [vmem:[#allocation9 + $0x1a8] sm:$0xff]
    %v1522 = vld [vmem:[#allocation9 + $0x1b0] sm:$0xff]
    %v1523 = vld [vmem:[#allocation9 + $0x1b8] sm:$0xff]
    %v1524 = vld [vmem:[#allocation9 + $0x1c0] sm:$0xff]
    %v1525 = vld [vmem:[#allocation9 + $0x1c8] sm:$0xff]
    %v1526 = vld [vmem:[#allocation9 + $0x1d0] sm:$0xff]
    %v1527 = vld [vmem:[#allocation9 + $0x1d8] sm:$0xff]
    %v1528 = vld [vmem:[#allocation9 + $0x1e0] sm:$0xff]
    %v1529 = vld [vmem:[#allocation9 + $0x1e8] sm:$0xff]
    %v1530 = vld [vmem:[#allocation9 + $0x1f0] sm:$0xff]
    %v1531 = vld [vmem:[#allocation9 + $0x1f8] sm:$0xff]
    %v1532 = vld [vmem:[#allocation9 + $0x200] sm:$0xff]
    %v1533 = vld [vmem:[#allocation9 + $0x208] sm:$0xff]
    %v1534 = vld [vmem:[#allocation9 + $0x210] sm:$0xff]
    %v1535 = vld [vmem:[#allocation9 + $0x218] sm:$0xff]
    %v1536 = vld [vmem:[#allocation9 + $0x220] sm:$0xff]
    %v1537 = vld [vmem:[#allocation9 + $0x228] sm:$0xff]
    %v1538 = vld [vmem:[#allocation9 + $0x230] sm:$0xff]
    %v1539 = vld [vmem:[#allocation9 + $0x238] sm:$0xff]
    %v1540 = vld [vmem:[#allocation9 + $0x240] sm:$0xff]
    %v1541 = vld [vmem:[#allocation9 + $0x248] sm:$0xff]
    %v1542 = vld [vmem:[#allocation9 + $0x250] sm:$0xff]
    %v1543 = vld [vmem:[#allocation9 + $0x258] sm:$0xff]
    %v1544 = vld [vmem:[#allocation9 + $0x260] sm:$0xff]
    %v1545 = vld [vmem:[#allocation9 + $0x268] sm:$0xff]
    %v1546 = vld [vmem:[#allocation9 + $0x270] sm:$0xff]
    %v1547 = vld [vmem:[#allocation9 + $0x278] sm:$0xff]
    %v1548 = vld [vmem:[#allocation9 + $0x280] sm:$0xff]
    %v1549 = vld [vmem:[#allocation9 + $0x288] sm:$0xff]
    %v1550 = vld [vmem:[#allocation9 + $0x290] sm:$0xff]
    %v1551 = vld [vmem:[#allocation9 + $0x298] sm:$0xff]
    %v1552 = vld [vmem:[#allocation9 + $0x2a0] sm:$0xff]
    %v1553 = vld [vmem:[#allocation9 + $0x2a8] sm:$0xff]
    %v1554 = vld [vmem:[#allocation9 + $0x2b0] sm:$0xff]
    %v1555 = vld [vmem:[#allocation9 + $0x2b8] sm:$0xff]
    %v1556 = vld [vmem:[#allocation9 + $0x2c0] sm:$0xff]
    %v1557 = vld [vmem:[#allocation9 + $0x2c8] sm:$0xff]
    %v1558 = vld [vmem:[#allocation9 + $0x2d0] sm:$0xff]
    %v1559 = vld [vmem:[#allocation9 + $0x2d8] sm:$0xff]
    %v1560 = vld [vmem:[#allocation9 + $0x2e0] sm:$0xff]
    %v1561 = vld [vmem:[#allocation9 + $0x2e8] sm:$0xff]
    %v1562 = vld [vmem:[#allocation9 + $0x2f0] sm:$0xff]
    %v1563 = vld [vmem:[#allocation9 + $0x2f8] sm:$0xff]
    %v1564 = vld [vmem:[#allocation9 + $0x300] sm:$0xff]
    %v1565 = vld [vmem:[#allocation9 + $0x308] sm:$0xff]
    %v1566 = vld [vmem:[#allocation9 + $0x310] sm:$0xff]
    %v1567 = vld [vmem:[#allocation9 + $0x318] sm:$0xff]
    %v1568 = vld [vmem:[#allocation9 + $0x320] sm:$0xff]
    %v1569 = vld [vmem:[#allocation9 + $0x328] sm:$0xff]
    %v1570 = vld [vmem:[#allocation9 + $0x330] sm:$0xff]
    %v1571 = vld [vmem:[#allocation9 + $0x338] sm:$0xff]
    %v1572 = vld [vmem:[#allocation9 + $0x340] sm:$0xff]
    %v1573 = vld [vmem:[#allocation9 + $0x348] sm:$0xff]
    %v1574 = vld [vmem:[#allocation9 + $0x350] sm:$0xff]
    %v1575 = vld [vmem:[#allocation9 + $0x358] sm:$0xff]
    %v1576 = vld [vmem:[#allocation9 + $0x360] sm:$0xff]
    %v1577 = vld [vmem:[#allocation9 + $0x368] sm:$0xff]
    %v1578 = vld [vmem:[#allocation9 + $0x370] sm:$0xff]
    %v1579 = vld [vmem:[#allocation9 + $0x378] sm:$0xff]
    %v1580 = vld [vmem:[#allocation9 + $0x380] sm:$0xff]
    %v1581 = vld [vmem:[#allocation9 + $0x388] sm:$0xff]
    %v1582 = vld [vmem:[#allocation9 + $0x390] sm:$0xff]
    %v1583 = vld [vmem:[#allocation9 + $0x398] sm:$0xff]
    %v1584 = vld [vmem:[#allocation9 + $0x3a0] sm:$0xff]
    %v1585 = vld [vmem:[#allocation9 + $0x3a8] sm:$0xff]
    %v1586 = vld [vmem:[#allocation9 + $0x3b0] sm:$0xff]
    %v1587 = vld [vmem:[#allocation9 + $0x3b8] sm:$0xff]
    %v1588 = vld [vmem:[#allocation9 + $0x3c0] sm:$0xff]
    %v1589 = vld [vmem:[#allocation9 + $0x3c8] sm:$0xff]
    %v1590 = vld [vmem:[#allocation9 + $0x3d0] sm:$0xff]
    %v1591 = vld [vmem:[#allocation9 + $0x3d8] sm:$0xff]
    %v1592 = vld [vmem:[#allocation9 + $0x3e0] sm:$0xff]
    %v1593 = vld [vmem:[#allocation9 + $0x3e8] sm:$0xff]
    %v1594 = vld [vmem:[#allocation9 + $0x3f0] sm:$0xff]
    %v1595 = vld [vmem:[#allocation9 + $0x3f8] sm:$0xff]
    %v1596 = vld [vmem:[#allocation9 + $0x400] sm:$0xff]
    %v1597 = vld [vmem:[#allocation9 + $0x408] sm:$0xff]
    %v1598 = vld [vmem:[#allocation9 + $0x410] sm:$0xff]
    %v1599 = vld [vmem:[#allocation9 + $0x418] sm:$0xff]
    %v1600 = vld [vmem:[#allocation9 + $0x420] sm:$0xff]
    %v1601 = vld [vmem:[#allocation9 + $0x428] sm:$0xff]
    %v1602 = vld [vmem:[#allocation9 + $0x430] sm:$0xff]
    %v1603 = vld [vmem:[#allocation9 + $0x438] sm:$0xff]
    %v1604 = vld [vmem:[#allocation9 + $0x440] sm:$0xff]
    %v1605 = vld [vmem:[#allocation9 + $0x448] sm:$0xff]
    %v1606 = vld [vmem:[#allocation9 + $0x450] sm:$0xff]
    %v1607 = vld [vmem:[#allocation9 + $0x458] sm:$0xff]
    %v1608 = vld [vmem:[#allocation9 + $0x460] sm:$0xff]
    %v1609 = vld [vmem:[#allocation9 + $0x468] sm:$0xff]
    %v1610 = vld [vmem:[#allocation9 + $0x470] sm:$0xff]
    %v1611 = vld [vmem:[#allocation9 + $0x478] sm:$0xff]
    %v1612 = vld [vmem:[#allocation9 + $0x480] sm:$0xff]
    %v1613 = vld [vmem:[#allocation9 + $0x488] sm:$0xff]
    %v1614 = vld [vmem:[#allocation9 + $0x490] sm:$0xff]
    %v1615 = vld [vmem:[#allocation9 + $0x498] sm:$0xff]
    %v1616 = vld [vmem:[#allocation9 + $0x4a0] sm:$0xff]
    %v1617 = vld [vmem:[#allocation9 + $0x4a8] sm:$0xff]
    %v1618 = vld [vmem:[#allocation9 + $0x4b0] sm:$0xff]
    %v1619 = vld [vmem:[#allocation9 + $0x4b8] sm:$0xff]
    %v1620 = vld [vmem:[#allocation9 + $0x4c0] sm:$0xff]
    %v1621 = vld [vmem:[#allocation9 + $0x4c8] sm:$0xff]
    %v1622 = vld [vmem:[#allocation9 + $0x4d0] sm:$0xff]
    %v1623 = vld [vmem:[#allocation9 + $0x4d8] sm:$0xff]
    %v1624 = vld [vmem:[#allocation9 + $0x4e0] sm:$0xff]
    %v1625 = vld [vmem:[#allocation9 + $0x4e8] sm:$0xff]
    %v1626 = vld [vmem:[#allocation9 + $0x4f0] sm:$0xff]
    %v1627 = vld [vmem:[#allocation9 + $0x4f8] sm:$0xff]
    %v1628 = vld [vmem:[#allocation9 + $0x500] sm:$0xff]
    %v1629 = vld [vmem:[#allocation9 + $0x508] sm:$0xff]
    %v1630 = vld [vmem:[#allocation9 + $0x510] sm:$0xff]
    %v1631 = vld [vmem:[#allocation9 + $0x518] sm:$0xff]
    %v1632 = vld [vmem:[#allocation9 + $0x520] sm:$0xff]
    %v1633 = vld [vmem:[#allocation9 + $0x528] sm:$0xff]
    %v1634 = vld [vmem:[#allocation9 + $0x530] sm:$0xff]
    %v1635 = vld [vmem:[#allocation9 + $0x538] sm:$0xff]
    %v1636 = vld [vmem:[#allocation9 + $0x540] sm:$0xff]
    %v1637 = vld [vmem:[#allocation9 + $0x548] sm:$0xff]
    %v1638 = vld [vmem:[#allocation9 + $0x550] sm:$0xff]
    %v1639 = vld [vmem:[#allocation9 + $0x558] sm:$0xff]
    %v1640 = vld [vmem:[#allocation9 + $0x560] sm:$0xff]
    %v1641 = vld [vmem:[#allocation9 + $0x568] sm:$0xff]
    %v1642 = vld [vmem:[#allocation9 + $0x570] sm:$0xff]
    %v1643 = vld [vmem:[#allocation9 + $0x578] sm:$0xff]
    %v1644 = vld [vmem:[#allocation9 + $0x580] sm:$0xff]
    %v1645 = vld [vmem:[#allocation9 + $0x588] sm:$0xff]
    %v1646 = vld [vmem:[#allocation9 + $0x590] sm:$0xff]
    %v1647 = vld [vmem:[#allocation9 + $0x598] sm:$0xff]
    %v1648 = vld [vmem:[#allocation9 + $0x5a0] sm:$0xff]
    %v1649 = vld [vmem:[#allocation9 + $0x5a8] sm:$0xff]
    %v1650 = vld [vmem:[#allocation9 + $0x5b0] sm:$0xff]
    %v1651 = vld [vmem:[#allocation9 + $0x5b8] sm:$0xff]
    %v1652 = vld [vmem:[#allocation9 + $0x5c0] sm:$0xff]
    %v1653 = vld [vmem:[#allocation9 + $0x5c8] sm:$0xff]
    %v1654 = vld [vmem:[#allocation9 + $0x5d0] sm:$0xff]
    %v1655 = vld [vmem:[#allocation9 + $0x5d8] sm:$0xff]
    %v1656 = vld [vmem:[#allocation9 + $0x5e0] sm:$0xff]
    %v1657 = vld [vmem:[#allocation9 + $0x5e8] sm:$0xff]
    %v1658 = vld [vmem:[#allocation9 + $0x5f0] sm:$0xff]
    %v1659 = vld [vmem:[#allocation9 + $0x5f8] sm:$0xff]
    %v1660 = vld [vmem:[#allocation9 + $0x600] sm:$0xff]
    %v1661 = vld [vmem:[#allocation9 + $0x608] sm:$0xff]
    %v1662 = vld [vmem:[#allocation9 + $0x610] sm:$0xff]
    %v1663 = vld [vmem:[#allocation9 + $0x618] sm:$0xff]
    %v1664 = vld [vmem:[#allocation9 + $0x620] sm:$0xff]
    %v1665 = vld [vmem:[#allocation9 + $0x628] sm:$0xff]
    %v1666 = vld [vmem:[#allocation9 + $0x630] sm:$0xff]
    %v1667 = vld [vmem:[#allocation9 + $0x638] sm:$0xff]
    %v1668 = vld [vmem:[#allocation9 + $0x640] sm:$0xff]
    %v1669 = vld [vmem:[#allocation9 + $0x648] sm:$0xff]
    %v1670 = vld [vmem:[#allocation9 + $0x650] sm:$0xff]
    %v1671 = vld [vmem:[#allocation9 + $0x658] sm:$0xff]
    %v1672 = vld [vmem:[#allocation9 + $0x660] sm:$0xff]
    %v1673 = vld [vmem:[#allocation9 + $0x668] sm:$0xff]
    %v1674 = vld [vmem:[#allocation9 + $0x670] sm:$0xff]
    %v1675 = vld [vmem:[#allocation9 + $0x678] sm:$0xff]
    %v1676 = vld [vmem:[#allocation9 + $0x680] sm:$0xff]
    %v1677 = vld [vmem:[#allocation9 + $0x688] sm:$0xff]
    %v1678 = vld [vmem:[#allocation9 + $0x690] sm:$0xff]
    %v1679 = vld [vmem:[#allocation9 + $0x698] sm:$0xff]
    %v1680 = vld [vmem:[#allocation9 + $0x6a0] sm:$0xff]
    %v1681 = vld [vmem:[#allocation9 + $0x6a8] sm:$0xff]
    %v1682 = vld [vmem:[#allocation9 + $0x6b0] sm:$0xff]
    %v1683 = vld [vmem:[#allocation9 + $0x6b8] sm:$0xff]
    %v1684 = vld [vmem:[#allocation9 + $0x6c0] sm:$0xff]
    %v1685 = vld [vmem:[#allocation9 + $0x6c8] sm:$0xff]
    %v1686 = vld [vmem:[#allocation9 + $0x6d0] sm:$0xff]
    %v1687 = vld [vmem:[#allocation9 + $0x6d8] sm:$0xff]
    %v1688 = vld [vmem:[#allocation9 + $0x6e0] sm:$0xff]
    %v1689 = vld [vmem:[#allocation9 + $0x6e8] sm:$0xff]
    %v1690 = vld [vmem:[#allocation9 + $0x6f0] sm:$0xff]
    %v1691 = vld [vmem:[#allocation9 + $0x6f8] sm:$0xff]
    %v1692 = vld [vmem:[#allocation9 + $0x700] sm:$0xff]
    %v1693 = vld [vmem:[#allocation9 + $0x708] sm:$0xff]
    %v1694 = vld [vmem:[#allocation9 + $0x710] sm:$0xff]
    %v1695 = vld [vmem:[#allocation9 + $0x718] sm:$0xff]
    %v1696 = vld [vmem:[#allocation9 + $0x720] sm:$0xff]
    %v1697 = vld [vmem:[#allocation9 + $0x728] sm:$0xff]
    %v1698 = vld [vmem:[#allocation9 + $0x730] sm:$0xff]
    %v1699 = vld [vmem:[#allocation9 + $0x738] sm:$0xff]
    %v1700 = vld [vmem:[#allocation9 + $0x740] sm:$0xff]
    %v1701 = vld [vmem:[#allocation9 + $0x748] sm:$0xff]
    %v1702 = vld [vmem:[#allocation9 + $0x750] sm:$0xff]
    %v1703 = vld [vmem:[#allocation9 + $0x758] sm:$0xff]
    %v1704 = vld [vmem:[#allocation9 + $0x760] sm:$0xff]
    %v1705 = vld [vmem:[#allocation9 + $0x768] sm:$0xff]
    %v1706 = vld [vmem:[#allocation9 + $0x770] sm:$0xff]
    %v1707 = vld [vmem:[#allocation9 + $0x778] sm:$0xff]
    %v1708 = vld [vmem:[#allocation9 + $0x780] sm:$0xff]
    %v1709 = vld [vmem:[#allocation9 + $0x788] sm:$0xff]
    %v1710 = vld [vmem:[#allocation9 + $0x790] sm:$0xff]
    %v1711 = vld [vmem:[#allocation9 + $0x798] sm:$0xff]
    %v1712 = vld [vmem:[#allocation9 + $0x7a0] sm:$0xff]
    %v1713 = vld [vmem:[#allocation9 + $0x7a8] sm:$0xff]
    %v1714 = vld [vmem:[#allocation9 + $0x7b0] sm:$0xff]
    %v1715 = vld [vmem:[#allocation9 + $0x7b8] sm:$0xff]
    %v1716 = vld [vmem:[#allocation9 + $0x7c0] sm:$0xff]
    %v1717 = vld [vmem:[#allocation9 + $0x7c8] sm:$0xff]
    %v1718 = vld [vmem:[#allocation9 + $0x7d0] sm:$0xff]
    %v1719 = vld [vmem:[#allocation9 + $0x7d8] sm:$0xff]
    %v1720 = vld [vmem:[#allocation9 + $0x7e0] sm:$0xff]
    %v1721 = vld [vmem:[#allocation9 + $0x7e8] sm:$0xff]
    %v1722 = vld [vmem:[#allocation9 + $0x7f0] sm:$0xff]
    %v1723 = vld [vmem:[#allocation9 + $0x7f8] sm:$0xff]
    %v1724 = vld [vmem:[%s6] sm:$0xf]
    %v1726 = vlaneseq
    %v1727 = vshrl.u32 %v1726, 7
    %v1728 = vsub.s32 0, %v1727
    %v1729 = vrot.slane %v1724, %v1728
    %v1730 = vlaneseq
    %v1731 = vshrl.u32 %v1730, 7
    %v1732 = vsub.s32 1, %v1731
    %v1733 = vrot.slane %v1724, %v1732
    %v1734 = vlaneseq
    %v1735 = vshrl.u32 %v1734, 7
    %v1736 = vsub.s32 2, %v1735
    %v1737 = vrot.slane %v1724, %v1736
    %v1738 = vlaneseq
    %v1739 = vshrl.u32 %v1738, 7
    %v1740 = vsub.s32 3, %v1739
    %v1741 = vrot.slane %v1724, %v1740
    %v1762 = vunpack.c.l.b16 %v1452
    %v1763 = vunpack.c.l.b16 %v1453
    %v1764 = vunpack.c.l.b16 %v1454
    %v1765 = vunpack.c.l.b16 %v1455
    %v1766 = vunpack.c.l.b16 %v1456
    %v1767 = vunpack.c.l.b16 %v1457
    %v1768 = vunpack.c.l.b16 %v1458
    %v1769 = vunpack.c.l.b16 %v1459
    %v1770 = vunpack.c.l.b16 %v1460
    %v1771 = vunpack.c.l.b16 %v1461
    %v1772 = vunpack.c.l.b16 %v1462
    %v1773 = vunpack.c.l.b16 %v1463
    %v1774 = vunpack.c.l.b16 %v1464
    %v1775 = vunpack.c.l.b16 %v1465
    %v1776 = vunpack.c.l.b16 %v1466
    %v1777 = vunpack.c.l.b16 %v1467
    %vm1778 = vcmask 1041409
    %v1779 = vsel %vm1778, %v1770, %v1762
    %v1780 = vsel %vm1778, %v1771, %v1763
    %v1781 = vsel %vm1778, %v1772, %v1764
    %v1782 = vsel %vm1778, %v1773, %v1765
    %v1783 = vsel %vm1778, %v1774, %v1766
    %v1784 = vsel %vm1778, %v1775, %v1767
    %v1785 = vsel %vm1778, %v1776, %v1768
    %v1786 = vsel %vm1778, %v1777, %v1769
    %v1787 = vpack.c.b16 %v1779, %v1779
    %v1788 = vpack.c.b16 %v1780, %v1780
    %v1789 = vpack.c.b16 %v1781, %v1781
    %v1790 = vpack.c.b16 %v1782, %v1782
    %v1791 = vpack.c.b16 %v1783, %v1783
    %v1792 = vpack.c.b16 %v1784, %v1784
    %v1793 = vpack.c.b16 %v1785, %v1785
    %v1794 = vpack.c.b16 %v1786, %v1786
    %v2059 = vunpack.c.l.b16 %v1468
    %v2060 = vunpack.c.h.b16 %v1468
    %v2061 = vunpack.c.l.b16 %v1469
    %v2062 = vunpack.c.h.b16 %v1469
    %v2063 = vunpack.c.l.b16 %v1470
    %v2064 = vunpack.c.h.b16 %v1470
    %v2065 = vunpack.c.l.b16 %v1471
    %v2066 = vunpack.c.h.b16 %v1471
    %v2067 = vunpack.c.l.b16 %v1472
    %v2068 = vunpack.c.h.b16 %v1472
    %v2069 = vunpack.c.l.b16 %v1473
    %v2070 = vunpack.c.h.b16 %v1473
    %v2071 = vunpack.c.l.b16 %v1474
    %v2072 = vunpack.c.h.b16 %v1474
    %v2073 = vunpack.c.l.b16 %v1475
    %v2074 = vunpack.c.h.b16 %v1475
    %v2075 = vunpack.c.l.b16 %v1476
    %v2076 = vunpack.c.h.b16 %v1476
    %v2077 = vunpack.c.l.b16 %v1477
    %v2078 = vunpack.c.h.b16 %v1477
    %v2079 = vunpack.c.l.b16 %v1478
    %v2080 = vunpack.c.h.b16 %v1478
    %v2081 = vunpack.c.l.b16 %v1479
    %v2082 = vunpack.c.h.b16 %v1479
    %v2083 = vunpack.c.l.b16 %v1480
    %v2084 = vunpack.c.h.b16 %v1480
    %v2085 = vunpack.c.l.b16 %v1481
    %v2086 = vunpack.c.h.b16 %v1481
    %v2087 = vunpack.c.l.b16 %v1482
    %v2088 = vunpack.c.h.b16 %v1482
    %v2089 = vunpack.c.l.b16 %v1483
    %v2090 = vunpack.c.h.b16 %v1483
    %v2091 = vunpack.c.l.b16 %v1484
    %v2092 = vunpack.c.h.b16 %v1484
    %v2093 = vunpack.c.l.b16 %v1485
    %v2094 = vunpack.c.h.b16 %v1485
    %v2095 = vunpack.c.l.b16 %v1486
    %v2096 = vunpack.c.h.b16 %v1486
    %v2097 = vunpack.c.l.b16 %v1487
    %v2098 = vunpack.c.h.b16 %v1487
    %v2099 = vunpack.c.l.b16 %v1488
    %v2100 = vunpack.c.h.b16 %v1488
    %v2101 = vunpack.c.l.b16 %v1489
    %v2102 = vunpack.c.h.b16 %v1489
    %v2103 = vunpack.c.l.b16 %v1490
    %v2104 = vunpack.c.h.b16 %v1490
    %v2105 = vunpack.c.l.b16 %v1491
    %v2106 = vunpack.c.h.b16 %v1491
    %v2107 = vunpack.c.l.b16 %v1492
    %v2108 = vunpack.c.h.b16 %v1492
    %v2109 = vunpack.c.l.b16 %v1493
    %v2110 = vunpack.c.h.b16 %v1493
    %v2111 = vunpack.c.l.b16 %v1494
    %v2112 = vunpack.c.h.b16 %v1494
    %v2113 = vunpack.c.l.b16 %v1495
    %v2114 = vunpack.c.h.b16 %v1495
    %v2115 = vunpack.c.l.b16 %v1496
    %v2116 = vunpack.c.h.b16 %v1496
    %v2117 = vunpack.c.l.b16 %v1497
    %v2118 = vunpack.c.h.b16 %v1497
    %v2119 = vunpack.c.l.b16 %v1498
    %v2120 = vunpack.c.h.b16 %v1498
    %v2121 = vunpack.c.l.b16 %v1499
    %v2122 = vunpack.c.h.b16 %v1499
    %v2123 = vunpack.c.l.b16 %v1500
    %v2124 = vunpack.c.h.b16 %v1500
    %v2125 = vunpack.c.l.b16 %v1501
    %v2126 = vunpack.c.h.b16 %v1501
    %v2127 = vunpack.c.l.b16 %v1502
    %v2128 = vunpack.c.h.b16 %v1502
    %v2129 = vunpack.c.l.b16 %v1503
    %v2130 = vunpack.c.h.b16 %v1503
    %v2131 = vunpack.c.l.b16 %v1504
    %v2132 = vunpack.c.h.b16 %v1504
    %v2133 = vunpack.c.l.b16 %v1505
    %v2134 = vunpack.c.h.b16 %v1505
    %v2135 = vunpack.c.l.b16 %v1506
    %v2136 = vunpack.c.h.b16 %v1506
    %v2137 = vunpack.c.l.b16 %v1507
    %v2138 = vunpack.c.h.b16 %v1507
    %v2139 = vunpack.c.l.b16 %v1508
    %v2140 = vunpack.c.h.b16 %v1508
    %v2141 = vunpack.c.l.b16 %v1509
    %v2142 = vunpack.c.h.b16 %v1509
    %v2143 = vunpack.c.l.b16 %v1510
    %v2144 = vunpack.c.h.b16 %v1510
    %v2145 = vunpack.c.l.b16 %v1511
    %v2146 = vunpack.c.h.b16 %v1511
    %v2147 = vunpack.c.l.b16 %v1512
    %v2148 = vunpack.c.h.b16 %v1512
    %v2149 = vunpack.c.l.b16 %v1513
    %v2150 = vunpack.c.h.b16 %v1513
    %v2151 = vunpack.c.l.b16 %v1514
    %v2152 = vunpack.c.h.b16 %v1514
    %v2153 = vunpack.c.l.b16 %v1515
    %v2154 = vunpack.c.h.b16 %v1515
    %v2155 = vunpack.c.l.b16 %v1516
    %v2156 = vunpack.c.h.b16 %v1516
    %v2157 = vunpack.c.l.b16 %v1517
    %v2158 = vunpack.c.h.b16 %v1517
    %v2159 = vunpack.c.l.b16 %v1518
    %v2160 = vunpack.c.h.b16 %v1518
    %v2161 = vunpack.c.l.b16 %v1519
    %v2162 = vunpack.c.h.b16 %v1519
    %v2163 = vunpack.c.l.b16 %v1520
    %v2164 = vunpack.c.h.b16 %v1520
    %v2165 = vunpack.c.l.b16 %v1521
    %v2166 = vunpack.c.h.b16 %v1521
    %v2167 = vunpack.c.l.b16 %v1522
    %v2168 = vunpack.c.h.b16 %v1522
    %v2169 = vunpack.c.l.b16 %v1523
    %v2170 = vunpack.c.h.b16 %v1523
    %v2171 = vunpack.c.l.b16 %v1524
    %v2172 = vunpack.c.h.b16 %v1524
    %v2173 = vunpack.c.l.b16 %v1525
    %v2174 = vunpack.c.h.b16 %v1525
    %v2175 = vunpack.c.l.b16 %v1526
    %v2176 = vunpack.c.h.b16 %v1526
    %v2177 = vunpack.c.l.b16 %v1527
    %v2178 = vunpack.c.h.b16 %v1527
    %v2179 = vunpack.c.l.b16 %v1528
    %v2180 = vunpack.c.h.b16 %v1528
    %v2181 = vunpack.c.l.b16 %v1529
    %v2182 = vunpack.c.h.b16 %v1529
    %v2183 = vunpack.c.l.b16 %v1530
    %v2184 = vunpack.c.h.b16 %v1530
    %v2185 = vunpack.c.l.b16 %v1531
    %v2186 = vunpack.c.h.b16 %v1531
    %v2187 = vunpack.c.l.b16 %v1532
    %v2188 = vunpack.c.h.b16 %v1532
    %v2189 = vunpack.c.l.b16 %v1533
    %v2190 = vunpack.c.h.b16 %v1533
    %v2191 = vunpack.c.l.b16 %v1534
    %v2192 = vunpack.c.h.b16 %v1534
    %v2193 = vunpack.c.l.b16 %v1535
    %v2194 = vunpack.c.h.b16 %v1535
    %v2195 = vunpack.c.l.b16 %v1536
    %v2196 = vunpack.c.h.b16 %v1536
    %v2197 = vunpack.c.l.b16 %v1537
    %v2198 = vunpack.c.h.b16 %v1537
    %v2199 = vunpack.c.l.b16 %v1538
    %v2200 = vunpack.c.h.b16 %v1538
    %v2201 = vunpack.c.l.b16 %v1539
    %v2202 = vunpack.c.h.b16 %v1539
    %v2203 = vunpack.c.l.b16 %v1540
    %v2204 = vunpack.c.h.b16 %v1540
    %v2205 = vunpack.c.l.b16 %v1541
    %v2206 = vunpack.c.h.b16 %v1541
    %v2207 = vunpack.c.l.b16 %v1542
    %v2208 = vunpack.c.h.b16 %v1542
    %v2209 = vunpack.c.l.b16 %v1543
    %v2210 = vunpack.c.h.b16 %v1543
    %v2211 = vunpack.c.l.b16 %v1544
    %v2212 = vunpack.c.h.b16 %v1544
    %v2213 = vunpack.c.l.b16 %v1545
    %v2214 = vunpack.c.h.b16 %v1545
    %v2215 = vunpack.c.l.b16 %v1546
    %v2216 = vunpack.c.h.b16 %v1546
    %v2217 = vunpack.c.l.b16 %v1547
    %v2218 = vunpack.c.h.b16 %v1547
    %v2219 = vunpack.c.l.b16 %v1548
    %v2220 = vunpack.c.h.b16 %v1548
    %v2221 = vunpack.c.l.b16 %v1549
    %v2222 = vunpack.c.h.b16 %v1549
    %v2223 = vunpack.c.l.b16 %v1550
    %v2224 = vunpack.c.h.b16 %v1550
    %v2225 = vunpack.c.l.b16 %v1551
    %v2226 = vunpack.c.h.b16 %v1551
    %v2227 = vunpack.c.l.b16 %v1552
    %v2228 = vunpack.c.h.b16 %v1552
    %v2229 = vunpack.c.l.b16 %v1553
    %v2230 = vunpack.c.h.b16 %v1553
    %v2231 = vunpack.c.l.b16 %v1554
    %v2232 = vunpack.c.h.b16 %v1554
    %v2233 = vunpack.c.l.b16 %v1555
    %v2234 = vunpack.c.h.b16 %v1555
    %v2235 = vunpack.c.l.b16 %v1556
    %v2236 = vunpack.c.h.b16 %v1556
    %v2237 = vunpack.c.l.b16 %v1557
    %v2238 = vunpack.c.h.b16 %v1557
    %v2239 = vunpack.c.l.b16 %v1558
    %v2240 = vunpack.c.h.b16 %v1558
    %v2241 = vunpack.c.l.b16 %v1559
    %v2242 = vunpack.c.h.b16 %v1559
    %v2243 = vunpack.c.l.b16 %v1560
    %v2244 = vunpack.c.h.b16 %v1560
    %v2245 = vunpack.c.l.b16 %v1561
    %v2246 = vunpack.c.h.b16 %v1561
    %v2247 = vunpack.c.l.b16 %v1562
    %v2248 = vunpack.c.h.b16 %v1562
    %v2249 = vunpack.c.l.b16 %v1563
    %v2250 = vunpack.c.h.b16 %v1563
    %v2251 = vunpack.c.l.b16 %v1564
    %v2252 = vunpack.c.h.b16 %v1564
    %v2253 = vunpack.c.l.b16 %v1565
    %v2254 = vunpack.c.h.b16 %v1565
    %v2255 = vunpack.c.l.b16 %v1566
    %v2256 = vunpack.c.h.b16 %v1566
    %v2257 = vunpack.c.l.b16 %v1567
    %v2258 = vunpack.c.h.b16 %v1567
    %v2259 = vunpack.c.l.b16 %v1568
    %v2260 = vunpack.c.h.b16 %v1568
    %v2261 = vunpack.c.l.b16 %v1569
    %v2262 = vunpack.c.h.b16 %v1569
    %v2263 = vunpack.c.l.b16 %v1570
    %v2264 = vunpack.c.h.b16 %v1570
    %v2265 = vunpack.c.l.b16 %v1571
    %v2266 = vunpack.c.h.b16 %v1571
    %v2267 = vunpack.c.l.b16 %v1572
    %v2268 = vunpack.c.h.b16 %v1572
    %v2269 = vunpack.c.l.b16 %v1573
    %v2270 = vunpack.c.h.b16 %v1573
    %v2271 = vunpack.c.l.b16 %v1574
    %v2272 = vunpack.c.h.b16 %v1574
    %v2273 = vunpack.c.l.b16 %v1575
    %v2274 = vunpack.c.h.b16 %v1575
    %v2275 = vunpack.c.l.b16 %v1576
    %v2276 = vunpack.c.h.b16 %v1576
    %v2277 = vunpack.c.l.b16 %v1577
    %v2278 = vunpack.c.h.b16 %v1577
    %v2279 = vunpack.c.l.b16 %v1578
    %v2280 = vunpack.c.h.b16 %v1578
    %v2281 = vunpack.c.l.b16 %v1579
    %v2282 = vunpack.c.h.b16 %v1579
    %v2283 = vunpack.c.l.b16 %v1580
    %v2284 = vunpack.c.h.b16 %v1580
    %v2285 = vunpack.c.l.b16 %v1581
    %v2286 = vunpack.c.h.b16 %v1581
    %v2287 = vunpack.c.l.b16 %v1582
    %v2288 = vunpack.c.h.b16 %v1582
    %v2289 = vunpack.c.l.b16 %v1583
    %v2290 = vunpack.c.h.b16 %v1583
    %v2291 = vunpack.c.l.b16 %v1584
    %v2292 = vunpack.c.h.b16 %v1584
    %v2293 = vunpack.c.l.b16 %v1585
    %v2294 = vunpack.c.h.b16 %v1585
    %v2295 = vunpack.c.l.b16 %v1586
    %v2296 = vunpack.c.h.b16 %v1586
    %v2297 = vunpack.c.l.b16 %v1587
    %v2298 = vunpack.c.h.b16 %v1587
    %v2299 = vunpack.c.l.b16 %v1588
    %v2300 = vunpack.c.h.b16 %v1588
    %v2301 = vunpack.c.l.b16 %v1589
    %v2302 = vunpack.c.h.b16 %v1589
    %v2303 = vunpack.c.l.b16 %v1590
    %v2304 = vunpack.c.h.b16 %v1590
    %v2305 = vunpack.c.l.b16 %v1591
    %v2306 = vunpack.c.h.b16 %v1591
    %v2307 = vunpack.c.l.b16 %v1592
    %v2308 = vunpack.c.h.b16 %v1592
    %v2309 = vunpack.c.l.b16 %v1593
    %v2310 = vunpack.c.h.b16 %v1593
    %v2311 = vunpack.c.l.b16 %v1594
    %v2312 = vunpack.c.h.b16 %v1594
    %v2313 = vunpack.c.l.b16 %v1595
    %v2314 = vunpack.c.h.b16 %v1595
    %v2315 = vunpack.c.l.b16 %v1596
    %v2316 = vunpack.c.h.b16 %v1596
    %v2317 = vunpack.c.l.b16 %v1597
    %v2318 = vunpack.c.h.b16 %v1597
    %v2319 = vunpack.c.l.b16 %v1598
    %v2320 = vunpack.c.h.b16 %v1598
    %v2321 = vunpack.c.l.b16 %v1599
    %v2322 = vunpack.c.h.b16 %v1599
    %v2323 = vunpack.c.l.b16 %v1600
    %v2324 = vunpack.c.h.b16 %v1600
    %v2325 = vunpack.c.l.b16 %v1601
    %v2326 = vunpack.c.h.b16 %v1601
    %v2327 = vunpack.c.l.b16 %v1602
    %v2328 = vunpack.c.h.b16 %v1602
    %v2329 = vunpack.c.l.b16 %v1603
    %v2330 = vunpack.c.h.b16 %v1603
    %v2331 = vunpack.c.l.b16 %v1604
    %v2332 = vunpack.c.h.b16 %v1604
    %v2333 = vunpack.c.l.b16 %v1605
    %v2334 = vunpack.c.h.b16 %v1605
    %v2335 = vunpack.c.l.b16 %v1606
    %v2336 = vunpack.c.h.b16 %v1606
    %v2337 = vunpack.c.l.b16 %v1607
    %v2338 = vunpack.c.h.b16 %v1607
    %v2339 = vunpack.c.l.b16 %v1608
    %v2340 = vunpack.c.h.b16 %v1608
    %v2341 = vunpack.c.l.b16 %v1609
    %v2342 = vunpack.c.h.b16 %v1609
    %v2343 = vunpack.c.l.b16 %v1610
    %v2344 = vunpack.c.h.b16 %v1610
    %v2345 = vunpack.c.l.b16 %v1611
    %v2346 = vunpack.c.h.b16 %v1611
    %v2347 = vunpack.c.l.b16 %v1612
    %v2348 = vunpack.c.h.b16 %v1612
    %v2349 = vunpack.c.l.b16 %v1613
    %v2350 = vunpack.c.h.b16 %v1613
    %v2351 = vunpack.c.l.b16 %v1614
    %v2352 = vunpack.c.h.b16 %v1614
    %v2353 = vunpack.c.l.b16 %v1615
    %v2354 = vunpack.c.h.b16 %v1615
    %v2355 = vunpack.c.l.b16 %v1616
    %v2356 = vunpack.c.h.b16 %v1616
    %v2357 = vunpack.c.l.b16 %v1617
    %v2358 = vunpack.c.h.b16 %v1617
    %v2359 = vunpack.c.l.b16 %v1618
    %v2360 = vunpack.c.h.b16 %v1618
    %v2361 = vunpack.c.l.b16 %v1619
    %v2362 = vunpack.c.h.b16 %v1619
    %v2363 = vunpack.c.l.b16 %v1620
    %v2364 = vunpack.c.h.b16 %v1620
    %v2365 = vunpack.c.l.b16 %v1621
    %v2366 = vunpack.c.h.b16 %v1621
    %v2367 = vunpack.c.l.b16 %v1622
    %v2368 = vunpack.c.h.b16 %v1622
    %v2369 = vunpack.c.l.b16 %v1623
    %v2370 = vunpack.c.h.b16 %v1623
    %v2371 = vunpack.c.l.b16 %v1624
    %v2372 = vunpack.c.h.b16 %v1624
    %v2373 = vunpack.c.l.b16 %v1625
    %v2374 = vunpack.c.h.b16 %v1625
    %v2375 = vunpack.c.l.b16 %v1626
    %v2376 = vunpack.c.h.b16 %v1626
    %v2377 = vunpack.c.l.b16 %v1627
    %v2378 = vunpack.c.h.b16 %v1627
    %v2379 = vunpack.c.l.b16 %v1628
    %v2380 = vunpack.c.h.b16 %v1628
    %v2381 = vunpack.c.l.b16 %v1629
    %v2382 = vunpack.c.h.b16 %v1629
    %v2383 = vunpack.c.l.b16 %v1630
    %v2384 = vunpack.c.h.b16 %v1630
    %v2385 = vunpack.c.l.b16 %v1631
    %v2386 = vunpack.c.h.b16 %v1631
    %v2387 = vunpack.c.l.b16 %v1632
    %v2388 = vunpack.c.h.b16 %v1632
    %v2389 = vunpack.c.l.b16 %v1633
    %v2390 = vunpack.c.h.b16 %v1633
    %v2391 = vunpack.c.l.b16 %v1634
    %v2392 = vunpack.c.h.b16 %v1634
    %v2393 = vunpack.c.l.b16 %v1635
    %v2394 = vunpack.c.h.b16 %v1635
    %v2395 = vunpack.c.l.b16 %v1636
    %v2396 = vunpack.c.h.b16 %v1636
    %v2397 = vunpack.c.l.b16 %v1637
    %v2398 = vunpack.c.h.b16 %v1637
    %v2399 = vunpack.c.l.b16 %v1638
    %v2400 = vunpack.c.h.b16 %v1638
    %v2401 = vunpack.c.l.b16 %v1639
    %v2402 = vunpack.c.h.b16 %v1639
    %v2403 = vunpack.c.l.b16 %v1640
    %v2404 = vunpack.c.h.b16 %v1640
    %v2405 = vunpack.c.l.b16 %v1641
    %v2406 = vunpack.c.h.b16 %v1641
    %v2407 = vunpack.c.l.b16 %v1642
    %v2408 = vunpack.c.h.b16 %v1642
    %v2409 = vunpack.c.l.b16 %v1643
    %v2410 = vunpack.c.h.b16 %v1643
    %v2411 = vunpack.c.l.b16 %v1644
    %v2412 = vunpack.c.h.b16 %v1644
    %v2413 = vunpack.c.l.b16 %v1645
    %v2414 = vunpack.c.h.b16 %v1645
    %v2415 = vunpack.c.l.b16 %v1646
    %v2416 = vunpack.c.h.b16 %v1646
    %v2417 = vunpack.c.l.b16 %v1647
    %v2418 = vunpack.c.h.b16 %v1647
    %v2419 = vunpack.c.l.b16 %v1648
    %v2420 = vunpack.c.h.b16 %v1648
    %v2421 = vunpack.c.l.b16 %v1649
    %v2422 = vunpack.c.h.b16 %v1649
    %v2423 = vunpack.c.l.b16 %v1650
    %v2424 = vunpack.c.h.b16 %v1650
    %v2425 = vunpack.c.l.b16 %v1651
    %v2426 = vunpack.c.h.b16 %v1651
    %v2427 = vunpack.c.l.b16 %v1652
    %v2428 = vunpack.c.h.b16 %v1652
    %v2429 = vunpack.c.l.b16 %v1653
    %v2430 = vunpack.c.h.b16 %v1653
    %v2431 = vunpack.c.l.b16 %v1654
    %v2432 = vunpack.c.h.b16 %v1654
    %v2433 = vunpack.c.l.b16 %v1655
    %v2434 = vunpack.c.h.b16 %v1655
    %v2435 = vunpack.c.l.b16 %v1656
    %v2436 = vunpack.c.h.b16 %v1656
    %v2437 = vunpack.c.l.b16 %v1657
    %v2438 = vunpack.c.h.b16 %v1657
    %v2439 = vunpack.c.l.b16 %v1658
    %v2440 = vunpack.c.h.b16 %v1658
    %v2441 = vunpack.c.l.b16 %v1659
    %v2442 = vunpack.c.h.b16 %v1659
    %v2443 = vunpack.c.l.b16 %v1660
    %v2444 = vunpack.c.h.b16 %v1660
    %v2445 = vunpack.c.l.b16 %v1661
    %v2446 = vunpack.c.h.b16 %v1661
    %v2447 = vunpack.c.l.b16 %v1662
    %v2448 = vunpack.c.h.b16 %v1662
    %v2449 = vunpack.c.l.b16 %v1663
    %v2450 = vunpack.c.h.b16 %v1663
    %v2451 = vunpack.c.l.b16 %v1664
    %v2452 = vunpack.c.h.b16 %v1664
    %v2453 = vunpack.c.l.b16 %v1665
    %v2454 = vunpack.c.h.b16 %v1665
    %v2455 = vunpack.c.l.b16 %v1666
    %v2456 = vunpack.c.h.b16 %v1666
    %v2457 = vunpack.c.l.b16 %v1667
    %v2458 = vunpack.c.h.b16 %v1667
    %v2459 = vunpack.c.l.b16 %v1668
    %v2460 = vunpack.c.h.b16 %v1668
    %v2461 = vunpack.c.l.b16 %v1669
    %v2462 = vunpack.c.h.b16 %v1669
    %v2463 = vunpack.c.l.b16 %v1670
    %v2464 = vunpack.c.h.b16 %v1670
    %v2465 = vunpack.c.l.b16 %v1671
    %v2466 = vunpack.c.h.b16 %v1671
    %v2467 = vunpack.c.l.b16 %v1672
    %v2468 = vunpack.c.h.b16 %v1672
    %v2469 = vunpack.c.l.b16 %v1673
    %v2470 = vunpack.c.h.b16 %v1673
    %v2471 = vunpack.c.l.b16 %v1674
    %v2472 = vunpack.c.h.b16 %v1674
    %v2473 = vunpack.c.l.b16 %v1675
    %v2474 = vunpack.c.h.b16 %v1675
    %v2475 = vunpack.c.l.b16 %v1676
    %v2476 = vunpack.c.h.b16 %v1676
    %v2477 = vunpack.c.l.b16 %v1677
    %v2478 = vunpack.c.h.b16 %v1677
    %v2479 = vunpack.c.l.b16 %v1678
    %v2480 = vunpack.c.h.b16 %v1678
    %v2481 = vunpack.c.l.b16 %v1679
    %v2482 = vunpack.c.h.b16 %v1679
    %v2483 = vunpack.c.l.b16 %v1680
    %v2484 = vunpack.c.h.b16 %v1680
    %v2485 = vunpack.c.l.b16 %v1681
    %v2486 = vunpack.c.h.b16 %v1681
    %v2487 = vunpack.c.l.b16 %v1682
    %v2488 = vunpack.c.h.b16 %v1682
    %v2489 = vunpack.c.l.b16 %v1683
    %v2490 = vunpack.c.h.b16 %v1683
    %v2491 = vunpack.c.l.b16 %v1684
    %v2492 = vunpack.c.h.b16 %v1684
    %v2493 = vunpack.c.l.b16 %v1685
    %v2494 = vunpack.c.h.b16 %v1685
    %v2495 = vunpack.c.l.b16 %v1686
    %v2496 = vunpack.c.h.b16 %v1686
    %v2497 = vunpack.c.l.b16 %v1687
    %v2498 = vunpack.c.h.b16 %v1687
    %v2499 = vunpack.c.l.b16 %v1688
    %v2500 = vunpack.c.h.b16 %v1688
    %v2501 = vunpack.c.l.b16 %v1689
    %v2502 = vunpack.c.h.b16 %v1689
    %v2503 = vunpack.c.l.b16 %v1690
    %v2504 = vunpack.c.h.b16 %v1690
    %v2505 = vunpack.c.l.b16 %v1691
    %v2506 = vunpack.c.h.b16 %v1691
    %v2507 = vunpack.c.l.b16 %v1692
    %v2508 = vunpack.c.h.b16 %v1692
    %v2509 = vunpack.c.l.b16 %v1693
    %v2510 = vunpack.c.h.b16 %v1693
    %v2511 = vunpack.c.l.b16 %v1694
    %v2512 = vunpack.c.h.b16 %v1694
    %v2513 = vunpack.c.l.b16 %v1695
    %v2514 = vunpack.c.h.b16 %v1695
    %v2515 = vunpack.c.l.b16 %v1696
    %v2516 = vunpack.c.h.b16 %v1696
    %v2517 = vunpack.c.l.b16 %v1697
    %v2518 = vunpack.c.h.b16 %v1697
    %v2519 = vunpack.c.l.b16 %v1698
    %v2520 = vunpack.c.h.b16 %v1698
    %v2521 = vunpack.c.l.b16 %v1699
    %v2522 = vunpack.c.h.b16 %v1699
    %v2523 = vunpack.c.l.b16 %v1700
    %v2524 = vunpack.c.h.b16 %v1700
    %v2525 = vunpack.c.l.b16 %v1701
    %v2526 = vunpack.c.h.b16 %v1701
    %v2527 = vunpack.c.l.b16 %v1702
    %v2528 = vunpack.c.h.b16 %v1702
    %v2529 = vunpack.c.l.b16 %v1703
    %v2530 = vunpack.c.h.b16 %v1703
    %v2531 = vunpack.c.l.b16 %v1704
    %v2532 = vunpack.c.h.b16 %v1704
    %v2533 = vunpack.c.l.b16 %v1705
    %v2534 = vunpack.c.h.b16 %v1705
    %v2535 = vunpack.c.l.b16 %v1706
    %v2536 = vunpack.c.h.b16 %v1706
    %v2537 = vunpack.c.l.b16 %v1707
    %v2538 = vunpack.c.h.b16 %v1707
    %v2539 = vunpack.c.l.b16 %v1708
    %v2540 = vunpack.c.h.b16 %v1708
    %v2541 = vunpack.c.l.b16 %v1709
    %v2542 = vunpack.c.h.b16 %v1709
    %v2543 = vunpack.c.l.b16 %v1710
    %v2544 = vunpack.c.h.b16 %v1710
    %v2545 = vunpack.c.l.b16 %v1711
    %v2546 = vunpack.c.h.b16 %v1711
    %v2547 = vunpack.c.l.b16 %v1712
    %v2548 = vunpack.c.h.b16 %v1712
    %v2549 = vunpack.c.l.b16 %v1713
    %v2550 = vunpack.c.h.b16 %v1713
    %v2551 = vunpack.c.l.b16 %v1714
    %v2552 = vunpack.c.h.b16 %v1714
    %v2553 = vunpack.c.l.b16 %v1715
    %v2554 = vunpack.c.h.b16 %v1715
    %v2555 = vunpack.c.l.b16 %v1716
    %v2556 = vunpack.c.h.b16 %v1716
    %v2557 = vunpack.c.l.b16 %v1717
    %v2558 = vunpack.c.h.b16 %v1717
    %v2559 = vunpack.c.l.b16 %v1718
    %v2560 = vunpack.c.h.b16 %v1718
    %v2561 = vunpack.c.l.b16 %v1719
    %v2562 = vunpack.c.h.b16 %v1719
    %v2563 = vunpack.c.l.b16 %v1720
    %v2564 = vunpack.c.h.b16 %v1720
    %v2565 = vunpack.c.l.b16 %v1721
    %v2566 = vunpack.c.h.b16 %v1721
    %v2567 = vunpack.c.l.b16 %v1722
    %v2568 = vunpack.c.h.b16 %v1722
    %v2569 = vunpack.c.l.b16 %v1723
    %v2570 = vunpack.c.h.b16 %v1723
    %v2571 = vpack.c.b16 %v2063, %v2059
    %v2572 = vpack.c.b16 %v2064, %v2060
    %v2573 = vpack.c.b16 %v2065, %v2061
    %v2574 = vpack.c.b16 %v2066, %v2062
    %v2575 = vpack.c.b16 %v2071, %v2067
    %v2576 = vpack.c.b16 %v2072, %v2068
    %v2577 = vpack.c.b16 %v2073, %v2069
    %v2578 = vpack.c.b16 %v2074, %v2070
    %v2579 = vpack.c.b16 %v2079, %v2075
    %v2580 = vpack.c.b16 %v2080, %v2076
    %v2581 = vpack.c.b16 %v2081, %v2077
    %v2582 = vpack.c.b16 %v2082, %v2078
    %v2583 = vpack.c.b16 %v2087, %v2083
    %v2584 = vpack.c.b16 %v2088, %v2084
    %v2585 = vpack.c.b16 %v2089, %v2085
    %v2586 = vpack.c.b16 %v2090, %v2086
    %v2587 = vpack.c.b16 %v2095, %v2091
    %v2588 = vpack.c.b16 %v2096, %v2092
    %v2589 = vpack.c.b16 %v2097, %v2093
    %v2590 = vpack.c.b16 %v2098, %v2094
    %v2591 = vpack.c.b16 %v2103, %v2099
    %v2592 = vpack.c.b16 %v2104, %v2100
    %v2593 = vpack.c.b16 %v2105, %v2101
    %v2594 = vpack.c.b16 %v2106, %v2102
    %v2595 = vpack.c.b16 %v2111, %v2107
    %v2596 = vpack.c.b16 %v2112, %v2108
    %v2597 = vpack.c.b16 %v2113, %v2109
    %v2598 = vpack.c.b16 %v2114, %v2110
    %v2599 = vpack.c.b16 %v2119, %v2115
    %v2600 = vpack.c.b16 %v2120, %v2116
    %v2601 = vpack.c.b16 %v2121, %v2117
    %v2602 = vpack.c.b16 %v2122, %v2118
    %v2603 = vpack.c.b16 %v2127, %v2123
    %v2604 = vpack.c.b16 %v2128, %v2124
    %v2605 = vpack.c.b16 %v2129, %v2125
    %v2606 = vpack.c.b16 %v2130, %v2126
    %v2607 = vpack.c.b16 %v2135, %v2131
    %v2608 = vpack.c.b16 %v2136, %v2132
    %v2609 = vpack.c.b16 %v2137, %v2133
    %v2610 = vpack.c.b16 %v2138, %v2134
    %v2611 = vpack.c.b16 %v2143, %v2139
    %v2612 = vpack.c.b16 %v2144, %v2140
    %v2613 = vpack.c.b16 %v2145, %v2141
    %v2614 = vpack.c.b16 %v2146, %v2142
    %v2615 = vpack.c.b16 %v2151, %v2147
    %v2616 = vpack.c.b16 %v2152, %v2148
    %v2617 = vpack.c.b16 %v2153, %v2149
    %v2618 = vpack.c.b16 %v2154, %v2150
    %v2619 = vpack.c.b16 %v2159, %v2155
    %v2620 = vpack.c.b16 %v2160, %v2156
    %v2621 = vpack.c.b16 %v2161, %v2157
    %v2622 = vpack.c.b16 %v2162, %v2158
    %v2623 = vpack.c.b16 %v2167, %v2163
    %v2624 = vpack.c.b16 %v2168, %v2164
    %v2625 = vpack.c.b16 %v2169, %v2165
    %v2626 = vpack.c.b16 %v2170, %v2166
    %v2627 = vpack.c.b16 %v2175, %v2171
    %v2628 = vpack.c.b16 %v2176, %v2172
    %v2629 = vpack.c.b16 %v2177, %v2173
    %v2630 = vpack.c.b16 %v2178, %v2174
    %v2631 = vpack.c.b16 %v2183, %v2179
    %v2632 = vpack.c.b16 %v2184, %v2180
    %v2633 = vpack.c.b16 %v2185, %v2181
    %v2634 = vpack.c.b16 %v2186, %v2182
    %v2635 = vpack.c.b16 %v2191, %v2187
    %v2636 = vpack.c.b16 %v2192, %v2188
    %v2637 = vpack.c.b16 %v2193, %v2189
    %v2638 = vpack.c.b16 %v2194, %v2190
    %v2639 = vpack.c.b16 %v2199, %v2195
    %v2640 = vpack.c.b16 %v2200, %v2196
    %v2641 = vpack.c.b16 %v2201, %v2197
    %v2642 = vpack.c.b16 %v2202, %v2198
    %v2643 = vpack.c.b16 %v2207, %v2203
    %v2644 = vpack.c.b16 %v2208, %v2204
    %v2645 = vpack.c.b16 %v2209, %v2205
    %v2646 = vpack.c.b16 %v2210, %v2206
    %v2647 = vpack.c.b16 %v2215, %v2211
    %v2648 = vpack.c.b16 %v2216, %v2212
    %v2649 = vpack.c.b16 %v2217, %v2213
    %v2650 = vpack.c.b16 %v2218, %v2214
    %v2651 = vpack.c.b16 %v2223, %v2219
    %v2652 = vpack.c.b16 %v2224, %v2220
    %v2653 = vpack.c.b16 %v2225, %v2221
    %v2654 = vpack.c.b16 %v2226, %v2222
    %v2655 = vpack.c.b16 %v2231, %v2227
    %v2656 = vpack.c.b16 %v2232, %v2228
    %v2657 = vpack.c.b16 %v2233, %v2229
    %v2658 = vpack.c.b16 %v2234, %v2230
    %v2659 = vpack.c.b16 %v2239, %v2235
    %v2660 = vpack.c.b16 %v2240, %v2236
    %v2661 = vpack.c.b16 %v2241, %v2237
    %v2662 = vpack.c.b16 %v2242, %v2238
    %v2663 = vpack.c.b16 %v2247, %v2243
    %v2664 = vpack.c.b16 %v2248, %v2244
    %v2665 = vpack.c.b16 %v2249, %v2245
    %v2666 = vpack.c.b16 %v2250, %v2246
    %v2667 = vpack.c.b16 %v2255, %v2251
    %v2668 = vpack.c.b16 %v2256, %v2252
    %v2669 = vpack.c.b16 %v2257, %v2253
    %v2670 = vpack.c.b16 %v2258, %v2254
    %v2671 = vpack.c.b16 %v2263, %v2259
    %v2672 = vpack.c.b16 %v2264, %v2260
    %v2673 = vpack.c.b16 %v2265, %v2261
    %v2674 = vpack.c.b16 %v2266, %v2262
    %v2675 = vpack.c.b16 %v2271, %v2267
    %v2676 = vpack.c.b16 %v2272, %v2268
    %v2677 = vpack.c.b16 %v2273, %v2269
    %v2678 = vpack.c.b16 %v2274, %v2270
    %v2679 = vpack.c.b16 %v2279, %v2275
    %v2680 = vpack.c.b16 %v2280, %v2276
    %v2681 = vpack.c.b16 %v2281, %v2277
    %v2682 = vpack.c.b16 %v2282, %v2278
    %v2683 = vpack.c.b16 %v2287, %v2283
    %v2684 = vpack.c.b16 %v2288, %v2284
    %v2685 = vpack.c.b16 %v2289, %v2285
    %v2686 = vpack.c.b16 %v2290, %v2286
    %v2687 = vpack.c.b16 %v2295, %v2291
    %v2688 = vpack.c.b16 %v2296, %v2292
    %v2689 = vpack.c.b16 %v2297, %v2293
    %v2690 = vpack.c.b16 %v2298, %v2294
    %v2691 = vpack.c.b16 %v2303, %v2299
    %v2692 = vpack.c.b16 %v2304, %v2300
    %v2693 = vpack.c.b16 %v2305, %v2301
    %v2694 = vpack.c.b16 %v2306, %v2302
    %v2695 = vpack.c.b16 %v2311, %v2307
    %v2696 = vpack.c.b16 %v2312, %v2308
    %v2697 = vpack.c.b16 %v2313, %v2309
    %v2698 = vpack.c.b16 %v2314, %v2310
    %v2699 = vpack.c.b16 %v2319, %v2315
    %v2700 = vpack.c.b16 %v2320, %v2316
    %v2701 = vpack.c.b16 %v2321, %v2317
    %v2702 = vpack.c.b16 %v2322, %v2318
    %v2703 = vpack.c.b16 %v2327, %v2323
    %v2704 = vpack.c.b16 %v2328, %v2324
    %v2705 = vpack.c.b16 %v2329, %v2325
    %v2706 = vpack.c.b16 %v2330, %v2326
    %v2707 = vpack.c.b16 %v2335, %v2331
    %v2708 = vpack.c.b16 %v2336, %v2332
    %v2709 = vpack.c.b16 %v2337, %v2333
    %v2710 = vpack.c.b16 %v2338, %v2334
    %v2711 = vpack.c.b16 %v2343, %v2339
    %v2712 = vpack.c.b16 %v2344, %v2340
    %v2713 = vpack.c.b16 %v2345, %v2341
    %v2714 = vpack.c.b16 %v2346, %v2342
    %v2715 = vpack.c.b16 %v2351, %v2347
    %v2716 = vpack.c.b16 %v2352, %v2348
    %v2717 = vpack.c.b16 %v2353, %v2349
    %v2718 = vpack.c.b16 %v2354, %v2350
    %v2719 = vpack.c.b16 %v2359, %v2355
    %v2720 = vpack.c.b16 %v2360, %v2356
    %v2721 = vpack.c.b16 %v2361, %v2357
    %v2722 = vpack.c.b16 %v2362, %v2358
    %v2723 = vpack.c.b16 %v2367, %v2363
    %v2724 = vpack.c.b16 %v2368, %v2364
    %v2725 = vpack.c.b16 %v2369, %v2365
    %v2726 = vpack.c.b16 %v2370, %v2366
    %v2727 = vpack.c.b16 %v2375, %v2371
    %v2728 = vpack.c.b16 %v2376, %v2372
    %v2729 = vpack.c.b16 %v2377, %v2373
    %v2730 = vpack.c.b16 %v2378, %v2374
    %v2731 = vpack.c.b16 %v2383, %v2379
    %v2732 = vpack.c.b16 %v2384, %v2380
    %v2733 = vpack.c.b16 %v2385, %v2381
    %v2734 = vpack.c.b16 %v2386, %v2382
    %v2735 = vpack.c.b16 %v2391, %v2387
    %v2736 = vpack.c.b16 %v2392, %v2388
    %v2737 = vpack.c.b16 %v2393, %v2389
    %v2738 = vpack.c.b16 %v2394, %v2390
    %v2739 = vpack.c.b16 %v2399, %v2395
    %v2740 = vpack.c.b16 %v2400, %v2396
    %v2741 = vpack.c.b16 %v2401, %v2397
    %v2742 = vpack.c.b16 %v2402, %v2398
    %v2743 = vpack.c.b16 %v2407, %v2403
    %v2744 = vpack.c.b16 %v2408, %v2404
    %v2745 = vpack.c.b16 %v2409, %v2405
    %v2746 = vpack.c.b16 %v2410, %v2406
    %v2747 = vpack.c.b16 %v2415, %v2411
    %v2748 = vpack.c.b16 %v2416, %v2412
    %v2749 = vpack.c.b16 %v2417, %v2413
    %v2750 = vpack.c.b16 %v2418, %v2414
    %v2751 = vpack.c.b16 %v2423, %v2419
    %v2752 = vpack.c.b16 %v2424, %v2420
    %v2753 = vpack.c.b16 %v2425, %v2421
    %v2754 = vpack.c.b16 %v2426, %v2422
    %v2755 = vpack.c.b16 %v2431, %v2427
    %v2756 = vpack.c.b16 %v2432, %v2428
    %v2757 = vpack.c.b16 %v2433, %v2429
    %v2758 = vpack.c.b16 %v2434, %v2430
    %v2759 = vpack.c.b16 %v2439, %v2435
    %v2760 = vpack.c.b16 %v2440, %v2436
    %v2761 = vpack.c.b16 %v2441, %v2437
    %v2762 = vpack.c.b16 %v2442, %v2438
    %v2763 = vpack.c.b16 %v2447, %v2443
    %v2764 = vpack.c.b16 %v2448, %v2444
    %v2765 = vpack.c.b16 %v2449, %v2445
    %v2766 = vpack.c.b16 %v2450, %v2446
    %v2767 = vpack.c.b16 %v2455, %v2451
    %v2768 = vpack.c.b16 %v2456, %v2452
    %v2769 = vpack.c.b16 %v2457, %v2453
    %v2770 = vpack.c.b16 %v2458, %v2454
    %v2771 = vpack.c.b16 %v2463, %v2459
    %v2772 = vpack.c.b16 %v2464, %v2460
    %v2773 = vpack.c.b16 %v2465, %v2461
    %v2774 = vpack.c.b16 %v2466, %v2462
    %v2775 = vpack.c.b16 %v2471, %v2467
    %v2776 = vpack.c.b16 %v2472, %v2468
    %v2777 = vpack.c.b16 %v2473, %v2469
    %v2778 = vpack.c.b16 %v2474, %v2470
    %v2779 = vpack.c.b16 %v2479, %v2475
    %v2780 = vpack.c.b16 %v2480, %v2476
    %v2781 = vpack.c.b16 %v2481, %v2477
    %v2782 = vpack.c.b16 %v2482, %v2478
    %v2783 = vpack.c.b16 %v2487, %v2483
    %v2784 = vpack.c.b16 %v2488, %v2484
    %v2785 = vpack.c.b16 %v2489, %v2485
    %v2786 = vpack.c.b16 %v2490, %v2486
    %v2787 = vpack.c.b16 %v2495, %v2491
    %v2788 = vpack.c.b16 %v2496, %v2492
    %v2789 = vpack.c.b16 %v2497, %v2493
    %v2790 = vpack.c.b16 %v2498, %v2494
    %v2791 = vpack.c.b16 %v2503, %v2499
    %v2792 = vpack.c.b16 %v2504, %v2500
    %v2793 = vpack.c.b16 %v2505, %v2501
    %v2794 = vpack.c.b16 %v2506, %v2502
    %v2795 = vpack.c.b16 %v2511, %v2507
    %v2796 = vpack.c.b16 %v2512, %v2508
    %v2797 = vpack.c.b16 %v2513, %v2509
    %v2798 = vpack.c.b16 %v2514, %v2510
    %v2799 = vpack.c.b16 %v2519, %v2515
    %v2800 = vpack.c.b16 %v2520, %v2516
    %v2801 = vpack.c.b16 %v2521, %v2517
    %v2802 = vpack.c.b16 %v2522, %v2518
    %v2803 = vpack.c.b16 %v2527, %v2523
    %v2804 = vpack.c.b16 %v2528, %v2524
    %v2805 = vpack.c.b16 %v2529, %v2525
    %v2806 = vpack.c.b16 %v2530, %v2526
    %v2807 = vpack.c.b16 %v2535, %v2531
    %v2808 = vpack.c.b16 %v2536, %v2532
    %v2809 = vpack.c.b16 %v2537, %v2533
    %v2810 = vpack.c.b16 %v2538, %v2534
    %v2811 = vpack.c.b16 %v2543, %v2539
    %v2812 = vpack.c.b16 %v2544, %v2540
    %v2813 = vpack.c.b16 %v2545, %v2541
    %v2814 = vpack.c.b16 %v2546, %v2542
    %v2815 = vpack.c.b16 %v2551, %v2547
    %v2816 = vpack.c.b16 %v2552, %v2548
    %v2817 = vpack.c.b16 %v2553, %v2549
    %v2818 = vpack.c.b16 %v2554, %v2550
    %v2819 = vpack.c.b16 %v2559, %v2555
    %v2820 = vpack.c.b16 %v2560, %v2556
    %v2821 = vpack.c.b16 %v2561, %v2557
    %v2822 = vpack.c.b16 %v2562, %v2558
    %v2823 = vpack.c.b16 %v2567, %v2563
    %v2824 = vpack.c.b16 %v2568, %v2564
    %v2825 = vpack.c.b16 %v2569, %v2565
    %v2826 = vpack.c.b16 %v2570, %v2566
    %3083 = vmatprep.subr.bf16.mxu0 %v2600
    %3084 = vmatpush1.bf16.msra.mxu0 %v2599
    %3085 = vmatprep.subr.bf16.mxu0 %v2596
    %3086 = vmatpush1.bf16.msra.mxu0 %v2595
    %3087 = vmatprep.subr.bf16.mxu0 %v2592
    %3088 = vmatpush1.bf16.msra.mxu0 %v2591
    %3089 = vmatprep.subr.bf16.mxu0 %v2588
    %3090 = vmatpush1.bf16.msra.mxu0 %v2587
    %3091 = vmatprep.subr.bf16.mxu0 %v2584
    %3092 = vmatpush1.bf16.msra.mxu0 %v2583
    %3093 = vmatprep.subr.bf16.mxu0 %v2580
    %3094 = vmatpush1.bf16.msra.mxu0 %v2579
    %3095 = vmatprep.subr.bf16.mxu0 %v2576
    %3096 = vmatpush1.bf16.msra.mxu0 %v2575
    %3097 = vmatprep.subr.bf16.mxu0 %v2572
    %3098 = vmatpush1.bf16.msra.mxu0 %v2571
    %3099 = vmatprep.subr.bf16.mxu0 %v2632
    %3100 = vmatpush2.bf16.msra.mxu0 %v2631
    %3101 = vmatprep.subr.bf16.mxu0 %v2628
    %3102 = vmatpush2.bf16.msra.mxu0 %v2627
    %3103 = vmatprep.subr.bf16.mxu0 %v2624
    %3104 = vmatpush2.bf16.msra.mxu0 %v2623
    %3105 = vmatprep.subr.bf16.mxu0 %v2620
    %3106 = vmatpush2.bf16.msra.mxu0 %v2619
    %3107 = vmatprep.subr.bf16.mxu0 %v2616
    %3108 = vmatpush2.bf16.msra.mxu0 %v2615
    %3109 = vmatprep.subr.bf16.mxu0 %v2612
    %3110 = vmatpush2.bf16.msra.mxu0 %v2611
    %3111 = vmatprep.subr.bf16.mxu0 %v2608
    %3112 = vmatpush2.bf16.msra.mxu0 %v2607
    %3113 = vmatprep.subr.bf16.mxu0 %v2604
    %3114 = vmatpush2.bf16.msra.mxu0 %v2603
    %3115 = vmatprep.mubr.bf16.mxu0 %v1788
    %3116 = vmatmul.mubr.bf16.gmra.mxu0 %v1787
    %v3117 = vpop.f32.mrf.mxu0
    %v3118 = vadd.f32 %v1729, %v3117
    %v3119 = vpop.f32.mrf.mxu0
    %v3120 = vadd.f32 %v1733, %v3119
    %v3121 = vpop.f32.mrf.mxu0
    %v3122 = vpop.f32.mrf.mxu0
    %3123 = vdwg.mxu0
    %3124 = vmatprep.subr.bf16.mxu0 %v2664
    %3125 = vmatpush1.bf16.msra.mxu0 %v2663
    %3126 = vmatprep.subr.bf16.mxu0 %v2660
    %3127 = vmatpush1.bf16.msra.mxu0 %v2659
    %3128 = vmatprep.subr.bf16.mxu0 %v2656
    %3129 = vmatpush1.bf16.msra.mxu0 %v2655
    %3130 = vmatprep.subr.bf16.mxu0 %v2652
    %3131 = vmatpush1.bf16.msra.mxu0 %v2651
    %3132 = vmatprep.subr.bf16.mxu0 %v2648
    %3133 = vmatpush1.bf16.msra.mxu0 %v2647
    %3134 = vmatprep.subr.bf16.mxu0 %v2644
    %3135 = vmatpush1.bf16.msra.mxu0 %v2643
    %3136 = vmatprep.subr.bf16.mxu0 %v2640
    %3137 = vmatpush1.bf16.msra.mxu0 %v2639
    %3138 = vmatprep.subr.bf16.mxu0 %v2636
    %3139 = vmatpush1.bf16.msra.mxu0 %v2635
    %3140 = vmatprep.subr.bf16.mxu0 %v2696
    %3141 = vmatpush2.bf16.msra.mxu0 %v2695
    %3142 = vmatprep.subr.bf16.mxu0 %v2692
    %3143 = vmatpush2.bf16.msra.mxu0 %v2691
    %3144 = vmatprep.subr.bf16.mxu0 %v2688
    %3145 = vmatpush2.bf16.msra.mxu0 %v2687
    %3146 = vmatprep.subr.bf16.mxu0 %v2684
    %3147 = vmatpush2.bf16.msra.mxu0 %v2683
    %3148 = vmatprep.subr.bf16.mxu0 %v2680
    %3149 = vmatpush2.bf16.msra.mxu0 %v2679
    %3150 = vmatprep.subr.bf16.mxu0 %v2676
    %3151 = vmatpush2.bf16.msra.mxu0 %v2675
    %3152 = vmatprep.subr.bf16.mxu0 %v2672
    %3153 = vmatpush2.bf16.msra.mxu0 %v2671
    %3154 = vmatprep.subr.bf16.mxu0 %v2668
    %3155 = vmatpush2.bf16.msra.mxu0 %v2667
    %3156 = vmatprep.mubr.bf16.mxu0 %v1790
    %3157 = vmatmul.mubr.bf16.gmra.mxu0 %v1789
    %v3158 = vpop.f32.mrf.mxu0
    %v3159 = vadd.f32 %v3118, %v3158
    %v3160 = vpop.f32.mrf.mxu0
    %v3161 = vadd.f32 %v3120, %v3160
    %v3162 = vpop.f32.mrf.mxu0
    %v3163 = vpop.f32.mrf.mxu0
    %3164 = vdwg.mxu0
    %3165 = vmatprep.subr.bf16.mxu0 %v2728
    %3166 = vmatpush1.bf16.msra.mxu0 %v2727
    %3167 = vmatprep.subr.bf16.mxu0 %v2724
    %3168 = vmatpush1.bf16.msra.mxu0 %v2723
    %3169 = vmatprep.subr.bf16.mxu0 %v2720
    %3170 = vmatpush1.bf16.msra.mxu0 %v2719
    %3171 = vmatprep.subr.bf16.mxu0 %v2716
    %3172 = vmatpush1.bf16.msra.mxu0 %v2715
    %3173 = vmatprep.subr.bf16.mxu0 %v2712
    %3174 = vmatpush1.bf16.msra.mxu0 %v2711
    %3175 = vmatprep.subr.bf16.mxu0 %v2708
    %3176 = vmatpush1.bf16.msra.mxu0 %v2707
    %3177 = vmatprep.subr.bf16.mxu0 %v2704
    %3178 = vmatpush1.bf16.msra.mxu0 %v2703
    %3179 = vmatprep.subr.bf16.mxu0 %v2700
    %3180 = vmatpush1.bf16.msra.mxu0 %v2699
    %3181 = vmatprep.subr.bf16.mxu0 %v2760
    %3182 = vmatpush2.bf16.msra.mxu0 %v2759
    %3183 = vmatprep.subr.bf16.mxu0 %v2756
    %3184 = vmatpush2.bf16.msra.mxu0 %v2755
    %3185 = vmatprep.subr.bf16.mxu0 %v2752
    %3186 = vmatpush2.bf16.msra.mxu0 %v2751
    %3187 = vmatprep.subr.bf16.mxu0 %v2748
    %3188 = vmatpush2.bf16.msra.mxu0 %v2747
    %3189 = vmatprep.subr.bf16.mxu0 %v2744
    %3190 = vmatpush2.bf16.msra.mxu0 %v2743
    %3191 = vmatprep.subr.bf16.mxu0 %v2740
    %3192 = vmatpush2.bf16.msra.mxu0 %v2739
    %3193 = vmatprep.subr.bf16.mxu0 %v2736
    %3194 = vmatpush2.bf16.msra.mxu0 %v2735
    %3195 = vmatprep.subr.bf16.mxu0 %v2732
    %3196 = vmatpush2.bf16.msra.mxu0 %v2731
    %3197 = vmatprep.mubr.bf16.mxu0 %v1792
    %3198 = vmatmul.mubr.bf16.gmra.mxu0 %v1791
    %v3199 = vpop.f32.mrf.mxu0
    %v3200 = vadd.f32 %v3159, %v3199
    %v3201 = vpop.f32.mrf.mxu0
    %v3202 = vadd.f32 %v3161, %v3201
    %v3203 = vpop.f32.mrf.mxu0
    %v3204 = vpop.f32.mrf.mxu0
    %3205 = vdwg.mxu0
    %3206 = vmatprep.subr.bf16.mxu0 %v2792
    %3207 = vmatpush1.bf16.msra.mxu0 %v2791
    %3208 = vmatprep.subr.bf16.mxu0 %v2788
    %3209 = vmatpush1.bf16.msra.mxu0 %v2787
    %3210 = vmatprep.subr.bf16.mxu0 %v2784
    %3211 = vmatpush1.bf16.msra.mxu0 %v2783
    %3212 = vmatprep.subr.bf16.mxu0 %v2780
    %3213 = vmatpush1.bf16.msra.mxu0 %v2779
    %3214 = vmatprep.subr.bf16.mxu0 %v2776
    %3215 = vmatpush1.bf16.msra.mxu0 %v2775
    %3216 = vmatprep.subr.bf16.mxu0 %v2772
    %3217 = vmatpush1.bf16.msra.mxu0 %v2771
    %3218 = vmatprep.subr.bf16.mxu0 %v2768
    %3219 = vmatpush1.bf16.msra.mxu0 %v2767
    %3220 = vmatprep.subr.bf16.mxu0 %v2764
    %3221 = vmatpush1.bf16.msra.mxu0 %v2763
    %3222 = vmatprep.subr.bf16.mxu0 %v2824
    %3223 = vmatpush2.bf16.msra.mxu0 %v2823
    %3224 = vmatprep.subr.bf16.mxu0 %v2820
    %3225 = vmatpush2.bf16.msra.mxu0 %v2819
    %3226 = vmatprep.subr.bf16.mxu0 %v2816
    %3227 = vmatpush2.bf16.msra.mxu0 %v2815
    %3228 = vmatprep.subr.bf16.mxu0 %v2812
    %3229 = vmatpush2.bf16.msra.mxu0 %v2811
    %3230 = vmatprep.subr.bf16.mxu0 %v2808
    %3231 = vmatpush2.bf16.msra.mxu0 %v2807
    %3232 = vmatprep.subr.bf16.mxu0 %v2804
    %3233 = vmatpush2.bf16.msra.mxu0 %v2803
    %3234 = vmatprep.subr.bf16.mxu0 %v2800
    %3235 = vmatpush2.bf16.msra.mxu0 %v2799
    %3236 = vmatprep.subr.bf16.mxu0 %v2796
    %3237 = vmatpush2.bf16.msra.mxu0 %v2795
    %3238 = vmatprep.mubr.bf16.mxu0 %v1794
    %3239 = vmatmul.mubr.bf16.gmra.mxu0 %v1793
    %v3240 = vpop.f32.mrf.mxu0
    %v3241 = vadd.f32 %v3200, %v3240
    %v3242 = vpop.f32.mrf.mxu0
    %v3243 = vadd.f32 %v3202, %v3242
    %v3244 = vpop.f32.mrf.mxu0
    %v3245 = vpop.f32.mrf.mxu0
    %3246 = vdwg.mxu0
    %3247 = vmatprep.subr.bf16.mxu0 %v2602
    %3248 = vmatpush1.bf16.msra.mxu0 %v2601
    %3249 = vmatprep.subr.bf16.mxu0 %v2598
    %3250 = vmatpush1.bf16.msra.mxu0 %v2597
    %3251 = vmatprep.subr.bf16.mxu0 %v2594
    %3252 = vmatpush1.bf16.msra.mxu0 %v2593
    %3253 = vmatprep.subr.bf16.mxu0 %v2590
    %3254 = vmatpush1.bf16.msra.mxu0 %v2589
    %3255 = vmatprep.subr.bf16.mxu0 %v2586
    %3256 = vmatpush1.bf16.msra.mxu0 %v2585
    %3257 = vmatprep.subr.bf16.mxu0 %v2582
    %3258 = vmatpush1.bf16.msra.mxu0 %v2581
    %3259 = vmatprep.subr.bf16.mxu0 %v2578
    %3260 = vmatpush1.bf16.msra.mxu0 %v2577
    %3261 = vmatprep.subr.bf16.mxu0 %v2574
    %3262 = vmatpush1.bf16.msra.mxu0 %v2573
    %3263 = vmatprep.subr.bf16.mxu0 %v2634
    %3264 = vmatpush2.bf16.msra.mxu0 %v2633
    %3265 = vmatprep.subr.bf16.mxu0 %v2630
    %3266 = vmatpush2.bf16.msra.mxu0 %v2629
    %3267 = vmatprep.subr.bf16.mxu0 %v2626
    %3268 = vmatpush2.bf16.msra.mxu0 %v2625
    %3269 = vmatprep.subr.bf16.mxu0 %v2622
    %3270 = vmatpush2.bf16.msra.mxu0 %v2621
    %3271 = vmatprep.subr.bf16.mxu0 %v2618
    %3272 = vmatpush2.bf16.msra.mxu0 %v2617
    %3273 = vmatprep.subr.bf16.mxu0 %v2614
    %3274 = vmatpush2.bf16.msra.mxu0 %v2613
    %3275 = vmatprep.subr.bf16.mxu0 %v2610
    %3276 = vmatpush2.bf16.msra.mxu0 %v2609
    %3277 = vmatprep.subr.bf16.mxu0 %v2606
    %3278 = vmatpush2.bf16.msra.mxu0 %v2605
    %3279 = vmatprep.mubr.bf16.mxu0 %v1788
    %3280 = vmatmul.mubr.bf16.gmra.mxu0 %v1787
    %v3281 = vpop.f32.mrf.mxu0
    %v3282 = vadd.f32 %v1737, %v3281
    %v3283 = vpop.f32.mrf.mxu0
    %v3284 = vadd.f32 %v1741, %v3283
    %v3285 = vpop.f32.mrf.mxu0
    %v3286 = vpop.f32.mrf.mxu0
    %3287 = vdwg.mxu0
    %3288 = vmatprep.subr.bf16.mxu0 %v2666
    %3289 = vmatpush1.bf16.msra.mxu0 %v2665
    %3290 = vmatprep.subr.bf16.mxu0 %v2662
    %3291 = vmatpush1.bf16.msra.mxu0 %v2661
    %3292 = vmatprep.subr.bf16.mxu0 %v2658
    %3293 = vmatpush1.bf16.msra.mxu0 %v2657
    %3294 = vmatprep.subr.bf16.mxu0 %v2654
    %3295 = vmatpush1.bf16.msra.mxu0 %v2653
    %3296 = vmatprep.subr.bf16.mxu0 %v2650
    %3297 = vmatpush1.bf16.msra.mxu0 %v2649
    %3298 = vmatprep.subr.bf16.mxu0 %v2646
    %3299 = vmatpush1.bf16.msra.mxu0 %v2645
    %3300 = vmatprep.subr.bf16.mxu0 %v2642
    %3301 = vmatpush1.bf16.msra.mxu0 %v2641
    %3302 = vmatprep.subr.bf16.mxu0 %v2638
    %3303 = vmatpush1.bf16.msra.mxu0 %v2637
    %3304 = vmatprep.subr.bf16.mxu0 %v2698
    %3305 = vmatpush2.bf16.msra.mxu0 %v2697
    %3306 = vmatprep.subr.bf16.mxu0 %v2694
    %3307 = vmatpush2.bf16.msra.mxu0 %v2693
    %3308 = vmatprep.subr.bf16.mxu0 %v2690
    %3309 = vmatpush2.bf16.msra.mxu0 %v2689
    %3310 = vmatprep.subr.bf16.mxu0 %v2686
    %3311 = vmatpush2.bf16.msra.mxu0 %v2685
    %3312 = vmatprep.subr.bf16.mxu0 %v2682
    %3313 = vmatpush2.bf16.msra.mxu0 %v2681
    %3314 = vmatprep.subr.bf16.mxu0 %v2678
    %3315 = vmatpush2.bf16.msra.mxu0 %v2677
    %3316 = vmatprep.subr.bf16.mxu0 %v2674
    %3317 = vmatpush2.bf16.msra.mxu0 %v2673
    %3318 = vmatprep.subr.bf16.mxu0 %v2670
    %3319 = vmatpush2.bf16.msra.mxu0 %v2669
    %3320 = vmatprep.mubr.bf16.mxu0 %v1790
    %3321 = vmatmul.mubr.bf16.gmra.mxu0 %v1789
    %v3322 = vpop.f32.mrf.mxu0
    %v3323 = vadd.f32 %v3282, %v3322
    %v3324 = vpop.f32.mrf.mxu0
    %v3325 = vadd.f32 %v3284, %v3324
    %v3326 = vpop.f32.mrf.mxu0
    %v3327 = vpop.f32.mrf.mxu0
    %3328 = vdwg.mxu0
    %3329 = vmatprep.subr.bf16.mxu0 %v2730
    %3330 = vmatpush1.bf16.msra.mxu0 %v2729
    %3331 = vmatprep.subr.bf16.mxu0 %v2726
    %3332 = vmatpush1.bf16.msra.mxu0 %v2725
    %3333 = vmatprep.subr.bf16.mxu0 %v2722
    %3334 = vmatpush1.bf16.msra.mxu0 %v2721
    %3335 = vmatprep.subr.bf16.mxu0 %v2718
    %3336 = vmatpush1.bf16.msra.mxu0 %v2717
    %3337 = vmatprep.subr.bf16.mxu0 %v2714
    %3338 = vmatpush1.bf16.msra.mxu0 %v2713
    %3339 = vmatprep.subr.bf16.mxu0 %v2710
    %3340 = vmatpush1.bf16.msra.mxu0 %v2709
    %3341 = vmatprep.subr.bf16.mxu0 %v2706
    %3342 = vmatpush1.bf16.msra.mxu0 %v2705
    %3343 = vmatprep.subr.bf16.mxu0 %v2702
    %3344 = vmatpush1.bf16.msra.mxu0 %v2701
    %3345 = vmatprep.subr.bf16.mxu0 %v2762
    %3346 = vmatpush2.bf16.msra.mxu0 %v2761
    %3347 = vmatprep.subr.bf16.mxu0 %v2758
    %3348 = vmatpush2.bf16.msra.mxu0 %v2757
    %3349 = vmatprep.subr.bf16.mxu0 %v2754
    %3350 = vmatpush2.bf16.msra.mxu0 %v2753
    %3351 = vmatprep.subr.bf16.mxu0 %v2750
    %3352 = vmatpush2.bf16.msra.mxu0 %v2749
    %3353 = vmatprep.subr.bf16.mxu0 %v2746
    %3354 = vmatpush2.bf16.msra.mxu0 %v2745
    %3355 = vmatprep.subr.bf16.mxu0 %v2742
    %3356 = vmatpush2.bf16.msra.mxu0 %v2741
    %3357 = vmatprep.subr.bf16.mxu0 %v2738
    %3358 = vmatpush2.bf16.msra.mxu0 %v2737
    %3359 = vmatprep.subr.bf16.mxu0 %v2734
    %3360 = vmatpush2.bf16.msra.mxu0 %v2733
    %3361 = vmatprep.mubr.bf16.mxu0 %v1792
    %3362 = vmatmul.mubr.bf16.gmra.mxu0 %v1791
    %v3363 = vpop.f32.mrf.mxu0
    %v3364 = vadd.f32 %v3323, %v3363
    %v3365 = vpop.f32.mrf.mxu0
    %v3366 = vadd.f32 %v3325, %v3365
    %v3367 = vpop.f32.mrf.mxu0
    %v3368 = vpop.f32.mrf.mxu0
    %3369 = vdwg.mxu0
    %3370 = vmatprep.subr.bf16.mxu0 %v2794
    %3371 = vmatpush1.bf16.msra.mxu0 %v2793
    %3372 = vmatprep.subr.bf16.mxu0 %v2790
    %3373 = vmatpush1.bf16.msra.mxu0 %v2789
    %3374 = vmatprep.subr.bf16.mxu0 %v2786
    %3375 = vmatpush1.bf16.msra.mxu0 %v2785
    %3376 = vmatprep.subr.bf16.mxu0 %v2782
    %3377 = vmatpush1.bf16.msra.mxu0 %v2781
    %3378 = vmatprep.subr.bf16.mxu0 %v2778
    %3379 = vmatpush1.bf16.msra.mxu0 %v2777
    %3380 = vmatprep.subr.bf16.mxu0 %v2774
    %3381 = vmatpush1.bf16.msra.mxu0 %v2773
    %3382 = vmatprep.subr.bf16.mxu0 %v2770
    %3383 = vmatpush1.bf16.msra.mxu0 %v2769
    %3384 = vmatprep.subr.bf16.mxu0 %v2766
    %3385 = vmatpush1.bf16.msra.mxu0 %v2765
    %3386 = vmatprep.subr.bf16.mxu0 %v2826
    %3387 = vmatpush2.bf16.msra.mxu0 %v2825
    %3388 = vmatprep.subr.bf16.mxu0 %v2822
    %3389 = vmatpush2.bf16.msra.mxu0 %v2821
    %3390 = vmatprep.subr.bf16.mxu0 %v2818
    %3391 = vmatpush2.bf16.msra.mxu0 %v2817
    %3392 = vmatprep.subr.bf16.mxu0 %v2814
    %3393 = vmatpush2.bf16.msra.mxu0 %v2813
    %3394 = vmatprep.subr.bf16.mxu0 %v2810
    %3395 = vmatpush2.bf16.msra.mxu0 %v2809
    %3396 = vmatprep.subr.bf16.mxu0 %v2806
    %3397 = vmatpush2.bf16.msra.mxu0 %v2805
    %3398 = vmatprep.subr.bf16.mxu0 %v2802
    %3399 = vmatpush2.bf16.msra.mxu0 %v2801
    %3400 = vmatprep.subr.bf16.mxu0 %v2798
    %3401 = vmatpush2.bf16.msra.mxu0 %v2797
    %3402 = vmatprep.mubr.bf16.mxu0 %v1794
    %3403 = vmatmul.mubr.bf16.gmra.mxu0 %v1793
    %v3404 = vpop.f32.mrf.mxu0
    %v3405 = vadd.f32 %v3364, %v3404
    %v3406 = vpop.f32.mrf.mxu0
    %v3407 = vadd.f32 %v3366, %v3406
    %v3408 = vpop.f32.mrf.mxu0
    %v3409 = vpop.f32.mrf.mxu0
    %3410 = vdwg.mxu0
    %v3411 = vmax.f32 %v3241, 0.0
    %v3412 = vmax.f32 %v3243, 0.0
    %v3413 = vmax.f32 %v3405, 0.0
    %v3414 = vmax.f32 %v3407, 0.0
    %v3415 = vpack.c.bf16 %v3411, %v3411
    %v3416 = vpack.c.bf16 %v3412, %v3412
    %v3417 = vpack.c.bf16 %v3413, %v3413
    %v3418 = vpack.c.bf16 %v3414, %v3414
    %v3419 = vld [vmem:[#allocation10] sm:$0xff]
    %v3420 = vld [vmem:[#allocation10 + $0x8] sm:$0xff]
    %v3421 = vld [vmem:[#allocation10 + $0x10] sm:$0xff]
    %v3422 = vld [vmem:[#allocation10 + $0x18] sm:$0xff]
    %v3423 = vld [vmem:[#allocation10 + $0x20] sm:$0xff]
    %v3424 = vld [vmem:[#allocation10 + $0x28] sm:$0xff]
    %v3425 = vld [vmem:[#allocation10 + $0x30] sm:$0xff]
    %v3426 = vld [vmem:[#allocation10 + $0x38] sm:$0xff]
    %v3427 = vld [vmem:[#allocation10 + $0x40] sm:$0xff]
    %v3428 = vld [vmem:[#allocation10 + $0x48] sm:$0xff]
    %v3429 = vld [vmem:[#allocation10 + $0x50] sm:$0xff]
    %v3430 = vld [vmem:[#allocation10 + $0x58] sm:$0xff]
    %v3431 = vld [vmem:[#allocation10 + $0x60] sm:$0xff]
    %v3432 = vld [vmem:[#allocation10 + $0x68] sm:$0xff]
    %v3433 = vld [vmem:[#allocation10 + $0x70] sm:$0xff]
    %v3434 = vld [vmem:[#allocation10 + $0x78] sm:$0xff]
    %v3435 = vld [vmem:[#allocation10 + $0x80] sm:$0xff]
    %v3436 = vld [vmem:[#allocation10 + $0x88] sm:$0xff]
    %v3437 = vld [vmem:[#allocation10 + $0x90] sm:$0xff]
    %v3438 = vld [vmem:[#allocation10 + $0x98] sm:$0xff]
    %v3439 = vld [vmem:[#allocation10 + $0xa0] sm:$0xff]
    %v3440 = vld [vmem:[#allocation10 + $0xa8] sm:$0xff]
    %v3441 = vld [vmem:[#allocation10 + $0xb0] sm:$0xff]
    %v3442 = vld [vmem:[#allocation10 + $0xb8] sm:$0xff]
    %v3443 = vld [vmem:[#allocation10 + $0xc0] sm:$0xff]
    %v3444 = vld [vmem:[#allocation10 + $0xc8] sm:$0xff]
    %v3445 = vld [vmem:[#allocation10 + $0xd0] sm:$0xff]
    %v3446 = vld [vmem:[#allocation10 + $0xd8] sm:$0xff]
    %v3447 = vld [vmem:[#allocation10 + $0xe0] sm:$0xff]
    %v3448 = vld [vmem:[#allocation10 + $0xe8] sm:$0xff]
    %v3449 = vld [vmem:[#allocation10 + $0xf0] sm:$0xff]
    %v3450 = vld [vmem:[#allocation10 + $0xf8] sm:$0xff]
    %v3451 = vld [vmem:[#allocation10 + $0x100] sm:$0xff]
    %v3452 = vld [vmem:[#allocation10 + $0x108] sm:$0xff]
    %v3453 = vld [vmem:[#allocation10 + $0x110] sm:$0xff]
    %v3454 = vld [vmem:[#allocation10 + $0x118] sm:$0xff]
    %v3455 = vld [vmem:[#allocation10 + $0x120] sm:$0xff]
    %v3456 = vld [vmem:[#allocation10 + $0x128] sm:$0xff]
    %v3457 = vld [vmem:[#allocation10 + $0x130] sm:$0xff]
    %v3458 = vld [vmem:[#allocation10 + $0x138] sm:$0xff]
    %v3459 = vld [vmem:[#allocation10 + $0x140] sm:$0xff]
    %v3460 = vld [vmem:[#allocation10 + $0x148] sm:$0xff]
    %v3461 = vld [vmem:[#allocation10 + $0x150] sm:$0xff]
    %v3462 = vld [vmem:[#allocation10 + $0x158] sm:$0xff]
    %v3463 = vld [vmem:[#allocation10 + $0x160] sm:$0xff]
    %v3464 = vld [vmem:[#allocation10 + $0x168] sm:$0xff]
    %v3465 = vld [vmem:[#allocation10 + $0x170] sm:$0xff]
    %v3466 = vld [vmem:[#allocation10 + $0x178] sm:$0xff]
    %v3467 = vld [vmem:[#allocation10 + $0x180] sm:$0xff]
    %v3468 = vld [vmem:[#allocation10 + $0x188] sm:$0xff]
    %v3469 = vld [vmem:[#allocation10 + $0x190] sm:$0xff]
    %v3470 = vld [vmem:[#allocation10 + $0x198] sm:$0xff]
    %v3471 = vld [vmem:[#allocation10 + $0x1a0] sm:$0xff]
    %v3472 = vld [vmem:[#allocation10 + $0x1a8] sm:$0xff]
    %v3473 = vld [vmem:[#allocation10 + $0x1b0] sm:$0xff]
    %v3474 = vld [vmem:[#allocation10 + $0x1b8] sm:$0xff]
    %v3475 = vld [vmem:[#allocation10 + $0x1c0] sm:$0xff]
    %v3476 = vld [vmem:[#allocation10 + $0x1c8] sm:$0xff]
    %v3477 = vld [vmem:[#allocation10 + $0x1d0] sm:$0xff]
    %v3478 = vld [vmem:[#allocation10 + $0x1d8] sm:$0xff]
    %v3479 = vld [vmem:[#allocation10 + $0x1e0] sm:$0xff]
    %v3480 = vld [vmem:[#allocation10 + $0x1e8] sm:$0xff]
    %v3481 = vld [vmem:[#allocation10 + $0x1f0] sm:$0xff]
    %v3482 = vld [vmem:[#allocation10 + $0x1f8] sm:$0xff]
    %v3483 = vld [vmem:[%s8] sm:$0x3]
    %v3485 = vlaneseq
    %v3486 = vshrl.u32 %v3485, 7
    %v3487 = vsub.s32 0, %v3486
    %v3488 = vrot.slane %v3483, %v3487
    %v3489 = vlaneseq
    %v3490 = vshrl.u32 %v3489, 7
    %v3491 = vsub.s32 1, %v3490
    %v3492 = vrot.slane %v3483, %v3491
    %v3559 = vunpack.c.l.b16 %v3419
    %v3560 = vunpack.c.h.b16 %v3419
    %v3561 = vunpack.c.l.b16 %v3420
    %v3562 = vunpack.c.h.b16 %v3420
    %v3563 = vunpack.c.l.b16 %v3421
    %v3564 = vunpack.c.h.b16 %v3421
    %v3565 = vunpack.c.l.b16 %v3422
    %v3566 = vunpack.c.h.b16 %v3422
    %v3567 = vunpack.c.l.b16 %v3423
    %v3568 = vunpack.c.h.b16 %v3423
    %v3569 = vunpack.c.l.b16 %v3424
    %v3570 = vunpack.c.h.b16 %v3424
    %v3571 = vunpack.c.l.b16 %v3425
    %v3572 = vunpack.c.h.b16 %v3425
    %v3573 = vunpack.c.l.b16 %v3426
    %v3574 = vunpack.c.h.b16 %v3426
    %v3575 = vunpack.c.l.b16 %v3427
    %v3576 = vunpack.c.h.b16 %v3427
    %v3577 = vunpack.c.l.b16 %v3428
    %v3578 = vunpack.c.h.b16 %v3428
    %v3579 = vunpack.c.l.b16 %v3429
    %v3580 = vunpack.c.h.b16 %v3429
    %v3581 = vunpack.c.l.b16 %v3430
    %v3582 = vunpack.c.h.b16 %v3430
    %v3583 = vunpack.c.l.b16 %v3431
    %v3584 = vunpack.c.h.b16 %v3431
    %v3585 = vunpack.c.l.b16 %v3432
    %v3586 = vunpack.c.h.b16 %v3432
    %v3587 = vunpack.c.l.b16 %v3433
    %v3588 = vunpack.c.h.b16 %v3433
    %v3589 = vunpack.c.l.b16 %v3434
    %v3590 = vunpack.c.h.b16 %v3434
    %v3591 = vunpack.c.l.b16 %v3435
    %v3592 = vunpack.c.h.b16 %v3435
    %v3593 = vunpack.c.l.b16 %v3436
    %v3594 = vunpack.c.h.b16 %v3436
    %v3595 = vunpack.c.l.b16 %v3437
    %v3596 = vunpack.c.h.b16 %v3437
    %v3597 = vunpack.c.l.b16 %v3438
    %v3598 = vunpack.c.h.b16 %v3438
    %v3599 = vunpack.c.l.b16 %v3439
    %v3600 = vunpack.c.h.b16 %v3439
    %v3601 = vunpack.c.l.b16 %v3440
    %v3602 = vunpack.c.h.b16 %v3440
    %v3603 = vunpack.c.l.b16 %v3441
    %v3604 = vunpack.c.h.b16 %v3441
    %v3605 = vunpack.c.l.b16 %v3442
    %v3606 = vunpack.c.h.b16 %v3442
    %v3607 = vunpack.c.l.b16 %v3443
    %v3608 = vunpack.c.h.b16 %v3443
    %v3609 = vunpack.c.l.b16 %v3444
    %v3610 = vunpack.c.h.b16 %v3444
    %v3611 = vunpack.c.l.b16 %v3445
    %v3612 = vunpack.c.h.b16 %v3445
    %v3613 = vunpack.c.l.b16 %v3446
    %v3614 = vunpack.c.h.b16 %v3446
    %v3615 = vunpack.c.l.b16 %v3447
    %v3616 = vunpack.c.h.b16 %v3447
    %v3617 = vunpack.c.l.b16 %v3448
    %v3618 = vunpack.c.h.b16 %v3448
    %v3619 = vunpack.c.l.b16 %v3449
    %v3620 = vunpack.c.h.b16 %v3449
    %v3621 = vunpack.c.l.b16 %v3450
    %v3622 = vunpack.c.h.b16 %v3450
    %v3623 = vunpack.c.l.b16 %v3451
    %v3624 = vunpack.c.h.b16 %v3451
    %v3625 = vunpack.c.l.b16 %v3452
    %v3626 = vunpack.c.h.b16 %v3452
    %v3627 = vunpack.c.l.b16 %v3453
    %v3628 = vunpack.c.h.b16 %v3453
    %v3629 = vunpack.c.l.b16 %v3454
    %v3630 = vunpack.c.h.b16 %v3454
    %v3631 = vunpack.c.l.b16 %v3455
    %v3632 = vunpack.c.h.b16 %v3455
    %v3633 = vunpack.c.l.b16 %v3456
    %v3634 = vunpack.c.h.b16 %v3456
    %v3635 = vunpack.c.l.b16 %v3457
    %v3636 = vunpack.c.h.b16 %v3457
    %v3637 = vunpack.c.l.b16 %v3458
    %v3638 = vunpack.c.h.b16 %v3458
    %v3639 = vunpack.c.l.b16 %v3459
    %v3640 = vunpack.c.h.b16 %v3459
    %v3641 = vunpack.c.l.b16 %v3460
    %v3642 = vunpack.c.h.b16 %v3460
    %v3643 = vunpack.c.l.b16 %v3461
    %v3644 = vunpack.c.h.b16 %v3461
    %v3645 = vunpack.c.l.b16 %v3462
    %v3646 = vunpack.c.h.b16 %v3462
    %v3647 = vunpack.c.l.b16 %v3463
    %v3648 = vunpack.c.h.b16 %v3463
    %v3649 = vunpack.c.l.b16 %v3464
    %v3650 = vunpack.c.h.b16 %v3464
    %v3651 = vunpack.c.l.b16 %v3465
    %v3652 = vunpack.c.h.b16 %v3465
    %v3653 = vunpack.c.l.b16 %v3466
    %v3654 = vunpack.c.h.b16 %v3466
    %v3655 = vunpack.c.l.b16 %v3467
    %v3656 = vunpack.c.h.b16 %v3467
    %v3657 = vunpack.c.l.b16 %v3468
    %v3658 = vunpack.c.h.b16 %v3468
    %v3659 = vunpack.c.l.b16 %v3469
    %v3660 = vunpack.c.h.b16 %v3469
    %v3661 = vunpack.c.l.b16 %v3470
    %v3662 = vunpack.c.h.b16 %v3470
    %v3663 = vunpack.c.l.b16 %v3471
    %v3664 = vunpack.c.h.b16 %v3471
    %v3665 = vunpack.c.l.b16 %v3472
    %v3666 = vunpack.c.h.b16 %v3472
    %v3667 = vunpack.c.l.b16 %v3473
    %v3668 = vunpack.c.h.b16 %v3473
    %v3669 = vunpack.c.l.b16 %v3474
    %v3670 = vunpack.c.h.b16 %v3474
    %v3671 = vunpack.c.l.b16 %v3475
    %v3672 = vunpack.c.h.b16 %v3475
    %v3673 = vunpack.c.l.b16 %v3476
    %v3674 = vunpack.c.h.b16 %v3476
    %v3675 = vunpack.c.l.b16 %v3477
    %v3676 = vunpack.c.h.b16 %v3477
    %v3677 = vunpack.c.l.b16 %v3478
    %v3678 = vunpack.c.h.b16 %v3478
    %v3679 = vunpack.c.l.b16 %v3479
    %v3680 = vunpack.c.h.b16 %v3479
    %v3681 = vunpack.c.l.b16 %v3480
    %v3682 = vunpack.c.h.b16 %v3480
    %v3683 = vunpack.c.l.b16 %v3481
    %v3684 = vunpack.c.h.b16 %v3481
    %v3685 = vunpack.c.l.b16 %v3482
    %v3686 = vunpack.c.h.b16 %v3482
    %v3687 = vpack.c.b16 %v3561, %v3559
    %v3688 = vpack.c.b16 %v3562, %v3560
    %v3689 = vpack.c.b16 %v3565, %v3563
    %v3690 = vpack.c.b16 %v3566, %v3564
    %v3691 = vpack.c.b16 %v3569, %v3567
    %v3692 = vpack.c.b16 %v3570, %v3568
    %v3693 = vpack.c.b16 %v3573, %v3571
    %v3694 = vpack.c.b16 %v3574, %v3572
    %v3695 = vpack.c.b16 %v3577, %v3575
    %v3696 = vpack.c.b16 %v3578, %v3576
    %v3697 = vpack.c.b16 %v3581, %v3579
    %v3698 = vpack.c.b16 %v3582, %v3580
    %v3699 = vpack.c.b16 %v3585, %v3583
    %v3700 = vpack.c.b16 %v3586, %v3584
    %v3701 = vpack.c.b16 %v3589, %v3587
    %v3702 = vpack.c.b16 %v3590, %v3588
    %v3703 = vpack.c.b16 %v3593, %v3591
    %v3704 = vpack.c.b16 %v3594, %v3592
    %v3705 = vpack.c.b16 %v3597, %v3595
    %v3706 = vpack.c.b16 %v3598, %v3596
    %v3707 = vpack.c.b16 %v3601, %v3599
    %v3708 = vpack.c.b16 %v3602, %v3600
    %v3709 = vpack.c.b16 %v3605, %v3603
    %v3710 = vpack.c.b16 %v3606, %v3604
    %v3711 = vpack.c.b16 %v3609, %v3607
    %v3712 = vpack.c.b16 %v3610, %v3608
    %v3713 = vpack.c.b16 %v3613, %v3611
    %v3714 = vpack.c.b16 %v3614, %v3612
    %v3715 = vpack.c.b16 %v3617, %v3615
    %v3716 = vpack.c.b16 %v3618, %v3616
    %v3717 = vpack.c.b16 %v3621, %v3619
    %v3718 = vpack.c.b16 %v3622, %v3620
    %v3719 = vpack.c.b16 %v3625, %v3623
    %v3720 = vpack.c.b16 %v3626, %v3624
    %v3721 = vpack.c.b16 %v3629, %v3627
    %v3722 = vpack.c.b16 %v3630, %v3628
    %v3723 = vpack.c.b16 %v3633, %v3631
    %v3724 = vpack.c.b16 %v3634, %v3632
    %v3725 = vpack.c.b16 %v3637, %v3635
    %v3726 = vpack.c.b16 %v3638, %v3636
    %v3727 = vpack.c.b16 %v3641, %v3639
    %v3728 = vpack.c.b16 %v3642, %v3640
    %v3729 = vpack.c.b16 %v3645, %v3643
    %v3730 = vpack.c.b16 %v3646, %v3644
    %v3731 = vpack.c.b16 %v3649, %v3647
    %v3732 = vpack.c.b16 %v3650, %v3648
    %v3733 = vpack.c.b16 %v3653, %v3651
    %v3734 = vpack.c.b16 %v3654, %v3652
    %v3735 = vpack.c.b16 %v3657, %v3655
    %v3736 = vpack.c.b16 %v3658, %v3656
    %v3737 = vpack.c.b16 %v3661, %v3659
    %v3738 = vpack.c.b16 %v3662, %v3660
    %v3739 = vpack.c.b16 %v3665, %v3663
    %v3740 = vpack.c.b16 %v3666, %v3664
    %v3741 = vpack.c.b16 %v3669, %v3667
    %v3742 = vpack.c.b16 %v3670, %v3668
    %v3743 = vpack.c.b16 %v3673, %v3671
    %v3744 = vpack.c.b16 %v3674, %v3672
    %v3745 = vpack.c.b16 %v3677, %v3675
    %v3746 = vpack.c.b16 %v3678, %v3676
    %v3747 = vpack.c.b16 %v3681, %v3679
    %v3748 = vpack.c.b16 %v3682, %v3680
    %v3749 = vpack.c.b16 %v3685, %v3683
    %v3750 = vpack.c.b16 %v3686, %v3684
    %3815 = vmatprep.subr.bf16.mxu0 %v3702
    %3816 = vmatpush1.bf16.msra.mxu0 %v3701
    %3817 = vmatprep.subr.bf16.mxu0 %v3700
    %3818 = vmatpush1.bf16.msra.mxu0 %v3699
    %3819 = vmatprep.subr.bf16.mxu0 %v3698
    %3820 = vmatpush1.bf16.msra.mxu0 %v3697
    %3821 = vmatprep.subr.bf16.mxu0 %v3696
    %3822 = vmatpush1.bf16.msra.mxu0 %v3695
    %3823 = vmatprep.subr.bf16.mxu0 %v3694
    %3824 = vmatpush1.bf16.msra.mxu0 %v3693
    %3825 = vmatprep.subr.bf16.mxu0 %v3692
    %3826 = vmatpush1.bf16.msra.mxu0 %v3691
    %3827 = vmatprep.subr.bf16.mxu0 %v3690
    %3828 = vmatpush1.bf16.msra.mxu0 %v3689
    %3829 = vmatprep.subr.bf16.mxu0 %v3688
    %3830 = vmatpush1.bf16.msra.mxu0 %v3687
    %3831 = vmatprep.subr.bf16.mxu0 %v3718
    %3832 = vmatpush2.bf16.msra.mxu0 %v3717
    %3833 = vmatprep.subr.bf16.mxu0 %v3716
    %3834 = vmatpush2.bf16.msra.mxu0 %v3715
    %3835 = vmatprep.subr.bf16.mxu0 %v3714
    %3836 = vmatpush2.bf16.msra.mxu0 %v3713
    %3837 = vmatprep.subr.bf16.mxu0 %v3712
    %3838 = vmatpush2.bf16.msra.mxu0 %v3711
    %3839 = vmatprep.subr.bf16.mxu0 %v3710
    %3840 = vmatpush2.bf16.msra.mxu0 %v3709
    %3841 = vmatprep.subr.bf16.mxu0 %v3708
    %3842 = vmatpush2.bf16.msra.mxu0 %v3707
    %3843 = vmatprep.subr.bf16.mxu0 %v3706
    %3844 = vmatpush2.bf16.msra.mxu0 %v3705
    %3845 = vmatprep.subr.bf16.mxu0 %v3704
    %3846 = vmatpush2.bf16.msra.mxu0 %v3703
    %3847 = vmatprep.mubr.bf16.mxu0 %v3416
    %3848 = vmatmul.mubr.bf16.gmra.mxu0 %v3415
    %v3849 = vpop.f32.mrf.mxu0
    %v3850 = vadd.f32 %v3488, %v3849
    %v3851 = vpop.f32.mrf.mxu0
    %v3852 = vadd.f32 %v3492, %v3851
    %v3853 = vpop.f32.mrf.mxu0
    %v3854 = vpop.f32.mrf.mxu0
    %3855 = vdwg.mxu0
    %3856 = vmatprep.subr.bf16.mxu0 %v3734
    %3857 = vmatpush1.bf16.msra.mxu0 %v3733
    %3858 = vmatprep.subr.bf16.mxu0 %v3732
    %3859 = vmatpush1.bf16.msra.mxu0 %v3731
    %3860 = vmatprep.subr.bf16.mxu0 %v3730
    %3861 = vmatpush1.bf16.msra.mxu0 %v3729
    %3862 = vmatprep.subr.bf16.mxu0 %v3728
    %3863 = vmatpush1.bf16.msra.mxu0 %v3727
    %3864 = vmatprep.subr.bf16.mxu0 %v3726
    %3865 = vmatpush1.bf16.msra.mxu0 %v3725
    %3866 = vmatprep.subr.bf16.mxu0 %v3724
    %3867 = vmatpush1.bf16.msra.mxu0 %v3723
    %3868 = vmatprep.subr.bf16.mxu0 %v3722
    %3869 = vmatpush1.bf16.msra.mxu0 %v3721
    %3870 = vmatprep.subr.bf16.mxu0 %v3720
    %3871 = vmatpush1.bf16.msra.mxu0 %v3719
    %3872 = vmatprep.subr.bf16.mxu0 %v3750
    %3873 = vmatpush2.bf16.msra.mxu0 %v3749
    %3874 = vmatprep.subr.bf16.mxu0 %v3748
    %3875 = vmatpush2.bf16.msra.mxu0 %v3747
    %3876 = vmatprep.subr.bf16.mxu0 %v3746
    %3877 = vmatpush2.bf16.msra.mxu0 %v3745
    %3878 = vmatprep.subr.bf16.mxu0 %v3744
    %3879 = vmatpush2.bf16.msra.mxu0 %v3743
    %3880 = vmatprep.subr.bf16.mxu0 %v3742
    %3881 = vmatpush2.bf16.msra.mxu0 %v3741
    %3882 = vmatprep.subr.bf16.mxu0 %v3740
    %3883 = vmatpush2.bf16.msra.mxu0 %v3739
    %3884 = vmatprep.subr.bf16.mxu0 %v3738
    %3885 = vmatpush2.bf16.msra.mxu0 %v3737
    %3886 = vmatprep.subr.bf16.mxu0 %v3736
    %3887 = vmatpush2.bf16.msra.mxu0 %v3735
    %3888 = vmatprep.mubr.bf16.mxu0 %v3418
    %3889 = vmatmul.mubr.bf16.gmra.mxu0 %v3417
    %v3890 = vpop.f32.mrf.mxu0
    %v3891 = vadd.f32 %v3850, %v3890
    %v3892 = vpop.f32.mrf.mxu0
    %v3893 = vadd.f32 %v3852, %v3892
    %v3894 = vpop.f32.mrf.mxu0
    %v3895 = vpop.f32.mrf.mxu0
    %3896 = vdwg.mxu0
    %v3897 = vmax.f32 %v3891, 0.0
    %v3898 = vmax.f32 %v3893, 0.0
    %v3899 = vpack.c.bf16 %v3897, %v3897
    %v3900 = vpack.c.bf16 %v3898, %v3898
    %v3901 = vld [vmem:[#allocation12] sm:$0xf]
    %v3902 = vld [vmem:[#allocation12 + $0x4] sm:$0xf]
    %v3903 = vld [vmem:[#allocation12 + $0x8] sm:$0xf]
    %v3904 = vld [vmem:[#allocation12 + $0xc] sm:$0xf]
    %v3905 = vld [vmem:[#allocation12 + $0x10] sm:$0xf]
    %v3906 = vld [vmem:[#allocation12 + $0x14] sm:$0xf]
    %v3907 = vld [vmem:[#allocation12 + $0x18] sm:$0xf]
    %v3908 = vld [vmem:[#allocation12 + $0x1c] sm:$0xf]
    %v3909 = vld [vmem:[#allocation12 + $0x20] sm:$0xf]
    %v3910 = vld [vmem:[#allocation12 + $0x24] sm:$0xf]
    %v3911 = vld [vmem:[#allocation12 + $0x28] sm:$0xf]
    %v3912 = vld [vmem:[#allocation12 + $0x2c] sm:$0xf]
    %v3913 = vld [vmem:[#allocation12 + $0x30] sm:$0xf]
    %v3914 = vld [vmem:[#allocation12 + $0x34] sm:$0xf]
    %v3915 = vld [vmem:[#allocation12 + $0x38] sm:$0xf]
    %v3916 = vld [vmem:[#allocation12 + $0x3c] sm:$0xf]
    %v3917 = vld [vmem:[#allocation12 + $0x40] sm:$0xf]
    %v3918 = vld [vmem:[#allocation12 + $0x44] sm:$0xf]
    %v3919 = vld [vmem:[#allocation12 + $0x48] sm:$0xf]
    %v3920 = vld [vmem:[#allocation12 + $0x4c] sm:$0xf]
    %v3921 = vld [vmem:[#allocation12 + $0x50] sm:$0xf]
    %v3922 = vld [vmem:[#allocation12 + $0x54] sm:$0xf]
    %v3923 = vld [vmem:[#allocation12 + $0x58] sm:$0xf]
    %v3924 = vld [vmem:[#allocation12 + $0x5c] sm:$0xf]
    %v3925 = vld [vmem:[#allocation12 + $0x60] sm:$0xf]
    %v3926 = vld [vmem:[#allocation12 + $0x64] sm:$0xf]
    %v3927 = vld [vmem:[#allocation12 + $0x68] sm:$0xf]
    %v3928 = vld [vmem:[#allocation12 + $0x6c] sm:$0xf]
    %v3929 = vld [vmem:[#allocation12 + $0x70] sm:$0xf]
    %v3930 = vld [vmem:[#allocation12 + $0x74] sm:$0xf]
    %v3931 = vld [vmem:[#allocation12 + $0x78] sm:$0xf]
    %v3932 = vld [vmem:[#allocation12 + $0x7c] sm:$0xf]
    %v3933 = vld [vmem:[#allocation13] sm:$0x1]
    %v3935 = vlaneseq
    %v3936 = vshrl.u32 %v3935, 7
    %v3937 = vsub.s32 0, %v3936
    %v3938 = vrot.slane %v3933, %v3937
    %v3972 = vunpack.c.l.b16 %v3901
    %v3973 = vunpack.c.l.b16 %v3902
    %v3974 = vunpack.c.l.b16 %v3903
    %v3975 = vunpack.c.l.b16 %v3904
    %v3976 = vunpack.c.l.b16 %v3905
    %v3977 = vunpack.c.l.b16 %v3906
    %v3978 = vunpack.c.l.b16 %v3907
    %v3979 = vunpack.c.l.b16 %v3908
    %v3980 = vunpack.c.l.b16 %v3909
    %v3981 = vunpack.c.l.b16 %v3910
    %v3982 = vunpack.c.l.b16 %v3911
    %v3983 = vunpack.c.l.b16 %v3912
    %v3984 = vunpack.c.l.b16 %v3913
    %v3985 = vunpack.c.l.b16 %v3914
    %v3986 = vunpack.c.l.b16 %v3915
    %v3987 = vunpack.c.l.b16 %v3916
    %v3988 = vunpack.c.l.b16 %v3917
    %v3989 = vunpack.c.l.b16 %v3918
    %v3990 = vunpack.c.l.b16 %v3919
    %v3991 = vunpack.c.l.b16 %v3920
    %v3992 = vunpack.c.l.b16 %v3921
    %v3993 = vunpack.c.l.b16 %v3922
    %v3994 = vunpack.c.l.b16 %v3923
    %v3995 = vunpack.c.l.b16 %v3924
    %v3996 = vunpack.c.l.b16 %v3925
    %v3997 = vunpack.c.l.b16 %v3926
    %v3998 = vunpack.c.l.b16 %v3927
    %v3999 = vunpack.c.l.b16 %v3928
    %v4000 = vunpack.c.l.b16 %v3929
    %v4001 = vunpack.c.l.b16 %v3930
    %v4002 = vunpack.c.l.b16 %v3931
    %v4003 = vunpack.c.l.b16 %v3932
    %v4004 = vpack.c.b16 %v3973, %v3972
    %v4005 = vpack.c.b16 %v3975, %v3974
    %v4006 = vpack.c.b16 %v3977, %v3976
    %v4007 = vpack.c.b16 %v3979, %v3978
    %v4008 = vpack.c.b16 %v3981, %v3980
    %v4009 = vpack.c.b16 %v3983, %v3982
    %v4010 = vpack.c.b16 %v3985, %v3984
    %v4011 = vpack.c.b16 %v3987, %v3986
    %v4012 = vpack.c.b16 %v3989, %v3988
    %v4013 = vpack.c.b16 %v3991, %v3990
    %v4014 = vpack.c.b16 %v3993, %v3992
    %v4015 = vpack.c.b16 %v3995, %v3994
    %v4016 = vpack.c.b16 %v3997, %v3996
    %v4017 = vpack.c.b16 %v3999, %v3998
    %v4018 = vpack.c.b16 %v4001, %v4000
    %v4019 = vpack.c.b16 %v4003, %v4002
    %4036 = vmatprep.subr.bf16.mxu0 0
    %4037 = vmatpush1.bf16.msra.mxu0 %v4011
    %4038 = vmatprep.subr.bf16.mxu0 0
    %4039 = vmatpush1.bf16.msra.mxu0 %v4010
    %4040 = vmatprep.subr.bf16.mxu0 0
    %4041 = vmatpush1.bf16.msra.mxu0 %v4009
    %4042 = vmatprep.subr.bf16.mxu0 0
    %4043 = vmatpush1.bf16.msra.mxu0 %v4008
    %4044 = vmatprep.subr.bf16.mxu0 0
    %4045 = vmatpush1.bf16.msra.mxu0 %v4007
    %4046 = vmatprep.subr.bf16.mxu0 0
    %4047 = vmatpush1.bf16.msra.mxu0 %v4006
    %4048 = vmatprep.subr.bf16.mxu0 0
    %4049 = vmatpush1.bf16.msra.mxu0 %v4005
    %4050 = vmatprep.subr.bf16.mxu0 0
    %4051 = vmatpush1.bf16.msra.mxu0 %v4004
    %4052 = vmatprep.subr.bf16.mxu0 0
    %4053 = vmatpush2.bf16.msra.mxu0 %v4019
    %4054 = vmatprep.subr.bf16.mxu0 0
    %4055 = vmatpush2.bf16.msra.mxu0 %v4018
    %4056 = vmatprep.subr.bf16.mxu0 0
    %4057 = vmatpush2.bf16.msra.mxu0 %v4017
    %4058 = vmatprep.subr.bf16.mxu0 0
    %4059 = vmatpush2.bf16.msra.mxu0 %v4016
    %4060 = vmatprep.subr.bf16.mxu0 0
    %4061 = vmatpush2.bf16.msra.mxu0 %v4015
    %4062 = vmatprep.subr.bf16.mxu0 0
    %4063 = vmatpush2.bf16.msra.mxu0 %v4014
    %4064 = vmatprep.subr.bf16.mxu0 0
    %4065 = vmatpush2.bf16.msra.mxu0 %v4013
    %4066 = vmatprep.subr.bf16.mxu0 0
    %4067 = vmatpush2.bf16.msra.mxu0 %v4012
    %4068 = vmatprep.mubr.bf16.mxu0 %v3900
    %4069 = vmatmul.mubr.bf16.gmra.mxu0 %v3899
    %v4070 = vpop.f32.mrf.mxu0
    %v4071 = vadd.f32 %v3938, %v4070
    %v4072 = vpop.f32.mrf.mxu0
    %v4073 = vpop.f32.mrf.mxu0
    %v4074 = vpop.f32.mrf.mxu0
    %4075 = vdwg.mxu0
    %v4076 = vmax.f32 %v4071, 0.0
    %v4077 = vpack.c.bf16 %v4076, %v4076
    %v4078 = vld [vmem:[#allocation15] sm:$0xf]
    %v4079 = vld [vmem:[#allocation15 + $0x4] sm:$0xf]
    %v4080 = vld [vmem:[#allocation15 + $0x8] sm:$0xf]
    %v4081 = vld [vmem:[#allocation15 + $0xc] sm:$0xf]
    %v4082 = vld [vmem:[#allocation15 + $0x10] sm:$0xf]
    %v4083 = vld [vmem:[#allocation15 + $0x14] sm:$0xf]
    %v4084 = vld [vmem:[#allocation15 + $0x18] sm:$0xf]
    %v4085 = vld [vmem:[#allocation15 + $0x1c] sm:$0xf]
    %v4086 = vld [vmem:[#allocation15 + $0x20] sm:$0xf]
    %v4087 = vld [vmem:[#allocation15 + $0x24] sm:$0xf]
    %v4088 = vld [vmem:[#allocation15 + $0x28] sm:$0xf]
    %v4089 = vld [vmem:[#allocation15 + $0x2c] sm:$0xf]
    %v4090 = vld [vmem:[#allocation15 + $0x30] sm:$0xf]
    %v4091 = vld [vmem:[#allocation15 + $0x34] sm:$0xf]
    %v4092 = vld [vmem:[#allocation15 + $0x38] sm:$0xf]
    %v4093 = vld [vmem:[#allocation15 + $0x3c] sm:$0xf]
    %v4094 = vld [vmem:[#allocation16] sm:$0x1]
    %v4096 = vlaneseq
    %v4097 = vshrl.u32 %v4096, 7
    %v4098 = vsub.s32 0, %v4097
    %v4099 = vrot.slane %v4094, %v4098
    %v4117 = vunpack.c.l.b16 %v4078
    %v4118 = vunpack.c.l.b16 %v4079
    %v4119 = vunpack.c.l.b16 %v4080
    %v4120 = vunpack.c.l.b16 %v4081
    %v4121 = vunpack.c.l.b16 %v4082
    %v4122 = vunpack.c.l.b16 %v4083
    %v4123 = vunpack.c.l.b16 %v4084
    %v4124 = vunpack.c.l.b16 %v4085
    %v4125 = vunpack.c.l.b16 %v4086
    %v4126 = vunpack.c.l.b16 %v4087
    %v4127 = vunpack.c.l.b16 %v4088
    %v4128 = vunpack.c.l.b16 %v4089
    %v4129 = vunpack.c.l.b16 %v4090
    %v4130 = vunpack.c.l.b16 %v4091
    %v4131 = vunpack.c.l.b16 %v4092
    %v4132 = vunpack.c.l.b16 %v4093
    %v4133 = vpack.c.b16 %v4118, %v4117
    %v4134 = vpack.c.b16 %v4120, %v4119
    %v4135 = vpack.c.b16 %v4122, %v4121
    %v4136 = vpack.c.b16 %v4124, %v4123
    %v4137 = vpack.c.b16 %v4126, %v4125
    %v4138 = vpack.c.b16 %v4128, %v4127
    %v4139 = vpack.c.b16 %v4130, %v4129
    %v4140 = vpack.c.b16 %v4132, %v4131
    %4149 = vmatprep.subr.bf16.mxu0 0
    %4150 = vmatpush1.bf16.msra.mxu0 %v4140
    %4151 = vmatprep.subr.bf16.mxu0 0
    %4152 = vmatpush1.bf16.msra.mxu0 %v4139
    %4153 = vmatprep.subr.bf16.mxu0 0
    %4154 = vmatpush1.bf16.msra.mxu0 %v4138
    %4155 = vmatprep.subr.bf16.mxu0 0
    %4156 = vmatpush1.bf16.msra.mxu0 %v4137
    %4157 = vmatprep.subr.bf16.mxu0 0
    %4158 = vmatpush1.bf16.msra.mxu0 %v4136
    %4159 = vmatprep.subr.bf16.mxu0 0
    %4160 = vmatpush1.bf16.msra.mxu0 %v4135
    %4161 = vmatprep.subr.bf16.mxu0 0
    %4162 = vmatpush1.bf16.msra.mxu0 %v4134
    %4163 = vmatprep.subr.bf16.mxu0 0
    %4164 = vmatpush1.bf16.msra.mxu0 %v4133
    %4165 = vmatprep.subr.bf16.mxu0 0
    %4166 = vmatpush2.bf16.msra.mxu0 0
    %4167 = vmatprep.subr.bf16.mxu0 0
    %4168 = vmatpush2.bf16.msra.mxu0 0
    %4169 = vmatprep.subr.bf16.mxu0 0
    %4170 = vmatpush2.bf16.msra.mxu0 0
    %4171 = vmatprep.subr.bf16.mxu0 0
    %4172 = vmatpush2.bf16.msra.mxu0 0
    %4173 = vmatprep.subr.bf16.mxu0 0
    %4174 = vmatpush2.bf16.msra.mxu0 0
    %4175 = vmatprep.subr.bf16.mxu0 0
    %4176 = vmatpush2.bf16.msra.mxu0 0
    %4177 = vmatprep.subr.bf16.mxu0 0
    %4178 = vmatpush2.bf16.msra.mxu0 0
    %4179 = vmatprep.subr.bf16.mxu0 0
    %4180 = vmatpush2.bf16.msra.mxu0 0
    %4181 = vmatprep.mubr.bf16.mxu0 0
    %4182 = vmatmul.mubr.bf16.gmra.mxu0 %v4077
    %v4183 = vpop.f32.mrf.mxu0
    %v4184 = vadd.f32 %v4099, %v4183
    %v4185 = vpop.f32.mrf.mxu0
    %v4186 = vpop.f32.mrf.mxu0
    %v4187 = vpop.f32.mrf.mxu0
    %4188 = vdwg.mxu0
    %4189 = vst [vmem:[#allocation18] sm:$0x3] %v4184
    // Predicated region
    $region86: #{word_cnn_forward.1} parent=1 // pred_check
      _
    $region87: #{word_cnn_forward.1} parent=1 // pred_check_branch
      %4191 = sbr.rel (0) target = $region89
    $region88: #{word_cnn_forward.1} parent=1 // pred_region
      %s4193 = ssub.s32 32, 32
      %4194 = vsyncadd [#allocation6], %s4193
      %s4196 = sshll.u32 [#allocation18], 4
      %s4197 = int_to_ptr.vmem [resolvable:$true] %s4196
      %4199 = dma.vmem_to_hbm [thread:$0]  %s4197, 32, %s13, [#allocation6]
    $region89: #{word_cnn_forward.1} parent=1 // pred_fallthru
      _
    // Predicated region
    $region90: #{word_cnn_forward.1} parent=1 // pred_check
      _
    $region91: #{word_cnn_forward.1} parent=1 // pred_check_branch
      %4201 = sbr.rel (0) target = $region93
    $region92: #{word_cnn_forward.1} parent=1 // pred_region
      %4202 = dma.done [#allocation6], 32
    $region93: #{word_cnn_forward.1} parent=1 // pred_fallthru
      _
    %4203 = vsyncpa [#allocation5], 1
    %4204 = vsyncpa [#allocation8], 1
    %4205 = vsyncpa [#allocation11], 1
    %4206 = vsyncpa [#allocation14], 1
    %4207 = vsyncpa [#allocation17], 1
    %4208 = vsyncpa [#allocation6], 1

</llo_original>
